<compile_context>
chip_gen: v5e
topology: v5e:2x2
jax: 0.10.0
libtpu: 0.0.40
codegen_flags: <defaults>
</compile_context>

<pallas_src>
import jax
import jax.numpy as jnp
from jax import lax
from jax.experimental import pallas as pl
from jax.experimental.pallas import tpu as pltpu

LEAK = 0.2
EPS = 1e-5

# For upsample-phase di (or dj): which 3x3 taps (kh or kw) collapse onto the
# d-row (or d-col) offset u in {0, 1}.
_PHASE_TAPS = {0: ((0,), (1, 2)), 1: ((0, 1), (2,))}


def unet_innermost_kernel(x_ref, zb_ref, wd_ref, wu_ref, out_ref):
    """One batch block.

    x_ref  : (B, H, W, Cx)       original input (also used for the skip concat)
    zb_ref : (B, 1, inner_nc)    down-conv bias with the z contribution folded in
    wd_ref : (16*Cx, inner_nc)   down-conv weights, rows ordered (kh, kw, ci)
    wu_ref : (2, 2, 4*inner_nc, outer_nc) phase-collapsed up-conv weights,
             rows ordered (u, v, ci) for phase (di, dj)
    out_ref: (B, H, W*(outer_nc+Cx)) lane-dense output slab
    """
    x = x_ref[...]
    B, H, W, Cx = x.shape
    inner_nc = zb_ref.shape[-1]
    wu = wu_ref[...]
    wd = wd_ref[...]
    outer_nc = wu.shape[-1]
    ho, wo = H // 2, W // 2

    # ---- down: LeakyReLU(0.2) ------------------------------------------------
    xa = jnp.where(x >= 0, x, LEAK * x)

    # ---- down: ReflectionPad2d(1) (border row/col excluded) -------------------
    xp = jnp.concatenate([xa[:, 1:2], xa, xa[:, H - 2:H - 1]], axis=1)
    xp = jnp.concatenate([xp[:, :, 1:2], xp, xp[:, :, W - 2:W - 1]], axis=2)
    Hp, Wp = H + 2, W + 2                                    # both even

    # ---- down: Conv2d(k=4, s=2, bias folded) as one im2col matmul -------------
    # Stride-2 phase grids extracted once with even-dim reshapes (no strided or
    # out-of-range tap slices); each of the 16 taps is a cheap static slice.
    tr = xp.reshape(B, Hp // 2, 2, Wp, Cx)
    row_ph = [tr[:, :, p, :, :] for p in (0, 1)]             # (B, ho+1, Wp, Cx)
    phases = [[rp.reshape(B, Hp // 2, Wp // 2, 2, Cx)[:, :, :, q, :]
               for q in (0, 1)] for rp in row_ph]            # (B, ho+1, wo+1, Cx)
    cols = []
    for kh in range(4):
        a, p = divmod(kh, 2)
        for kw in range(4):
            b, q = divmod(kw, 2)
            cols.append(phases[p][q][:, a:a + ho, b:b + wo, :])
    patch = jnp.concatenate(cols, axis=-1).reshape(B * ho * wo, 16 * Cx)
    down = jnp.dot(patch, wd, preferred_element_type=jnp.float32)
    down = down.reshape(B, ho * wo, inner_nc) + zb_ref[...]  # bias (+ folded z)

    # ---- up: ReLU --------------------------------------------------------------
    d = jnp.maximum(down, 0.0).reshape(B, ho, wo, inner_nc)

    # ---- up: Upsample(x2, nearest) fused into Conv2d(k=3, s=1, zero-pad 1) -----
    zr = jnp.zeros((B, 1, wo, inner_nc), jnp.float32)
    d_zp = jnp.concatenate([zr, d, zr], axis=1)
    zc = jnp.zeros((B, ho + 2, 1, inner_nc), jnp.float32)
    d_zp = jnp.concatenate([zc, d_zp, zc], axis=2)           # (B, ho+2, wo+2, inner)

    inv_hw = 1.0 / (H * W)
    s = jnp.zeros((B, 1, outer_nc), jnp.float32)
    ss = jnp.zeros((B, 1, outer_nc), jnp.float32)
    c_ph = {}
    for di in (0, 1):
        for dj in (0, 1):
            win = jnp.concatenate(
                [d_zp[:, di + u:di + u + ho, dj + v:dj + v + wo, :]
                 for u in (0, 1) for v in (0, 1)], axis=-1)  # (B, ho, wo, 4*inner)
            c = jnp.dot(win.reshape(B * ho * wo, 4 * inner_nc), wu[di, dj],
                        preferred_element_type=jnp.float32)
            c = c.reshape(B, ho * wo, outer_nc)
            c_ph[(di, dj)] = c
            s = s + jnp.sum(c, axis=1, keepdims=True)
            ss = ss + jnp.sum(c * c, axis=1, keepdims=True)

    # ---- up: InstanceNorm2d (single pass, biased variance) --------------------
    mean = s * inv_hw
    var = ss * inv_hw - mean * mean
    inv_std = lax.rsqrt(var + EPS)
    n_ph = {k: ((v - mean) * inv_std).reshape(B, ho, wo, outer_nc)
            for k, v in c_ph.items()}

    # interleave the 4 phases back into (B, H, W, outer_nc)
    r0 = jnp.stack([n_ph[(0, 0)], n_ph[(0, 1)]], axis=3)     # (B, ho, wo, 2, outer)
    r1 = jnp.stack([n_ph[(1, 0)], n_ph[(1, 1)]], axis=3)
    x1 = jnp.stack([r0, r1], axis=2).reshape(B, H, W, outer_nc)

    # ---- skip concat + lane-dense store ----------------------------------------
    out = jnp.concatenate([x1, x], axis=-1)                  # (B, H, W, outer+Cx)
    out_ref[...] = out.reshape(B, H, W * (outer_nc + Cx)).astype(out_ref.dtype)


def _collapse_up_weights(w_up_hwio):
    """(3,3,inner,outer) HWIO -> (2,2,4*inner,outer) phase-collapsed weights.

    For output phase (di, dj) the 2x upsample makes each 3x3 tap read one of a
    2x2 block of `down`; taps that read the same element are summed here.
    Row order of each (4*inner, outer) block is (u, v, ci).
    """
    inner_nc, outer_nc = w_up_hwio.shape[2], w_up_hwio.shape[3]
    blocks = []
    for di in (0, 1):
        for dj in (0, 1):
            mats = []
            for u in (0, 1):
                for v in (0, 1):
                    m = jnp.zeros((inner_nc, outer_nc), w_up_hwio.dtype)
                    for kh in _PHASE_TAPS[di][u]:
                        for kw in _PHASE_TAPS[dj][v]:
                            m = m + w_up_hwio[kh, kw]
                    mats.append(m)
            blocks.append(jnp.concatenate(mats, axis=0))     # (4*inner, outer)
    return jnp.stack(blocks, axis=0).reshape(2, 2, 4 * inner_nc, outer_nc)


def unet_block_innermost(x_nchw, z, w_down_hwio, b_down, w_up_hwio, *,
                         batch_block=1):
    """x_nchw: (N, Cx, H, W); z: (N, nz). Returns NCHW (N, outer_nc + Cx, H, W)."""
    N, Cx, H, W = x_nchw.shape
    inner_nc = w_down_hwio.shape[-1]
    outer_nc = w_up_hwio.shape[-1]
    cout = outer_nc + Cx
    assert H % 2 == 0 and W % 2 == 0 and H >= 2 and W >= 2, "even H,W >= 2 required"
    assert N % batch_block == 0

    x = jnp.transpose(x_nchw, (0, 2, 3, 1)).astype(jnp.float32)  # NHWC

    # Fold the spatially-constant z channels into a per-batch down-conv bias:
    # LeakyReLU(z) @ sum_{kh,kw} wd[kh, kw, Cx:, :]  + b_down.
    wz = jnp.sum(w_down_hwio[:, :, Cx:, :], axis=(0, 1)).astype(jnp.float32)
    lz = jnp.where(z >= 0, z, LEAK * z).astype(jnp.float32)
    zb = (b_down[None, :].astype(jnp.float32) + lz @ wz).reshape(N, 1, inner_nc)

    # Lane-dense 2-D weight layouts.
    wd2 = w_down_hwio[:, :, :Cx, :].reshape(16 * Cx, inner_nc).astype(jnp.float32)
    wu_ph = _collapse_up_weights(w_up_hwio.astype(jnp.float32))

    # NOTE: for large H/W (outer UNet levels) tile H into row bands (2-row halo)
    # and set vmem_limit_bytes; whole images fit VMEM easily at these shapes.
    out = pl.pallas_call(
        unet_innermost_kernel,
        out_shape=jax.ShapeDtypeStruct((N, H, W * cout), jnp.float32),
        grid_spec=pltpu.PrefetchScalarGridSpec(
            num_scalar_prefetch=0,
            grid=(N // batch_block,),
            in_specs=[
                pl.BlockSpec((batch_block, H, W, Cx), lambda b: (b, 0, 0, 0)),
                pl.BlockSpec((batch_block, 1, inner_nc), lambda b: (b, 0, 0)),
                pl.BlockSpec((16 * Cx, inner_nc), lambda b: (0, 0)),
                pl.BlockSpec((2, 2, 4 * inner_nc, outer_nc),
                             lambda b: (0, 0, 0, 0)),
            ],
            out_specs=pl.BlockSpec((batch_block, H, W * cout),
                                   lambda b: (b, 0, 0)),
        ),
        compiler_params=pltpu.CompilerParams(
            dimension_semantics=("parallel",)),
    )(x, zb, wd2, wu_ph)

    out = out.reshape(N, H, W, cout)          # free: W and channels are contiguous
    return jnp.transpose(out, (0, 3, 1, 2))   # back to NCHW


def reference_nchw(x, z, w_down_hwio, b_down, w_up_hwio):
    """Pure-JAX f32 reference mirroring the PyTorch innermost UnetBlock (NCHW)."""
    N, Cx, H, W = x.shape
    nz = z.shape[1]
    z_img = jnp.broadcast_to(z[:, :, None, None], (N, nz, H, W))
    xz = jnp.concatenate([x, z_img], axis=1)
    xz = jnp.where(xz >= 0, xz, LEAK * xz)
    xp = jnp.pad(xz, ((0, 0), (0, 0), (1, 1), (1, 1)), mode="reflect")
    wd_oihw = jnp.transpose(w_down_hwio, (3, 2, 0, 1))
    d = lax.conv_general_dilated(xp, wd_oihw, (2, 2), "VALID",
                                 dimension_numbers=("NCHW", "OIHW", "NCHW"))
    d = d + b_down[None, :, None, None]
    d = jnp.maximum(d, 0.0)
    u = jnp.repeat(jnp.repeat(d, 2, axis=2), 2, axis=3)
    wu_oihw = jnp.transpose(w_up_hwio, (3, 2, 0, 1))
    c = lax.conv_general_dilated(u, wu_oihw, (1, 1), ((1, 1), (1, 1)),
                                 dimension_numbers=("NCHW", "OIHW", "NCHW"))
    mean = jnp.mean(c, axis=(2, 3), keepdims=True)
    var = jnp.mean((c - mean) ** 2, axis=(2, 3), keepdims=True)
    x1 = (c - mean) / jnp.sqrt(var + EPS)
    return jnp.concatenate([x1, x], axis=1)


if __name__ == "__main__":
    # Small shapes consistent with the module (innermost block).
    N, input_nc, nz, inner_nc, outer_nc, H, W = 2, 4, 4, 8, 4, 16, 16

    key = jax.random.PRNGKey(0)
    kx, kz, kwd, kbd, kwu = jax.random.split(key, 5)
    x = jax.random.normal(kx, (N, input_nc, H, W), dtype=jnp.float32)
    z = jax.random.normal(kz, (N, nz), dtype=jnp.float32)
    # Deterministic synthetic parameters (HWIO for conv weights).
    w_down = 0.1 * jax.random.normal(kwd, (4, 4, input_nc + nz, inner_nc), jnp.float32)
    b_down = 0.1 * jax.random.normal(kbd, (inner_nc,), jnp.float32)
    w_up = 0.1 * jax.random.normal(kwu, (3, 3, inner_nc, outer_nc), jnp.float32)

    out = unet_block_innermost(x, z, w_down, b_down, w_up, batch_block=1)
    out = jax.block_until_ready(out)

    ref = reference_nchw(x, z, w_down, b_down, w_up)
    assert out.shape == (N, outer_nc + input_nc, H, W), out.shape
    max_err = float(jnp.max(jnp.abs(out - ref)))
    assert max_err < 2e-3, f"max abs error {max_err}"

    print("KERNEL_OK")
</pallas_src>

<mosaic_0001>
module attributes {stable_mosaic.version = 11 : i64} {
  func.func @unet_innermost_kernel(%arg0: i32, %arg1: memref<1x16x16x4xf32, #tpu.memory_space<vmem>>, %arg2: memref<1x1x8xf32, #tpu.memory_space<vmem>>, %arg3: memref<64x8xf32, #tpu.memory_space<vmem>>, %arg4: memref<2x2x32x4xf32, #tpu.memory_space<vmem>>, %arg5: memref<1x16x128xf32, #tpu.memory_space<vmem>>) attributes {dimension_semantics = [#tpu.dimension_semantics<parallel>], iteration_bounds = array<i64: 2>, scalar_prefetch = 0 : i64, scratch_operands = 0 : i64, tpu.core_type = #tpu.core_type<tc>, window_params = [{transform_indices = @transform_0, window_bounds = array<i64: 1, 16, 16, 4>}, {transform_indices = @transform_1, window_bounds = array<i64: 1, 1, 8>}, {pipeline_mode = #tpu.pipeline_mode<synchronous>, transform_indices = @transform_2, window_bounds = array<i64: 64, 8>}, {pipeline_mode = #tpu.pipeline_mode<synchronous>, transform_indices = @transform_3, window_bounds = array<i64: 2, 2, 32, 4>}, {transform_indices = @transform_4, window_bounds = array<i64: 1, 16, 128>}]} {
    %c0 = arith.constant 0 : index
    %c0_0 = arith.constant 0 : index
    %c0_1 = arith.constant 0 : index
    %c0_2 = arith.constant 0 : index
    %0 = vector.load %arg1[%c0, %c0_0, %c0_1, %c0_2] : memref<1x16x16x4xf32, #tpu.memory_space<vmem>>, vector<1x16x16x4xf32>
    %c0_3 = arith.constant 0 : index
    %c0_4 = arith.constant 0 : index
    %c0_5 = arith.constant 0 : index
    %c0_6 = arith.constant 0 : index
    %1 = vector.load %arg4[%c0_3, %c0_4, %c0_5, %c0_6] : memref<2x2x32x4xf32, #tpu.memory_space<vmem>>, vector<2x2x32x4xf32>
    %c0_7 = arith.constant 0 : index
    %c0_8 = arith.constant 0 : index
    %2 = vector.load %arg3[%c0_7, %c0_8] : memref<64x8xf32, #tpu.memory_space<vmem>>, vector<64x8xf32>
    %cst = arith.constant 0.000000e+00 : f32
    %3 = vector.broadcast %cst : f32 to vector<1x16x16x4xf32>
    %4 = arith.cmpf oge, %0, %3 : vector<1x16x16x4xf32>
    %cst_9 = arith.constant 2.000000e-01 : f32
    %5 = vector.broadcast %cst_9 : f32 to vector<1x16x16x4xf32>
    %6 = arith.mulf %5, %0 : vector<1x16x16x4xf32>
    %7 = arith.select %4, %0, %6 : vector<1x16x16x4xi1>, vector<1x16x16x4xf32>
    %8 = vector.extract_strided_slice %7 {offsets = [0, 1, 0, 0], sizes = [1, 1, 16, 4], strides = [1, 1, 1, 1]} : vector<1x16x16x4xf32> to vector<1x1x16x4xf32>
    %9 = vector.extract_strided_slice %7 {offsets = [0, 14, 0, 0], sizes = [1, 1, 16, 4], strides = [1, 1, 1, 1]} : vector<1x16x16x4xf32> to vector<1x1x16x4xf32>
    %10 = tpu.concatenate %8, %7, %9 in 1 : vector<1x1x16x4xf32>, vector<1x16x16x4xf32>, vector<1x1x16x4xf32> -> vector<1x18x16x4xf32>
    %11 = vector.extract_strided_slice %10 {offsets = [0, 0, 1, 0], sizes = [1, 18, 1, 4], strides = [1, 1, 1, 1]} : vector<1x18x16x4xf32> to vector<1x18x1x4xf32>
    %12 = vector.extract_strided_slice %10 {offsets = [0, 0, 14, 0], sizes = [1, 18, 1, 4], strides = [1, 1, 1, 1]} : vector<1x18x16x4xf32> to vector<1x18x1x4xf32>
    %13 = tpu.concatenate %11, %10, %12 in 2 : vector<1x18x1x4xf32>, vector<1x18x16x4xf32>, vector<1x18x1x4xf32> -> vector<1x18x18x4xf32>
    %14 = vector.shape_cast %13 : vector<1x18x18x4xf32> to vector<1x9x2x18x4xf32>
    %15 = vector.extract_strided_slice %14 {offsets = [0, 0, 0, 0, 0], sizes = [1, 9, 1, 18, 4], strides = [1, 1, 1, 1, 1]} : vector<1x9x2x18x4xf32> to vector<1x9x1x18x4xf32>
    %16 = vector.shape_cast %15 : vector<1x9x1x18x4xf32> to vector<1x9x18x4xf32>
    %17 = vector.extract_strided_slice %14 {offsets = [0, 0, 1, 0, 0], sizes = [1, 9, 1, 18, 4], strides = [1, 1, 1, 1, 1]} : vector<1x9x2x18x4xf32> to vector<1x9x1x18x4xf32>
    %18 = vector.shape_cast %17 : vector<1x9x1x18x4xf32> to vector<1x9x18x4xf32>
    %19 = vector.shape_cast %16 : vector<1x9x18x4xf32> to vector<1x9x9x2x4xf32>
    %20 = vector.extract_strided_slice %19 {offsets = [0, 0, 0, 0, 0], sizes = [1, 9, 9, 1, 4], strides = [1, 1, 1, 1, 1]} : vector<1x9x9x2x4xf32> to vector<1x9x9x1x4xf32>
    %21 = vector.shape_cast %20 : vector<1x9x9x1x4xf32> to vector<1x9x9x4xf32>
    %22 = vector.shape_cast %16 : vector<1x9x18x4xf32> to vector<1x9x9x2x4xf32>
    %23 = vector.extract_strided_slice %22 {offsets = [0, 0, 0, 1, 0], sizes = [1, 9, 9, 1, 4], strides = [1, 1, 1, 1, 1]} : vector<1x9x9x2x4xf32> to vector<1x9x9x1x4xf32>
    %24 = vector.shape_cast %23 : vector<1x9x9x1x4xf32> to vector<1x9x9x4xf32>
    %25 = vector.shape_cast %18 : vector<1x9x18x4xf32> to vector<1x9x9x2x4xf32>
    %26 = vector.extract_strided_slice %25 {offsets = [0, 0, 0, 0, 0], sizes = [1, 9, 9, 1, 4], strides = [1, 1, 1, 1, 1]} : vector<1x9x9x2x4xf32> to vector<1x9x9x1x4xf32>
    %27 = vector.shape_cast %26 : vector<1x9x9x1x4xf32> to vector<1x9x9x4xf32>
    %28 = vector.shape_cast %18 : vector<1x9x18x4xf32> to vector<1x9x9x2x4xf32>
    %29 = vector.extract_strided_slice %28 {offsets = [0, 0, 0, 1, 0], sizes = [1, 9, 9, 1, 4], strides = [1, 1, 1, 1, 1]} : vector<1x9x9x2x4xf32> to vector<1x9x9x1x4xf32>
    %30 = vector.shape_cast %29 : vector<1x9x9x1x4xf32> to vector<1x9x9x4xf32>
    %31 = vector.extract_strided_slice %21 {offsets = [0, 0, 0, 0], sizes = [1, 8, 8, 4], strides = [1, 1, 1, 1]} : vector<1x9x9x4xf32> to vector<1x8x8x4xf32>
    %32 = vector.extract_strided_slice %24 {offsets = [0, 0, 0, 0], sizes = [1, 8, 8, 4], strides = [1, 1, 1, 1]} : vector<1x9x9x4xf32> to vector<1x8x8x4xf32>
    %33 = vector.extract_strided_slice %21 {offsets = [0, 0, 1, 0], sizes = [1, 8, 8, 4], strides = [1, 1, 1, 1]} : vector<1x9x9x4xf32> to vector<1x8x8x4xf32>
    %34 = vector.extract_strided_slice %24 {offsets = [0, 0, 1, 0], sizes = [1, 8, 8, 4], strides = [1, 1, 1, 1]} : vector<1x9x9x4xf32> to vector<1x8x8x4xf32>
    %35 = vector.extract_strided_slice %27 {offsets = [0, 0, 0, 0], sizes = [1, 8, 8, 4], strides = [1, 1, 1, 1]} : vector<1x9x9x4xf32> to vector<1x8x8x4xf32>
    %36 = vector.extract_strided_slice %30 {offsets = [0, 0, 0, 0], sizes = [1, 8, 8, 4], strides = [1, 1, 1, 1]} : vector<1x9x9x4xf32> to vector<1x8x8x4xf32>
    %37 = vector.extract_strided_slice %27 {offsets = [0, 0, 1, 0], sizes = [1, 8, 8, 4], strides = [1, 1, 1, 1]} : vector<1x9x9x4xf32> to vector<1x8x8x4xf32>
    %38 = vector.extract_strided_slice %30 {offsets = [0, 0, 1, 0], sizes = [1, 8, 8, 4], strides = [1, 1, 1, 1]} : vector<1x9x9x4xf32> to vector<1x8x8x4xf32>
    %39 = vector.extract_strided_slice %21 {offsets = [0, 1, 0, 0], sizes = [1, 8, 8, 4], strides = [1, 1, 1, 1]} : vector<1x9x9x4xf32> to vector<1x8x8x4xf32>
    %40 = vector.extract_strided_slice %24 {offsets = [0, 1, 0, 0], sizes = [1, 8, 8, 4], strides = [1, 1, 1, 1]} : vector<1x9x9x4xf32> to vector<1x8x8x4xf32>
    %41 = vector.extract_strided_slice %21 {offsets = [0, 1, 1, 0], sizes = [1, 8, 8, 4], strides = [1, 1, 1, 1]} : vector<1x9x9x4xf32> to vector<1x8x8x4xf32>
    %42 = vector.extract_strided_slice %24 {offsets = [0, 1, 1, 0], sizes = [1, 8, 8, 4], strides = [1, 1, 1, 1]} : vector<1x9x9x4xf32> to vector<1x8x8x4xf32>
    %43 = vector.extract_strided_slice %27 {offsets = [0, 1, 0, 0], sizes = [1, 8, 8, 4], strides = [1, 1, 1, 1]} : vector<1x9x9x4xf32> to vector<1x8x8x4xf32>
    %44 = vector.extract_strided_slice %30 {offsets = [0, 1, 0, 0], sizes = [1, 8, 8, 4], strides = [1, 1, 1, 1]} : vector<1x9x9x4xf32> to vector<1x8x8x4xf32>
    %45 = vector.extract_strided_slice %27 {offsets = [0, 1, 1, 0], sizes = [1, 8, 8, 4], strides = [1, 1, 1, 1]} : vector<1x9x9x4xf32> to vector<1x8x8x4xf32>
    %46 = vector.extract_strided_slice %30 {offsets = [0, 1, 1, 0], sizes = [1, 8, 8, 4], strides = [1, 1, 1, 1]} : vector<1x9x9x4xf32> to vector<1x8x8x4xf32>
    %47 = tpu.concatenate %31, %32, %33, %34, %35, %36, %37, %38, %39, %40, %41, %42, %43, %44, %45, %46 in 3 : vector<1x8x8x4xf32>, vector<1x8x8x4xf32>, vector<1x8x8x4xf32>, vector<1x8x8x4xf32>, vector<1x8x8x4xf32>, vector<1x8x8x4xf32>, vector<1x8x8x4xf32>, vector<1x8x8x4xf32>, vector<1x8x8x4xf32>, vector<1x8x8x4xf32>, vector<1x8x8x4xf32>, vector<1x8x8x4xf32>, vector<1x8x8x4xf32>, vector<1x8x8x4xf32>, vector<1x8x8x4xf32>, vector<1x8x8x4xf32> -> vector<1x8x8x64xf32>
    %48 = vector.shape_cast %47 : vector<1x8x8x64xf32> to vector<64x64xf32>
    %cst_10 = arith.constant dense<0.000000e+00> : vector<64x8xf32>
    %49 = tpu.matmul %48, %2, %cst_10 {dimension_numbers = #tpu.dot_dimension_numbers<[1], [0], [0], [1], [0, 0, 1, 1], [], []>} : vector<64x64xf32>, vector<64x8xf32>, vector<64x8xf32> -> vector<64x8xf32>
    %50 = vector.shape_cast %49 : vector<64x8xf32> to vector<1x64x8xf32>
    %c0_11 = arith.constant 0 : index
    %c0_12 = arith.constant 0 : index
    %c0_13 = arith.constant 0 : index
    %51 = vector.load %arg2[%c0_11, %c0_12, %c0_13] : memref<1x1x8xf32, #tpu.memory_space<vmem>>, vector<1x1x8xf32>
    %52 = vector.broadcast %51 : vector<1x1x8xf32> to vector<1x64x8xf32>
    %53 = arith.addf %50, %52 : vector<1x64x8xf32>
    %cst_14 = arith.constant 0.000000e+00 : f32
    %54 = vector.broadcast %cst_14 : f32 to vector<1x64x8xf32>
    %55 = arith.maximumf %53, %54 : vector<1x64x8xf32>
    %56 = vector.shape_cast %55 : vector<1x64x8xf32> to vector<1x8x8x8xf32>
    %cst_15 = arith.constant 0.000000e+00 : f32
    %57 = vector.broadcast %cst_15 : f32 to vector<1x1x8x8xf32>
    %58 = tpu.concatenate %57, %56, %57 in 1 : vector<1x1x8x8xf32>, vector<1x8x8x8xf32>, vector<1x1x8x8xf32> -> vector<1x10x8x8xf32>
    %cst_16 = arith.constant 0.000000e+00 : f32
    %59 = vector.broadcast %cst_16 : f32 to vector<1x10x1x8xf32>
    %60 = tpu.concatenate %59, %58, %59 in 2 : vector<1x10x1x8xf32>, vector<1x10x8x8xf32>, vector<1x10x1x8xf32> -> vector<1x10x10x8xf32>
    %cst_17 = arith.constant 0.000000e+00 : f32
    %61 = vector.broadcast %cst_17 : f32 to vector<1x1x4xf32>
    %cst_18 = arith.constant 0.000000e+00 : f32
    %62 = vector.broadcast %cst_18 : f32 to vector<1x1x4xf32>
    %63 = vector.extract_strided_slice %60 {offsets = [0, 0, 0, 0], sizes = [1, 8, 8, 8], strides = [1, 1, 1, 1]} : vector<1x10x10x8xf32> to vector<1x8x8x8xf32>
    %64 = vector.extract_strided_slice %60 {offsets = [0, 0, 1, 0], sizes = [1, 8, 8, 8], strides = [1, 1, 1, 1]} : vector<1x10x10x8xf32> to vector<1x8x8x8xf32>
    %65 = vector.extract_strided_slice %60 {offsets = [0, 1, 0, 0], sizes = [1, 8, 8, 8], strides = [1, 1, 1, 1]} : vector<1x10x10x8xf32> to vector<1x8x8x8xf32>
    %66 = vector.extract_strided_slice %60 {offsets = [0, 1, 1, 0], sizes = [1, 8, 8, 8], strides = [1, 1, 1, 1]} : vector<1x10x10x8xf32> to vector<1x8x8x8xf32>
    %67 = tpu.concatenate %63, %64, %65, %66 in 3 : vector<1x8x8x8xf32>, vector<1x8x8x8xf32>, vector<1x8x8x8xf32>, vector<1x8x8x8xf32> -> vector<1x8x8x32xf32>
    %68 = vector.shape_cast %67 : vector<1x8x8x32xf32> to vector<64x32xf32>
    %69 = vector.extract_strided_slice %1 {offsets = [0, 0, 0, 0], sizes = [1, 1, 32, 4], strides = [1, 1, 1, 1]} : vector<2x2x32x4xf32> to vector<1x1x32x4xf32>
    %70 = vector.shape_cast %69 : vector<1x1x32x4xf32> to vector<32x4xf32>
    %cst_19 = arith.constant dense<0.000000e+00> : vector<64x4xf32>
    %71 = tpu.matmul %68, %70, %cst_19 {dimension_numbers = #tpu.dot_dimension_numbers<[1], [0], [0], [1], [0, 0, 1, 1], [], []>} : vector<64x32xf32>, vector<32x4xf32>, vector<64x4xf32> -> vector<64x4xf32>
    %72 = vector.shape_cast %71 : vector<64x4xf32> to vector<1x64x4xf32>
    %cst_20 = arith.constant dense<0.000000e+00> : vector<1x4xf32>
    %73 = vector.multi_reduction <add>, %72, %cst_20 [1] : vector<1x64x4xf32> to vector<1x4xf32>
    %74 = vector.shape_cast %73 : vector<1x4xf32> to vector<1x1x4xf32>
    %75 = arith.addf %61, %74 : vector<1x1x4xf32>
    %76 = arith.mulf %72, %72 : vector<1x64x4xf32>
    %cst_21 = arith.constant dense<0.000000e+00> : vector<1x4xf32>
    %77 = vector.multi_reduction <add>, %76, %cst_21 [1] : vector<1x64x4xf32> to vector<1x4xf32>
    %78 = vector.shape_cast %77 : vector<1x4xf32> to vector<1x1x4xf32>
    %79 = arith.addf %62, %78 : vector<1x1x4xf32>
    %80 = vector.extract_strided_slice %60 {offsets = [0, 0, 1, 0], sizes = [1, 8, 8, 8], strides = [1, 1, 1, 1]} : vector<1x10x10x8xf32> to vector<1x8x8x8xf32>
    %81 = vector.extract_strided_slice %60 {offsets = [0, 0, 2, 0], sizes = [1, 8, 8, 8], strides = [1, 1, 1, 1]} : vector<1x10x10x8xf32> to vector<1x8x8x8xf32>
    %82 = vector.extract_strided_slice %60 {offsets = [0, 1, 1, 0], sizes = [1, 8, 8, 8], strides = [1, 1, 1, 1]} : vector<1x10x10x8xf32> to vector<1x8x8x8xf32>
    %83 = vector.extract_strided_slice %60 {offsets = [0, 1, 2, 0], sizes = [1, 8, 8, 8], strides = [1, 1, 1, 1]} : vector<1x10x10x8xf32> to vector<1x8x8x8xf32>
    %84 = tpu.concatenate %80, %81, %82, %83 in 3 : vector<1x8x8x8xf32>, vector<1x8x8x8xf32>, vector<1x8x8x8xf32>, vector<1x8x8x8xf32> -> vector<1x8x8x32xf32>
    %85 = vector.shape_cast %84 : vector<1x8x8x32xf32> to vector<64x32xf32>
    %86 = vector.extract_strided_slice %1 {offsets = [0, 1, 0, 0], sizes = [1, 1, 32, 4], strides = [1, 1, 1, 1]} : vector<2x2x32x4xf32> to vector<1x1x32x4xf32>
    %87 = vector.shape_cast %86 : vector<1x1x32x4xf32> to vector<32x4xf32>
    %cst_22 = arith.constant dense<0.000000e+00> : vector<64x4xf32>
    %88 = tpu.matmul %85, %87, %cst_22 {dimension_numbers = #tpu.dot_dimension_numbers<[1], [0], [0], [1], [0, 0, 1, 1], [], []>} : vector<64x32xf32>, vector<32x4xf32>, vector<64x4xf32> -> vector<64x4xf32>
    %89 = vector.shape_cast %88 : vector<64x4xf32> to vector<1x64x4xf32>
    %cst_23 = arith.constant dense<0.000000e+00> : vector<1x4xf32>
    %90 = vector.multi_reduction <add>, %89, %cst_23 [1] : vector<1x64x4xf32> to vector<1x4xf32>
    %91 = vector.shape_cast %90 : vector<1x4xf32> to vector<1x1x4xf32>
    %92 = arith.addf %75, %91 : vector<1x1x4xf32>
    %93 = arith.mulf %89, %89 : vector<1x64x4xf32>
    %cst_24 = arith.constant dense<0.000000e+00> : vector<1x4xf32>
    %94 = vector.multi_reduction <add>, %93, %cst_24 [1] : vector<1x64x4xf32> to vector<1x4xf32>
    %95 = vector.shape_cast %94 : vector<1x4xf32> to vector<1x1x4xf32>
    %96 = arith.addf %79, %95 : vector<1x1x4xf32>
    %97 = vector.extract_strided_slice %60 {offsets = [0, 1, 0, 0], sizes = [1, 8, 8, 8], strides = [1, 1, 1, 1]} : vector<1x10x10x8xf32> to vector<1x8x8x8xf32>
    %98 = vector.extract_strided_slice %60 {offsets = [0, 1, 1, 0], sizes = [1, 8, 8, 8], strides = [1, 1, 1, 1]} : vector<1x10x10x8xf32> to vector<1x8x8x8xf32>
    %99 = vector.extract_strided_slice %60 {offsets = [0, 2, 0, 0], sizes = [1, 8, 8, 8], strides = [1, 1, 1, 1]} : vector<1x10x10x8xf32> to vector<1x8x8x8xf32>
    %100 = vector.extract_strided_slice %60 {offsets = [0, 2, 1, 0], sizes = [1, 8, 8, 8], strides = [1, 1, 1, 1]} : vector<1x10x10x8xf32> to vector<1x8x8x8xf32>
    %101 = tpu.concatenate %97, %98, %99, %100 in 3 : vector<1x8x8x8xf32>, vector<1x8x8x8xf32>, vector<1x8x8x8xf32>, vector<1x8x8x8xf32> -> vector<1x8x8x32xf32>
    %102 = vector.shape_cast %101 : vector<1x8x8x32xf32> to vector<64x32xf32>
    %103 = vector.extract_strided_slice %1 {offsets = [1, 0, 0, 0], sizes = [1, 1, 32, 4], strides = [1, 1, 1, 1]} : vector<2x2x32x4xf32> to vector<1x1x32x4xf32>
    %104 = vector.shape_cast %103 : vector<1x1x32x4xf32> to vector<32x4xf32>
    %cst_25 = arith.constant dense<0.000000e+00> : vector<64x4xf32>
    %105 = tpu.matmul %102, %104, %cst_25 {dimension_numbers = #tpu.dot_dimension_numbers<[1], [0], [0], [1], [0, 0, 1, 1], [], []>} : vector<64x32xf32>, vector<32x4xf32>, vector<64x4xf32> -> vector<64x4xf32>
    %106 = vector.shape_cast %105 : vector<64x4xf32> to vector<1x64x4xf32>
    %cst_26 = arith.constant dense<0.000000e+00> : vector<1x4xf32>
    %107 = vector.multi_reduction <add>, %106, %cst_26 [1] : vector<1x64x4xf32> to vector<1x4xf32>
    %108 = vector.shape_cast %107 : vector<1x4xf32> to vector<1x1x4xf32>
    %109 = arith.addf %92, %108 : vector<1x1x4xf32>
    %110 = arith.mulf %106, %106 : vector<1x64x4xf32>
    %cst_27 = arith.constant dense<0.000000e+00> : vector<1x4xf32>
    %111 = vector.multi_reduction <add>, %110, %cst_27 [1] : vector<1x64x4xf32> to vector<1x4xf32>
    %112 = vector.shape_cast %111 : vector<1x4xf32> to vector<1x1x4xf32>
    %113 = arith.addf %96, %112 : vector<1x1x4xf32>
    %114 = vector.extract_strided_slice %60 {offsets = [0, 1, 1, 0], sizes = [1, 8, 8, 8], strides = [1, 1, 1, 1]} : vector<1x10x10x8xf32> to vector<1x8x8x8xf32>
    %115 = vector.extract_strided_slice %60 {offsets = [0, 1, 2, 0], sizes = [1, 8, 8, 8], strides = [1, 1, 1, 1]} : vector<1x10x10x8xf32> to vector<1x8x8x8xf32>
    %116 = vector.extract_strided_slice %60 {offsets = [0, 2, 1, 0], sizes = [1, 8, 8, 8], strides = [1, 1, 1, 1]} : vector<1x10x10x8xf32> to vector<1x8x8x8xf32>
    %117 = vector.extract_strided_slice %60 {offsets = [0, 2, 2, 0], sizes = [1, 8, 8, 8], strides = [1, 1, 1, 1]} : vector<1x10x10x8xf32> to vector<1x8x8x8xf32>
    %118 = tpu.concatenate %114, %115, %116, %117 in 3 : vector<1x8x8x8xf32>, vector<1x8x8x8xf32>, vector<1x8x8x8xf32>, vector<1x8x8x8xf32> -> vector<1x8x8x32xf32>
    %119 = vector.shape_cast %118 : vector<1x8x8x32xf32> to vector<64x32xf32>
    %120 = vector.extract_strided_slice %1 {offsets = [1, 1, 0, 0], sizes = [1, 1, 32, 4], strides = [1, 1, 1, 1]} : vector<2x2x32x4xf32> to vector<1x1x32x4xf32>
    %121 = vector.shape_cast %120 : vector<1x1x32x4xf32> to vector<32x4xf32>
    %cst_28 = arith.constant dense<0.000000e+00> : vector<64x4xf32>
    %122 = tpu.matmul %119, %121, %cst_28 {dimension_numbers = #tpu.dot_dimension_numbers<[1], [0], [0], [1], [0, 0, 1, 1], [], []>} : vector<64x32xf32>, vector<32x4xf32>, vector<64x4xf32> -> vector<64x4xf32>
    %123 = vector.shape_cast %122 : vector<64x4xf32> to vector<1x64x4xf32>
    %cst_29 = arith.constant dense<0.000000e+00> : vector<1x4xf32>
    %124 = vector.multi_reduction <add>, %123, %cst_29 [1] : vector<1x64x4xf32> to vector<1x4xf32>
    %125 = vector.shape_cast %124 : vector<1x4xf32> to vector<1x1x4xf32>
    %126 = arith.addf %109, %125 : vector<1x1x4xf32>
    %127 = arith.mulf %123, %123 : vector<1x64x4xf32>
    %cst_30 = arith.constant dense<0.000000e+00> : vector<1x4xf32>
    %128 = vector.multi_reduction <add>, %127, %cst_30 [1] : vector<1x64x4xf32> to vector<1x4xf32>
    %129 = vector.shape_cast %128 : vector<1x4xf32> to vector<1x1x4xf32>
    %130 = arith.addf %113, %129 : vector<1x1x4xf32>
    %cst_31 = arith.constant 3.906250e-03 : f32
    %131 = vector.broadcast %cst_31 : f32 to vector<1x1x4xf32>
    %132 = arith.mulf %126, %131 : vector<1x1x4xf32>
    %cst_32 = arith.constant 3.906250e-03 : f32
    %133 = vector.broadcast %cst_32 : f32 to vector<1x1x4xf32>
    %134 = arith.mulf %130, %133 : vector<1x1x4xf32>
    %135 = arith.mulf %132, %132 : vector<1x1x4xf32>
    %136 = arith.subf %134, %135 : vector<1x1x4xf32>
    %cst_33 = arith.constant 9.99999974E-6 : f32
    %137 = vector.broadcast %cst_33 : f32 to vector<1x1x4xf32>
    %138 = arith.addf %136, %137 : vector<1x1x4xf32>
    %139 = math.rsqrt %138 : vector<1x1x4xf32>
    %140 = vector.broadcast %132 : vector<1x1x4xf32> to vector<1x64x4xf32>
    %141 = arith.subf %72, %140 : vector<1x64x4xf32>
    %142 = vector.broadcast %139 : vector<1x1x4xf32> to vector<1x64x4xf32>
    %143 = arith.mulf %141, %142 : vector<1x64x4xf32>
    %144 = vector.shape_cast %143 : vector<1x64x4xf32> to vector<1x8x8x4xf32>
    %145 = vector.broadcast %132 : vector<1x1x4xf32> to vector<1x64x4xf32>
    %146 = arith.subf %89, %145 : vector<1x64x4xf32>
    %147 = vector.broadcast %139 : vector<1x1x4xf32> to vector<1x64x4xf32>
    %148 = arith.mulf %146, %147 : vector<1x64x4xf32>
    %149 = vector.shape_cast %148 : vector<1x64x4xf32> to vector<1x8x8x4xf32>
    %150 = vector.broadcast %132 : vector<1x1x4xf32> to vector<1x64x4xf32>
    %151 = arith.subf %106, %150 : vector<1x64x4xf32>
    %152 = vector.broadcast %139 : vector<1x1x4xf32> to vector<1x64x4xf32>
    %153 = arith.mulf %151, %152 : vector<1x64x4xf32>
    %154 = vector.shape_cast %153 : vector<1x64x4xf32> to vector<1x8x8x4xf32>
    %155 = vector.broadcast %132 : vector<1x1x4xf32> to vector<1x64x4xf32>
    %156 = arith.subf %123, %155 : vector<1x64x4xf32>
    %157 = vector.broadcast %139 : vector<1x1x4xf32> to vector<1x64x4xf32>
    %158 = arith.mulf %156, %157 : vector<1x64x4xf32>
    %159 = vector.shape_cast %158 : vector<1x64x4xf32> to vector<1x8x8x4xf32>
    %160 = vector.shape_cast %144 : vector<1x8x8x4xf32> to vector<1x8x8x1x4xf32>
    %161 = vector.shape_cast %149 : vector<1x8x8x4xf32> to vector<1x8x8x1x4xf32>
    %162 = tpu.concatenate %160, %161 in 3 : vector<1x8x8x1x4xf32>, vector<1x8x8x1x4xf32> -> vector<1x8x8x2x4xf32>
    %163 = vector.shape_cast %154 : vector<1x8x8x4xf32> to vector<1x8x8x1x4xf32>
    %164 = vector.shape_cast %159 : vector<1x8x8x4xf32> to vector<1x8x8x1x4xf32>
    %165 = tpu.concatenate %163, %164 in 3 : vector<1x8x8x1x4xf32>, vector<1x8x8x1x4xf32> -> vector<1x8x8x2x4xf32>
    %166 = vector.shape_cast %162 : vector<1x8x8x2x4xf32> to vector<1x8x1x8x2x4xf32>
    %167 = vector.shape_cast %165 : vector<1x8x8x2x4xf32> to vector<1x8x1x8x2x4xf32>
    %168 = tpu.concatenate %166, %167 in 2 : vector<1x8x1x8x2x4xf32>, vector<1x8x1x8x2x4xf32> -> vector<1x8x2x8x2x4xf32>
    %169 = vector.shape_cast %168 : vector<1x8x2x8x2x4xf32> to vector<1x16x16x4xf32>
    %170 = tpu.concatenate %169, %0 in 3 : vector<1x16x16x4xf32>, vector<1x16x16x4xf32> -> vector<1x16x16x8xf32>
    %171 = vector.shape_cast %170 : vector<1x16x16x8xf32> to vector<1x16x128xf32>
    %c0_34 = arith.constant 0 : index
    %c0_35 = arith.constant 0 : index
    %c0_36 = arith.constant 0 : index
    %172 = vector.load %arg5[%c0_34, %c0_35, %c0_36] : memref<1x16x128xf32, #tpu.memory_space<vmem>>, vector<1x16x128xf32>
    tpu.vector_store %arg5[%c0_34, %c0_35, %c0_36], %171 {strides = array<i32>} : memref<1x16x128xf32, #tpu.memory_space<vmem>>, vector<1x16x128xf32>,
    return
  }
  func.func @transform_0(%arg0: i32) -> (i32, i32, i32, i32) {
    %c0_i32 = arith.constant 0 : i32
    %c0_i32_0 = arith.constant 0 : i32
    %c0_i32_1 = arith.constant 0 : i32
    %c0_i32_2 = arith.constant 0 : i32
    return %arg0, %c0_i32, %c0_i32_0, %c0_i32_1 : i32, i32, i32, i32
  }
  func.func @transform_1(%arg0: i32) -> (i32, i32, i32) {
    %c0_i32 = arith.constant 0 : i32
    %c0_i32_0 = arith.constant 0 : i32
    %c0_i32_1 = arith.constant 0 : i32
    return %arg0, %c0_i32, %c0_i32_0 : i32, i32, i32
  }
  func.func @transform_2(%arg0: i32) -> (i32, i32) {
    %c0_i32 = arith.constant 0 : i32
    %c0_i32_0 = arith.constant 0 : i32
    %c0_i32_1 = arith.constant 0 : i32
    return %c0_i32, %c0_i32_0 : i32, i32
  }
  func.func @transform_3(%arg0: i32) -> (i32, i32, i32, i32) {
    %c0_i32 = arith.constant 0 : i32
    %c0_i32_0 = arith.constant 0 : i32
    %c0_i32_1 = arith.constant 0 : i32
    %c0_i32_2 = arith.constant 0 : i32
    %c0_i32_3 = arith.constant 0 : i32
    return %c0_i32, %c0_i32_0, %c0_i32_1, %c0_i32_2 : i32, i32, i32, i32
  }
  func.func @transform_4(%arg0: i32) -> (i32, i32, i32) {
    %c0_i32 = arith.constant 0 : i32
    %c0_i32_0 = arith.constant 0 : i32
    %c0_i32_1 = arith.constant 0 : i32
    return %arg0, %c0_i32, %c0_i32_0 : i32, i32, i32
  }
}

</mosaic_0001>

<llo_original>
// kernel: tpu_custom_call.1
$region0: #{tpu_custom_call.1}
  #allocation0 [shape = 'u32[]', space=smem, size = 0x4, offset = 0x4, fixed_abs, tag = 'smem constant byte address 0x4 - core index']
  #allocation1 [shape = 'u32[72,128]{1,0:T(1,128)}', space=vmem, size = 0x9000, scoped, tag = 'internal scratch']
  %s0 = inlined_call_operand.vmem [shape: f32[2,16,16,4], index: 0, kind: input, shape index: {}]
  %s1 = inlined_call_operand.vmem [shape: f32[2,1,8], index: 1, kind: input, shape index: {}]
  %s2 = inlined_call_operand.vmem [shape: f32[64,8], index: 2, kind: input, shape index: {}]
  %s3 = inlined_call_operand.vmem [shape: f32[2,2,32,4], index: 3, kind: input, shape index: {}]
  %s4 = inlined_call_operand.hbm [shape: f32[2,16,128], index: 4, kind: output, shape index: {}]
  %s5 = sld [smem:[#allocation0]]
  $region49: #{tpu_custom_call.1} parent=0
    _
  %s7 = ssub.s32 1, %s5
  %s8 = scalar_select 0, %s7, %s5
  $region1: #{tpu_custom_call.1} parent=0
    #allocation2 [shape = 'u8[16384]{0}', space=vmem, size = 0x4000, scoped, tag = 'output window, operand 0']
    #allocation3 [shape = 's32[2]{0}', space=sflag, size = 0x8, scoped, tag = 'scoped memory for tpu_custom_call.1']
    %9 = vsyncpa [#allocation3], 0
    %s10 = scalar_lea.sflag [#allocation3], 1
    %11 = vsyncpa %s10, 0
    loop: start=0, step=1, limit=4
    $region2: #{tpu_custom_call.1} parent=1 // loop_pre_header
      _
    $region3: #{tpu_custom_call.1} parent=1 // loop_header
      %s13 = sphi 0, %s17
      %p14 = scmp.ge.s32.totalorder %s13, 4
      %s23 = sphi 0, %s25
      %s26 = sphi 0, %s23
      %s27 = sphi 0, %s26
      %s43 = sphi 0, %s27
      %s49 = sphi 0, %s51
      %s52 = sphi 0, %s49
      %s53 = sphi 0, %s52
      %s69 = sphi 0, %s53
      %s73 = sphi 0, %s73
      %s75 = sphi 0, %s73
      %s76 = sphi 0, %s75
      %s90 = sphi 0, %s76
      %s94 = sphi 0, %s94
      %s96 = sphi 0, %s94
      %s97 = sphi 0, %s96
      %s111 = sphi 0, %s97
      %s117 = sphi 0, %s119
      %s120 = sphi 0, %s117
      %s121 = sphi 0, %s120
      %s137 = sphi 0, %s121
    $region4: #{tpu_custom_call.1} parent=1 // loop_header_branch
      %16 = sbr.rel (%p14) target = $region8
    $region5: #{tpu_custom_call.1} parent=1 // loop_body
      %s18 = ssub.s32 %s13, 1
      %s19 = ssub.s32 %s13, 2
      %s20 = sadd.s32 %s13, 1
      %s21 = ssub.s32 %s13, %s20
      %p22 = scmp.eq.s32.totalorder %s21, 0
      %s24 = sadd.s32 %s23, 1
      %s25 = scalar_select %p22, %s23, %s24
      %p28 = pneg %p22
      %p29 = scmp.eq.s32.totalorder %s13, 1
      %p30 = por %p28, %p29
      %p31 = scmp.ne.s32.totalorder %s23, %s26
      %p32 = scmp.eq.s32.totalorder %s13, 0
      %p33 = por %p31, %p32
      %p34 = scmp.ne.s32.totalorder %s23, %s26
      %p35 = scmp.eq.s32.totalorder %s18, 1
      %p36 = por %p34, %p35
      %p37 = scmp.ne.s32.totalorder %s26, %s27
      %p38 = scmp.eq.s32.totalorder %s18, 0
      %p39 = por %p37, %p38
      %p40 = scmp.ne.s32.totalorder %s26, %s27
      %p41 = scmp.eq.s32.totalorder %s19, 1
      %p42 = por %p40, %p41
      %p44 = scmp.ne.s32.totalorder %s27, %s43
      %p45 = scmp.eq.s32.totalorder %s19, 0
      %p46 = por %p44, %p45
      %s47 = ssub.s32 %s13, %s20
      %p48 = scmp.eq.s32.totalorder %s47, 0
      %s50 = sadd.s32 %s49, 1
      %s51 = scalar_select %p48, %s49, %s50
      %p54 = pneg %p48
      %p55 = scmp.eq.s32.totalorder %s13, 1
      %p56 = por %p54, %p55
      %p57 = scmp.ne.s32.totalorder %s49, %s52
      %p58 = scmp.eq.s32.totalorder %s13, 0
      %p59 = por %p57, %p58
      %p60 = scmp.ne.s32.totalorder %s49, %s52
      %p61 = scmp.eq.s32.totalorder %s18, 1
      %p62 = por %p60, %p61
      %p63 = scmp.ne.s32.totalorder %s52, %s53
      %p64 = scmp.eq.s32.totalorder %s18, 0
      %p65 = por %p63, %p64
      %p66 = scmp.ne.s32.totalorder %s52, %s53
      %p67 = scmp.eq.s32.totalorder %s19, 1
      %p68 = por %p66, %p67
      %p70 = scmp.ne.s32.totalorder %s53, %s69
      %p71 = scmp.eq.s32.totalorder %s19, 0
      %p72 = por %p70, %p71
      %s74 = sadd.s32 %s73, 1
      %p77 = scmp.eq.s32.totalorder %s13, 1
      %p78 = scmp.ne.s32.totalorder %s73, %s75
      %p79 = scmp.eq.s32.totalorder %s13, 0
      %p80 = por %p78, %p79
      %p81 = scmp.ne.s32.totalorder %s73, %s75
      %p82 = scmp.eq.s32.totalorder %s18, 1
      %p83 = por %p81, %p82
      %p84 = scmp.ne.s32.totalorder %s75, %s76
      %p85 = scmp.eq.s32.totalorder %s18, 0
      %p86 = por %p84, %p85
      %p87 = scmp.ne.s32.totalorder %s75, %s76
      %p88 = scmp.eq.s32.totalorder %s19, 1
      %p89 = por %p87, %p88
      %p91 = scmp.ne.s32.totalorder %s76, %s90
      %p92 = scmp.eq.s32.totalorder %s19, 0
      %p93 = por %p91, %p92
      %s95 = sadd.s32 %s94, 1
      %p98 = scmp.eq.s32.totalorder %s13, 1
      %p99 = scmp.ne.s32.totalorder %s94, %s96
      %p100 = scmp.eq.s32.totalorder %s13, 0
      %p101 = por %p99, %p100
      %p102 = scmp.ne.s32.totalorder %s94, %s96
      %p103 = scmp.eq.s32.totalorder %s18, 1
      %p104 = por %p102, %p103
      %p105 = scmp.ne.s32.totalorder %s96, %s97
      %p106 = scmp.eq.s32.totalorder %s18, 0
      %p107 = por %p105, %p106
      %p108 = scmp.ne.s32.totalorder %s96, %s97
      %p109 = scmp.eq.s32.totalorder %s19, 1
      %p110 = por %p108, %p109
      %p112 = scmp.ne.s32.totalorder %s97, %s111
      %p113 = scmp.eq.s32.totalorder %s19, 0
      %p114 = por %p112, %p113
      %s115 = ssub.s32 %s13, %s20
      %p116 = scmp.eq.s32.totalorder %s115, 0
      %s118 = sadd.s32 %s117, 1
      %s119 = scalar_select %p116, %s117, %s118
      %p122 = pneg %p116
      %p123 = scmp.eq.s32.totalorder %s13, 1
      %p124 = por %p122, %p123
      %p125 = scmp.ne.s32.totalorder %s117, %s120
      %p126 = scmp.eq.s32.totalorder %s13, 0
      %p127 = por %p125, %p126
      %p128 = scmp.ne.s32.totalorder %s117, %s120
      %p129 = scmp.eq.s32.totalorder %s18, 1
      %p130 = por %p128, %p129
      %p131 = scmp.ne.s32.totalorder %s120, %s121
      %p132 = scmp.eq.s32.totalorder %s18, 0
      %p133 = por %p131, %p132
      %p134 = scmp.ne.s32.totalorder %s120, %s121
      %p135 = scmp.eq.s32.totalorder %s19, 1
      %p136 = por %p134, %p135
      %p138 = scmp.ne.s32.totalorder %s121, %s137
      %p139 = scmp.eq.s32.totalorder %s19, 0
      %p140 = por %p138, %p139
      %p141 = scmp.le.s32.totalorder 1, %s13
      %p142 = scmp.lt.s32.totalorder %s13, 3
      %p143 = pnand %p141, %p142
      %p144 = pneg %p143
      // Predicated region
      $region9: #{tpu_custom_call.1} parent=5 // pred_check
        _
      $region10: #{tpu_custom_call.1} parent=5 // pred_check_branch
        %146 = sbr.rel (%p143) target = $region12
      $region11: #{tpu_custom_call.1} parent=5 // pred_region
        %s147 = ssub.s32 %s13, 1
        // Predicated region
        $region13: #{tpu_custom_call.1} parent=11 // pred_check
          %p148 = pneg %p86
        $region14: #{tpu_custom_call.1} parent=11 // pred_check_branch
          %150 = sbr.rel (%p148) target = $region16
        $region15: #{tpu_custom_call.1} parent=11 // pred_region
          _
        $region16: #{tpu_custom_call.1} parent=11 // pred_fallthru
          _
        // Predicated region
        $region17: #{tpu_custom_call.1} parent=11 // pred_check
          %p151 = pneg %p107
        $region18: #{tpu_custom_call.1} parent=11 // pred_check_branch
          %153 = sbr.rel (%p151) target = $region20
        $region19: #{tpu_custom_call.1} parent=11 // pred_region
          _
        $region20: #{tpu_custom_call.1} parent=11 // pred_fallthru
          _
      $region12: #{tpu_custom_call.1} parent=5 // pred_fallthru
        _
      %p154 = scmp.lt.s32.totalorder %s13, 2
      // Predicated region
      $region21: #{tpu_custom_call.1} parent=5 // pred_check
        %p155 = pneg %p154
      $region22: #{tpu_custom_call.1} parent=5 // pred_check_branch
        %157 = sbr.rel (%p155) target = $region24
      $region23: #{tpu_custom_call.1} parent=5 // pred_region
        // Predicated region
        $region25: #{tpu_custom_call.1} parent=23 // pred_check
          %p158 = pneg %p33
        $region26: #{tpu_custom_call.1} parent=23 // pred_check_branch
          %160 = sbr.rel (%p158) target = $region28
        $region27: #{tpu_custom_call.1} parent=23 // pred_region
          %p161 = scmp.lt.s32.totalorder %s13, 1
          %s162 = scalar_select %p161, %s13, 1
          %s163 = smul.addr %s162, 32
          %s164 = smul.addr %s163, 8
          %s165 = scalar_lea.vmem %s0, %s164
        $region28: #{tpu_custom_call.1} parent=23 // pred_fallthru
          _
        // Predicated region
        $region29: #{tpu_custom_call.1} parent=23 // pred_check
          %p166 = pneg %p59
        $region30: #{tpu_custom_call.1} parent=23 // pred_check_branch
          %168 = sbr.rel (%p166) target = $region32
        $region31: #{tpu_custom_call.1} parent=23 // pred_region
          %p169 = scmp.lt.s32.totalorder %s13, 1
          %s170 = scalar_select %p169, %s13, 1
          %s171 = scalar_lea.vmem %s1, %s170
        $region32: #{tpu_custom_call.1} parent=23 // pred_fallthru
          _
      $region24: #{tpu_custom_call.1} parent=5 // pred_fallthru
        _
      %p172 = scmp.le.s32.totalorder 1, %s13
      %p173 = scmp.lt.s32.totalorder %s13, 3
      %p174 = pnand %p172, %p173
      %p175 = pneg %p174
      // Predicated region
      $region33: #{tpu_custom_call.1} parent=5 // pred_check
        _
      $region34: #{tpu_custom_call.1} parent=5 // pred_check_branch
        %177 = sbr.rel (%p174) target = $region36
      $region35: #{tpu_custom_call.1} parent=5 // pred_region
        %s178 = ssub.s32 %s13, 1
        %p179 = scmp.lt.s32.totalorder %s18, 1
        %s180 = scalar_select %p179, %s18, 1
        %s181 = smul.addr %s180, 32
        %s182 = smul.addr %s181, 8
        %s183 = scalar_lea.vmem %s0, %s182
        %p184 = pneg %p39
        %p185 = pneg %p36
        %p186 = scmp.lt.s32.totalorder %s18, 1
        %s187 = scalar_select %p186, %s18, 1
        %s188 = scalar_lea.vmem %s1, %s187
        %p189 = pneg %p65
        %p190 = pneg %p62
        %p191 = pneg %p86
        %p192 = pneg %p83
        %p193 = pneg %p107
        %p194 = pneg %p104
        %p195 = pneg %p133
        %p196 = pneg %p130
        %s197 = sand.u32 %s120, 1
        %s198 = scalar_lea.sflag [#allocation3], %s197
        %s199 = sand.u32 %s120, 1
        %s200 = smul.addr %s199, 16
        %s201 = scalar_lea.vmem [#allocation2], %s200
        %p202 = scmp.lt.s32.totalorder %s18, 1
        %s203 = scalar_select %p202, %s18, 1
        %s204 = smul.addr %s203, 32
        %s205 = smul.addr %s204, 8
        %s206 = scalar_lea.vmem %s0, %s205
        %p207 = scmp.lt.s32.totalorder %s18, 1
        %s208 = scalar_select %p207, %s18, 1
        %s209 = scalar_lea.vmem %s1, %s208
        %v210 = vld [vmem:[%s206] sm:$0xff]
        %v211 = vld [vmem:[%s206 + $0x8] sm:$0xff]
        %v212 = vld [vmem:[%s206 + $0x10] sm:$0xff]
        %v213 = vld [vmem:[%s206 + $0x18] sm:$0xff]
        %v214 = vld [vmem:[%s206 + $0x20] sm:$0xff]
        %v215 = vld [vmem:[%s206 + $0x28] sm:$0xff]
        %v216 = vld [vmem:[%s206 + $0x30] sm:$0xff]
        %v217 = vld [vmem:[%s206 + $0x38] sm:$0xff]
        %v218 = vld [vmem:[%s206 + $0x40] sm:$0xff]
        %v219 = vld [vmem:[%s206 + $0x48] sm:$0xff]
        %v220 = vld [vmem:[%s206 + $0x50] sm:$0xff]
        %v221 = vld [vmem:[%s206 + $0x58] sm:$0xff]
        %v222 = vld [vmem:[%s206 + $0x60] sm:$0xff]
        %v223 = vld [vmem:[%s206 + $0x68] sm:$0xff]
        %v224 = vld [vmem:[%s206 + $0x70] sm:$0xff]
        %v225 = vld [vmem:[%s206 + $0x78] sm:$0xff]
        %v226 = vld [vmem:[%s206 + $0x80] sm:$0xff]
        %v227 = vld [vmem:[%s206 + $0x88] sm:$0xff]
        %v228 = vld [vmem:[%s206 + $0x90] sm:$0xff]
        %v229 = vld [vmem:[%s206 + $0x98] sm:$0xff]
        %v230 = vld [vmem:[%s206 + $0xa0] sm:$0xff]
        %v231 = vld [vmem:[%s206 + $0xa8] sm:$0xff]
        %v232 = vld [vmem:[%s206 + $0xb0] sm:$0xff]
        %v233 = vld [vmem:[%s206 + $0xb8] sm:$0xff]
        %v234 = vld [vmem:[%s206 + $0xc0] sm:$0xff]
        %v235 = vld [vmem:[%s206 + $0xc8] sm:$0xff]
        %v236 = vld [vmem:[%s206 + $0xd0] sm:$0xff]
        %v237 = vld [vmem:[%s206 + $0xd8] sm:$0xff]
        %v238 = vld [vmem:[%s206 + $0xe0] sm:$0xff]
        %v239 = vld [vmem:[%s206 + $0xe8] sm:$0xff]
        %v240 = vld [vmem:[%s206 + $0xf0] sm:$0xff]
        %v241 = vld [vmem:[%s206 + $0xf8] sm:$0xff]
        %v242 = vld [vmem:[%s3] sm:$0xff]
        %v243 = vld [vmem:[%s3 + $0x8] sm:$0xff]
        %v244 = vld [vmem:[%s3 + $0x10] sm:$0xff]
        %v245 = vld [vmem:[%s3 + $0x18] sm:$0xff]
        %v246 = vld [vmem:[%s3 + $0x20] sm:$0xff]
        %v247 = vld [vmem:[%s3 + $0x28] sm:$0xff]
        %v248 = vld [vmem:[%s3 + $0x30] sm:$0xff]
        %v249 = vld [vmem:[%s3 + $0x38] sm:$0xff]
        %v250 = vld [vmem:[%s3 + $0x40] sm:$0xff]
        %v251 = vld [vmem:[%s3 + $0x48] sm:$0xff]
        %v252 = vld [vmem:[%s3 + $0x50] sm:$0xff]
        %v253 = vld [vmem:[%s3 + $0x58] sm:$0xff]
        %v254 = vld [vmem:[%s3 + $0x60] sm:$0xff]
        %v255 = vld [vmem:[%s3 + $0x68] sm:$0xff]
        %v256 = vld [vmem:[%s3 + $0x70] sm:$0xff]
        %v257 = vld [vmem:[%s3 + $0x78] sm:$0xff]
        %v258 = vld [vmem:[%s2] sm:$0xff]
        %v259 = vld [vmem:[%s2 + $0x8] sm:$0xff]
        %v260 = vld [vmem:[%s2 + $0x10] sm:$0xff]
        %v261 = vld [vmem:[%s2 + $0x18] sm:$0xff]
        %v262 = vld [vmem:[%s2 + $0x20] sm:$0xff]
        %v263 = vld [vmem:[%s2 + $0x28] sm:$0xff]
        %v264 = vld [vmem:[%s2 + $0x30] sm:$0xff]
        %v265 = vld [vmem:[%s2 + $0x38] sm:$0xff]
        %vm266 = vcmp.ge.f32.partialorder %v210, 0.0
        %vm267 = vcmp.ge.f32.partialorder %v211, 0.0
        %vm268 = vcmp.ge.f32.partialorder %v212, 0.0
        %vm269 = vcmp.ge.f32.partialorder %v213, 0.0
        %vm270 = vcmp.ge.f32.partialorder %v214, 0.0
        %vm271 = vcmp.ge.f32.partialorder %v215, 0.0
        %vm272 = vcmp.ge.f32.partialorder %v216, 0.0
        %vm273 = vcmp.ge.f32.partialorder %v217, 0.0
        %vm274 = vcmp.ge.f32.partialorder %v218, 0.0
        %vm275 = vcmp.ge.f32.partialorder %v219, 0.0
        %vm276 = vcmp.ge.f32.partialorder %v220, 0.0
        %vm277 = vcmp.ge.f32.partialorder %v221, 0.0
        %vm278 = vcmp.ge.f32.partialorder %v222, 0.0
        %vm279 = vcmp.ge.f32.partialorder %v223, 0.0
        %vm280 = vcmp.ge.f32.partialorder %v224, 0.0
        %vm281 = vcmp.ge.f32.partialorder %v225, 0.0
        %vm282 = vcmp.ge.f32.partialorder %v226, 0.0
        %vm283 = vcmp.ge.f32.partialorder %v227, 0.0
        %vm284 = vcmp.ge.f32.partialorder %v228, 0.0
        %vm285 = vcmp.ge.f32.partialorder %v229, 0.0
        %vm286 = vcmp.ge.f32.partialorder %v230, 0.0
        %vm287 = vcmp.ge.f32.partialorder %v231, 0.0
        %vm288 = vcmp.ge.f32.partialorder %v232, 0.0
        %vm289 = vcmp.ge.f32.partialorder %v233, 0.0
        %vm290 = vcmp.ge.f32.partialorder %v234, 0.0
        %vm291 = vcmp.ge.f32.partialorder %v235, 0.0
        %vm292 = vcmp.ge.f32.partialorder %v236, 0.0
        %vm293 = vcmp.ge.f32.partialorder %v237, 0.0
        %vm294 = vcmp.ge.f32.partialorder %v238, 0.0
        %vm295 = vcmp.ge.f32.partialorder %v239, 0.0
        %vm296 = vcmp.ge.f32.partialorder %v240, 0.0
        %vm297 = vcmp.ge.f32.partialorder %v241, 0.0
        %v298 = vmul.f32 %v210, 0.2
        %v299 = vmul.f32 %v211, 0.2
        %v300 = vmul.f32 %v212, 0.2
        %v301 = vmul.f32 %v213, 0.2
        %v302 = vmul.f32 %v214, 0.2
        %v303 = vmul.f32 %v215, 0.2
        %v304 = vmul.f32 %v216, 0.2
        %v305 = vmul.f32 %v217, 0.2
        %v306 = vmul.f32 %v218, 0.2
        %v307 = vmul.f32 %v219, 0.2
        %v308 = vmul.f32 %v220, 0.2
        %v309 = vmul.f32 %v221, 0.2
        %v310 = vmul.f32 %v222, 0.2
        %v311 = vmul.f32 %v223, 0.2
        %v312 = vmul.f32 %v224, 0.2
        %v313 = vmul.f32 %v225, 0.2
        %v314 = vmul.f32 %v226, 0.2
        %v315 = vmul.f32 %v227, 0.2
        %v316 = vmul.f32 %v228, 0.2
        %v317 = vmul.f32 %v229, 0.2
        %v318 = vmul.f32 %v230, 0.2
        %v319 = vmul.f32 %v231, 0.2
        %v320 = vmul.f32 %v232, 0.2
        %v321 = vmul.f32 %v233, 0.2
        %v322 = vmul.f32 %v234, 0.2
        %v323 = vmul.f32 %v235, 0.2
        %v324 = vmul.f32 %v236, 0.2
        %v325 = vmul.f32 %v237, 0.2
        %v326 = vmul.f32 %v238, 0.2
        %v327 = vmul.f32 %v239, 0.2
        %v328 = vmul.f32 %v240, 0.2
        %v329 = vmul.f32 %v241, 0.2
        %v330 = vsel %vm266, %v210, %v298
        %v331 = vsel %vm267, %v211, %v299
        %v332 = vsel %vm268, %v212, %v300
        %v333 = vsel %vm269, %v213, %v301
        %v334 = vsel %vm270, %v214, %v302
        %v335 = vsel %vm271, %v215, %v303
        %v336 = vsel %vm272, %v216, %v304
        %v337 = vsel %vm273, %v217, %v305
        %v338 = vsel %vm274, %v218, %v306
        %v339 = vsel %vm275, %v219, %v307
        %v340 = vsel %vm276, %v220, %v308
        %v341 = vsel %vm277, %v221, %v309
        %v342 = vsel %vm278, %v222, %v310
        %v343 = vsel %vm279, %v223, %v311
        %v344 = vsel %vm280, %v224, %v312
        %v345 = vsel %vm281, %v225, %v313
        %v346 = vsel %vm282, %v226, %v314
        %v347 = vsel %vm283, %v227, %v315
        %v348 = vsel %vm284, %v228, %v316
        %v349 = vsel %vm285, %v229, %v317
        %v350 = vsel %vm286, %v230, %v318
        %v351 = vsel %vm287, %v231, %v319
        %v352 = vsel %vm288, %v232, %v320
        %v353 = vsel %vm289, %v233, %v321
        %v354 = vsel %vm290, %v234, %v322
        %v355 = vsel %vm291, %v235, %v323
        %v356 = vsel %vm292, %v236, %v324
        %v357 = vsel %vm293, %v237, %v325
        %v358 = vsel %vm294, %v238, %v326
        %v359 = vsel %vm295, %v239, %v327
        %v360 = vsel %vm296, %v240, %v328
        %v361 = vsel %vm297, %v241, %v329
        %v378 = vrot.slane %v332, 1
        %v379 = vrot.slane %v330, 1
        %v380 = vrot.slane %v334, 1
        %v381 = vrot.slane %v336, 1
        %v382 = vrot.slane %v338, 1
        %v383 = vrot.slane %v340, 1
        %v384 = vrot.slane %v342, 1
        %v385 = vrot.slane %v344, 1
        %v386 = vrot.slane %v346, 1
        %v387 = vrot.slane %v348, 1
        %v388 = vrot.slane %v350, 1
        %v389 = vrot.slane %v352, 1
        %v390 = vrot.slane %v354, 1
        %v391 = vrot.slane %v356, 1
        %v392 = vrot.slane %v358, 1
        %v393 = vrot.slane %v360, 1
        %vm426 = vcmask 1040384
        %v427 = vrot.slane %v332, 7
        %v428 = vrot.slane %v333, 7
        %v429 = vsel %vm426, %v427, %v428
        %v430 = vrot.slane %v330, 7
        %v431 = vrot.slane %v331, 7
        %v432 = vsel %vm426, %v430, %v431
        %v433 = vrot.slane %v334, 7
        %v434 = vrot.slane %v335, 7
        %v435 = vsel %vm426, %v433, %v434
        %v436 = vrot.slane %v336, 7
        %v437 = vrot.slane %v337, 7
        %v438 = vsel %vm426, %v436, %v437
        %v439 = vrot.slane %v338, 7
        %v440 = vrot.slane %v339, 7
        %v441 = vsel %vm426, %v439, %v440
        %v442 = vrot.slane %v340, 7
        %v443 = vrot.slane %v341, 7
        %v444 = vsel %vm426, %v442, %v443
        %v445 = vrot.slane %v342, 7
        %v446 = vrot.slane %v343, 7
        %v447 = vsel %vm426, %v445, %v446
        %v448 = vrot.slane %v344, 7
        %v449 = vrot.slane %v345, 7
        %v450 = vsel %vm426, %v448, %v449
        %v451 = vrot.slane %v346, 7
        %v452 = vrot.slane %v347, 7
        %v453 = vsel %vm426, %v451, %v452
        %v454 = vrot.slane %v348, 7
        %v455 = vrot.slane %v349, 7
        %v456 = vsel %vm426, %v454, %v455
        %v457 = vrot.slane %v350, 7
        %v458 = vrot.slane %v351, 7
        %v459 = vsel %vm426, %v457, %v458
        %v460 = vrot.slane %v352, 7
        %v461 = vrot.slane %v353, 7
        %v462 = vsel %vm426, %v460, %v461
        %v463 = vrot.slane %v354, 7
        %v464 = vrot.slane %v355, 7
        %v465 = vsel %vm426, %v463, %v464
        %v466 = vrot.slane %v356, 7
        %v467 = vrot.slane %v357, 7
        %v468 = vsel %vm426, %v466, %v467
        %v469 = vrot.slane %v358, 7
        %v470 = vrot.slane %v359, 7
        %v471 = vsel %vm426, %v469, %v470
        %v472 = vrot.slane %v360, 7
        %v473 = vrot.slane %v361, 7
        %v474 = vsel %vm426, %v472, %v473
        %v507 = vrot.slane %v333, 5
        %v508 = vrot.slane %v331, 5
        %v509 = vrot.slane %v335, 5
        %v510 = vrot.slane %v337, 5
        %v511 = vrot.slane %v339, 5
        %v512 = vrot.slane %v341, 5
        %v513 = vrot.slane %v343, 5
        %v514 = vrot.slane %v345, 5
        %v515 = vrot.slane %v347, 5
        %v516 = vrot.slane %v349, 5
        %v517 = vrot.slane %v351, 5
        %v518 = vrot.slane %v353, 5
        %v519 = vrot.slane %v355, 5
        %v520 = vrot.slane %v357, 5
        %v521 = vrot.slane %v359, 5
        %v522 = vrot.slane %v361, 5
        %v539 = vsel %vm426, %v378, %v427
        %v540 = vsel %vm426, %v379, %v430
        %v541 = vsel %vm426, %v380, %v433
        %v542 = vsel %vm426, %v381, %v436
        %v543 = vsel %vm426, %v382, %v439
        %v544 = vsel %vm426, %v383, %v442
        %v545 = vsel %vm426, %v384, %v445
        %v546 = vsel %vm426, %v385, %v448
        %v547 = vsel %vm426, %v386, %v451
        %v548 = vsel %vm426, %v387, %v454
        %v549 = vsel %vm426, %v388, %v457
        %v550 = vsel %vm426, %v389, %v460
        %v551 = vsel %vm426, %v390, %v463
        %v552 = vsel %vm426, %v391, %v466
        %v553 = vsel %vm426, %v392, %v469
        %v554 = vsel %vm426, %v393, %v472
        %v555 = vsel %vm426, %v428, %v507
        %v556 = vsel %vm426, %v431, %v508
        %v557 = vsel %vm426, %v434, %v509
        %v558 = vsel %vm426, %v437, %v510
        %v559 = vsel %vm426, %v440, %v511
        %v560 = vsel %vm426, %v443, %v512
        %v561 = vsel %vm426, %v446, %v513
        %v562 = vsel %vm426, %v449, %v514
        %v563 = vsel %vm426, %v452, %v515
        %v564 = vsel %vm426, %v455, %v516
        %v565 = vsel %vm426, %v458, %v517
        %v566 = vsel %vm426, %v461, %v518
        %v567 = vsel %vm426, %v464, %v519
        %v568 = vsel %vm426, %v467, %v520
        %v569 = vsel %vm426, %v470, %v521
        %v570 = vsel %vm426, %v473, %v522
        %v587 = vrot.slane %v539, 2
        %v588 = vrot.slane %v539, 4
        %v589 = vrot.slane %v539, 6
        %v590 = vrot.slane %v429, 2
        %v591 = vrot.slane %v429, 4
        %v592 = vrot.slane %v429, 6
        %v593 = vrot.slane %v542, 2
        %v594 = vrot.slane %v542, 4
        %v595 = vrot.slane %v542, 6
        %v596 = vrot.slane %v438, 2
        %v597 = vrot.slane %v438, 4
        %v598 = vrot.slane %v438, 6
        %v599 = vrot.slane %v544, 2
        %v600 = vrot.slane %v544, 4
        %v601 = vrot.slane %v544, 6
        %v602 = vrot.slane %v444, 2
        %v603 = vrot.slane %v444, 4
        %v604 = vrot.slane %v444, 6
        %v605 = vrot.slane %v546, 2
        %v606 = vrot.slane %v546, 4
        %v607 = vrot.slane %v546, 6
        %v608 = vrot.slane %v450, 2
        %v609 = vrot.slane %v450, 4
        %v610 = vrot.slane %v450, 6
        %v611 = vrot.slane %v548, 2
        %v612 = vrot.slane %v548, 4
        %v613 = vrot.slane %v548, 6
        %v614 = vrot.slane %v456, 2
        %v615 = vrot.slane %v456, 4
        %v616 = vrot.slane %v456, 6
        %v617 = vrot.slane %v550, 2
        %v618 = vrot.slane %v550, 4
        %v619 = vrot.slane %v550, 6
        %v620 = vrot.slane %v462, 2
        %v621 = vrot.slane %v462, 4
        %v622 = vrot.slane %v462, 6
        %v623 = vrot.slane %v552, 2
        %v624 = vrot.slane %v552, 4
        %v625 = vrot.slane %v552, 6
        %v626 = vrot.slane %v468, 2
        %v627 = vrot.slane %v468, 4
        %v628 = vrot.slane %v468, 6
        %v629 = vrot.slane %v554, 2
        %v630 = vrot.slane %v554, 4
        %v631 = vrot.slane %v554, 6
        %v632 = vrot.slane %v474, 2
        %v633 = vrot.slane %v474, 4
        %v634 = vrot.slane %v474, 6
        %v651 = vrot.slane %v540, 2
        %v652 = vrot.slane %v540, 4
        %v653 = vrot.slane %v540, 6
        %v654 = vrot.slane %v432, 2
        %v655 = vrot.slane %v432, 4
        %v656 = vrot.slane %v432, 6
        %v657 = vrot.slane %v541, 2
        %v658 = vrot.slane %v541, 4
        %v659 = vrot.slane %v541, 6
        %v660 = vrot.slane %v435, 2
        %v661 = vrot.slane %v435, 4
        %v662 = vrot.slane %v435, 6
        %v663 = vrot.slane %v543, 2
        %v664 = vrot.slane %v543, 4
        %v665 = vrot.slane %v543, 6
        %v666 = vrot.slane %v441, 2
        %v667 = vrot.slane %v441, 4
        %v668 = vrot.slane %v441, 6
        %v669 = vrot.slane %v545, 2
        %v670 = vrot.slane %v545, 4
        %v671 = vrot.slane %v545, 6
        %v672 = vrot.slane %v447, 2
        %v673 = vrot.slane %v447, 4
        %v674 = vrot.slane %v447, 6
        %v675 = vrot.slane %v547, 2
        %v676 = vrot.slane %v547, 4
        %v677 = vrot.slane %v547, 6
        %v678 = vrot.slane %v453, 2
        %v679 = vrot.slane %v453, 4
        %v680 = vrot.slane %v453, 6
        %v681 = vrot.slane %v549, 2
        %v682 = vrot.slane %v549, 4
        %v683 = vrot.slane %v549, 6
        %v684 = vrot.slane %v459, 2
        %v685 = vrot.slane %v459, 4
        %v686 = vrot.slane %v459, 6
        %v687 = vrot.slane %v551, 2
        %v688 = vrot.slane %v551, 4
        %v689 = vrot.slane %v551, 6
        %v690 = vrot.slane %v465, 2
        %v691 = vrot.slane %v465, 4
        %v692 = vrot.slane %v465, 6
        %v693 = vrot.slane %v553, 2
        %v694 = vrot.slane %v553, 4
        %v695 = vrot.slane %v553, 6
        %v696 = vrot.slane %v471, 2
        %v697 = vrot.slane %v471, 4
        %v698 = vrot.slane %v471, 6
        %v699 = vperm.slane %v539, 0
        %v700 = vperm.slane %v587, 0
        %v701 = vperm.slane %v588, 0
        %v702 = vperm.slane %v589, 0
        %v703 = vperm.slane %v429, 0
        %v704 = vperm.slane %v590, 0
        %v705 = vperm.slane %v591, 0
        %v706 = vperm.slane %v592, 0
        %v707 = vperm.slane %v542, 0
        %v708 = vperm.slane %v593, 0
        %v709 = vperm.slane %v594, 0
        %v710 = vperm.slane %v595, 0
        %v711 = vperm.slane %v438, 0
        %v712 = vperm.slane %v596, 0
        %v713 = vperm.slane %v597, 0
        %v714 = vperm.slane %v598, 0
        %v715 = vperm.slane %v544, 0
        %v716 = vperm.slane %v599, 0
        %v717 = vperm.slane %v600, 0
        %v718 = vperm.slane %v601, 0
        %v719 = vperm.slane %v444, 0
        %v720 = vperm.slane %v602, 0
        %v721 = vperm.slane %v603, 0
        %v722 = vperm.slane %v604, 0
        %v723 = vperm.slane %v546, 0
        %v724 = vperm.slane %v605, 0
        %v725 = vperm.slane %v606, 0
        %v726 = vperm.slane %v607, 0
        %v727 = vperm.slane %v450, 0
        %v728 = vperm.slane %v608, 0
        %v729 = vperm.slane %v609, 0
        %v730 = vperm.slane %v610, 0
        %v731 = vperm.slane %v548, 0
        %v732 = vperm.slane %v611, 0
        %v733 = vperm.slane %v612, 0
        %v734 = vperm.slane %v613, 0
        %v735 = vperm.slane %v456, 0
        %v736 = vperm.slane %v614, 0
        %v737 = vperm.slane %v615, 0
        %v738 = vperm.slane %v616, 0
        %v739 = vperm.slane %v550, 0
        %v740 = vperm.slane %v617, 0
        %v741 = vperm.slane %v618, 0
        %v742 = vperm.slane %v619, 0
        %v743 = vperm.slane %v462, 0
        %v744 = vperm.slane %v620, 0
        %v745 = vperm.slane %v621, 0
        %v746 = vperm.slane %v622, 0
        %v747 = vperm.slane %v552, 0
        %v748 = vperm.slane %v623, 0
        %v749 = vperm.slane %v624, 0
        %v750 = vperm.slane %v625, 0
        %v751 = vperm.slane %v468, 0
        %v752 = vperm.slane %v626, 0
        %v753 = vperm.slane %v627, 0
        %v754 = vperm.slane %v628, 0
        %vm755 = vcmask 1041409
        %v756 = vsel %vm755, %v700, %v699
        %vm757 = vcmask 1042434
        %v758 = vsel %vm757, %v701, %v756
        %vm759 = vcmask 1043459
        %v760 = vsel %vm759, %v702, %v758
        %vm761 = vcmask 1044484
        %v762 = vsel %vm761, %v703, %v760
        %vm763 = vcmask 1045509
        %v764 = vsel %vm763, %v704, %v762
        %vm765 = vcmask 1046534
        %v766 = vsel %vm765, %v705, %v764
        %vm767 = vcmask 1047559
        %v768 = vsel %vm767, %v706, %v766
        %v769 = vsel %vm755, %v708, %v707
        %v770 = vsel %vm757, %v709, %v769
        %v771 = vsel %vm759, %v710, %v770
        %v772 = vsel %vm761, %v711, %v771
        %v773 = vsel %vm763, %v712, %v772
        %v774 = vsel %vm765, %v713, %v773
        %v775 = vsel %vm767, %v714, %v774
        %v776 = vsel %vm755, %v716, %v715
        %v777 = vsel %vm757, %v717, %v776
        %v778 = vsel %vm759, %v718, %v777
        %v779 = vsel %vm761, %v719, %v778
        %v780 = vsel %vm763, %v720, %v779
        %v781 = vsel %vm765, %v721, %v780
        %v782 = vsel %vm767, %v722, %v781
        %v783 = vsel %vm755, %v724, %v723
        %v784 = vsel %vm757, %v725, %v783
        %v785 = vsel %vm759, %v726, %v784
        %v786 = vsel %vm761, %v727, %v785
        %v787 = vsel %vm763, %v728, %v786
        %v788 = vsel %vm765, %v729, %v787
        %v789 = vsel %vm767, %v730, %v788
        %v790 = vsel %vm755, %v732, %v731
        %v791 = vsel %vm757, %v733, %v790
        %v792 = vsel %vm759, %v734, %v791
        %v793 = vsel %vm761, %v735, %v792
        %v794 = vsel %vm763, %v736, %v793
        %v795 = vsel %vm765, %v737, %v794
        %v796 = vsel %vm767, %v738, %v795
        %v797 = vsel %vm755, %v740, %v739
        %v798 = vsel %vm757, %v741, %v797
        %v799 = vsel %vm759, %v742, %v798
        %v800 = vsel %vm761, %v743, %v799
        %v801 = vsel %vm763, %v744, %v800
        %v802 = vsel %vm765, %v745, %v801
        %v803 = vsel %vm767, %v746, %v802
        %v804 = vsel %vm755, %v748, %v747
        %v805 = vsel %vm757, %v749, %v804
        %v806 = vsel %vm759, %v750, %v805
        %v807 = vsel %vm761, %v751, %v806
        %v808 = vsel %vm763, %v752, %v807
        %v809 = vsel %vm765, %v753, %v808
        %v810 = vsel %vm767, %v754, %v809
        %v818 = vperm.slane %v539, 1
        %v819 = vperm.slane %v587, 1
        %v820 = vperm.slane %v588, 1
        %v821 = vperm.slane %v589, 1
        %v822 = vperm.slane %v429, 1
        %v823 = vperm.slane %v590, 1
        %v824 = vperm.slane %v591, 1
        %v825 = vperm.slane %v592, 1
        %v826 = vperm.slane %v542, 1
        %v827 = vperm.slane %v593, 1
        %v828 = vperm.slane %v594, 1
        %v829 = vperm.slane %v595, 1
        %v830 = vperm.slane %v438, 1
        %v831 = vperm.slane %v596, 1
        %v832 = vperm.slane %v597, 1
        %v833 = vperm.slane %v598, 1
        %v834 = vperm.slane %v544, 1
        %v835 = vperm.slane %v599, 1
        %v836 = vperm.slane %v600, 1
        %v837 = vperm.slane %v601, 1
        %v838 = vperm.slane %v444, 1
        %v839 = vperm.slane %v602, 1
        %v840 = vperm.slane %v603, 1
        %v841 = vperm.slane %v604, 1
        %v842 = vperm.slane %v546, 1
        %v843 = vperm.slane %v605, 1
        %v844 = vperm.slane %v606, 1
        %v845 = vperm.slane %v607, 1
        %v846 = vperm.slane %v450, 1
        %v847 = vperm.slane %v608, 1
        %v848 = vperm.slane %v609, 1
        %v849 = vperm.slane %v610, 1
        %v850 = vperm.slane %v548, 1
        %v851 = vperm.slane %v611, 1
        %v852 = vperm.slane %v612, 1
        %v853 = vperm.slane %v613, 1
        %v854 = vperm.slane %v456, 1
        %v855 = vperm.slane %v614, 1
        %v856 = vperm.slane %v615, 1
        %v857 = vperm.slane %v616, 1
        %v858 = vperm.slane %v550, 1
        %v859 = vperm.slane %v617, 1
        %v860 = vperm.slane %v618, 1
        %v861 = vperm.slane %v619, 1
        %v862 = vperm.slane %v462, 1
        %v863 = vperm.slane %v620, 1
        %v864 = vperm.slane %v621, 1
        %v865 = vperm.slane %v622, 1
        %v866 = vperm.slane %v552, 1
        %v867 = vperm.slane %v623, 1
        %v868 = vperm.slane %v624, 1
        %v869 = vperm.slane %v625, 1
        %v870 = vperm.slane %v468, 1
        %v871 = vperm.slane %v626, 1
        %v872 = vperm.slane %v627, 1
        %v873 = vperm.slane %v628, 1
        %v874 = vsel %vm755, %v819, %v818
        %v875 = vsel %vm757, %v820, %v874
        %v876 = vsel %vm759, %v821, %v875
        %v877 = vsel %vm761, %v822, %v876
        %v878 = vsel %vm763, %v823, %v877
        %v879 = vsel %vm765, %v824, %v878
        %v880 = vsel %vm767, %v825, %v879
        %v881 = vsel %vm755, %v827, %v826
        %v882 = vsel %vm757, %v828, %v881
        %v883 = vsel %vm759, %v829, %v882
        %v884 = vsel %vm761, %v830, %v883
        %v885 = vsel %vm763, %v831, %v884
        %v886 = vsel %vm765, %v832, %v885
        %v887 = vsel %vm767, %v833, %v886
        %v888 = vsel %vm755, %v835, %v834
        %v889 = vsel %vm757, %v836, %v888
        %v890 = vsel %vm759, %v837, %v889
        %v891 = vsel %vm761, %v838, %v890
        %v892 = vsel %vm763, %v839, %v891
        %v893 = vsel %vm765, %v840, %v892
        %v894 = vsel %vm767, %v841, %v893
        %v895 = vsel %vm755, %v843, %v842
        %v896 = vsel %vm757, %v844, %v895
        %v897 = vsel %vm759, %v845, %v896
        %v898 = vsel %vm761, %v846, %v897
        %v899 = vsel %vm763, %v847, %v898
        %v900 = vsel %vm765, %v848, %v899
        %v901 = vsel %vm767, %v849, %v900
        %v902 = vsel %vm755, %v851, %v850
        %v903 = vsel %vm757, %v852, %v902
        %v904 = vsel %vm759, %v853, %v903
        %v905 = vsel %vm761, %v854, %v904
        %v906 = vsel %vm763, %v855, %v905
        %v907 = vsel %vm765, %v856, %v906
        %v908 = vsel %vm767, %v857, %v907
        %v909 = vsel %vm755, %v859, %v858
        %v910 = vsel %vm757, %v860, %v909
        %v911 = vsel %vm759, %v861, %v910
        %v912 = vsel %vm761, %v862, %v911
        %v913 = vsel %vm763, %v863, %v912
        %v914 = vsel %vm765, %v864, %v913
        %v915 = vsel %vm767, %v865, %v914
        %v916 = vsel %vm755, %v867, %v866
        %v917 = vsel %vm757, %v868, %v916
        %v918 = vsel %vm759, %v869, %v917
        %v919 = vsel %vm761, %v870, %v918
        %v920 = vsel %vm763, %v871, %v919
        %v921 = vsel %vm765, %v872, %v920
        %v922 = vsel %vm767, %v873, %v921
        %923 = vrot.lane.b32.xlu0 %v880, 4
        %v924 = vpop.permute.xlu0 %923
        %925 = vrot.lane.b32.xlu0 %v887, 4
        %v926 = vpop.permute.xlu0 %925
        %927 = vrot.lane.b32.xlu0 %v894, 4
        %v928 = vpop.permute.xlu0 %927
        %929 = vrot.lane.b32.xlu0 %v901, 4
        %v930 = vpop.permute.xlu0 %929
        %931 = vrot.lane.b32.xlu0 %v908, 4
        %v932 = vpop.permute.xlu0 %931
        %933 = vrot.lane.b32.xlu0 %v915, 4
        %v934 = vpop.permute.xlu0 %933
        %935 = vrot.lane.b32.xlu0 %v922, 4
        %v936 = vpop.permute.xlu0 %935
        %v944 = vperm.slane %v555, 0
        %v945 = vperm.slane %v558, 0
        %v946 = vperm.slane %v560, 0
        %v947 = vperm.slane %v562, 0
        %v948 = vperm.slane %v564, 0
        %v949 = vperm.slane %v566, 0
        %v950 = vperm.slane %v568, 0
        %v951 = vsel %vm755, %v701, %v700
        %v952 = vsel %vm757, %v702, %v951
        %v953 = vsel %vm759, %v703, %v952
        %v954 = vsel %vm761, %v704, %v953
        %v955 = vsel %vm763, %v705, %v954
        %v956 = vsel %vm765, %v706, %v955
        %v957 = vsel %vm767, %v944, %v956
        %v958 = vsel %vm755, %v709, %v708
        %v959 = vsel %vm757, %v710, %v958
        %v960 = vsel %vm759, %v711, %v959
        %v961 = vsel %vm761, %v712, %v960
        %v962 = vsel %vm763, %v713, %v961
        %v963 = vsel %vm765, %v714, %v962
        %v964 = vsel %vm767, %v945, %v963
        %v965 = vsel %vm755, %v717, %v716
        %v966 = vsel %vm757, %v718, %v965
        %v967 = vsel %vm759, %v719, %v966
        %v968 = vsel %vm761, %v720, %v967
        %v969 = vsel %vm763, %v721, %v968
        %v970 = vsel %vm765, %v722, %v969
        %v971 = vsel %vm767, %v946, %v970
        %v972 = vsel %vm755, %v725, %v724
        %v973 = vsel %vm757, %v726, %v972
        %v974 = vsel %vm759, %v727, %v973
        %v975 = vsel %vm761, %v728, %v974
        %v976 = vsel %vm763, %v729, %v975
        %v977 = vsel %vm765, %v730, %v976
        %v978 = vsel %vm767, %v947, %v977
        %v979 = vsel %vm755, %v733, %v732
        %v980 = vsel %vm757, %v734, %v979
        %v981 = vsel %vm759, %v735, %v980
        %v982 = vsel %vm761, %v736, %v981
        %v983 = vsel %vm763, %v737, %v982
        %v984 = vsel %vm765, %v738, %v983
        %v985 = vsel %vm767, %v948, %v984
        %v986 = vsel %vm755, %v741, %v740
        %v987 = vsel %vm757, %v742, %v986
        %v988 = vsel %vm759, %v743, %v987
        %v989 = vsel %vm761, %v744, %v988
        %v990 = vsel %vm763, %v745, %v989
        %v991 = vsel %vm765, %v746, %v990
        %v992 = vsel %vm767, %v949, %v991
        %v993 = vsel %vm755, %v749, %v748
        %v994 = vsel %vm757, %v750, %v993
        %v995 = vsel %vm759, %v751, %v994
        %v996 = vsel %vm761, %v752, %v995
        %v997 = vsel %vm763, %v753, %v996
        %v998 = vsel %vm765, %v754, %v997
        %v999 = vsel %vm767, %v950, %v998
        %1000 = vrot.lane.b32.xlu0 %v957, 8
        %v1001 = vpop.permute.xlu0 %1000
        %1002 = vrot.lane.b32.xlu0 %v964, 8
        %v1003 = vpop.permute.xlu0 %1002
        %1004 = vrot.lane.b32.xlu0 %v971, 8
        %v1005 = vpop.permute.xlu0 %1004
        %1006 = vrot.lane.b32.xlu0 %v978, 8
        %v1007 = vpop.permute.xlu0 %1006
        %1008 = vrot.lane.b32.xlu0 %v985, 8
        %v1009 = vpop.permute.xlu0 %1008
        %1010 = vrot.lane.b32.xlu0 %v992, 8
        %v1011 = vpop.permute.xlu0 %1010
        %1012 = vrot.lane.b32.xlu0 %v999, 8
        %v1013 = vpop.permute.xlu0 %1012
        %v1021 = vperm.slane %v555, 1
        %v1022 = vperm.slane %v558, 1
        %v1023 = vperm.slane %v560, 1
        %v1024 = vperm.slane %v562, 1
        %v1025 = vperm.slane %v564, 1
        %v1026 = vperm.slane %v566, 1
        %v1027 = vperm.slane %v568, 1
        %v1028 = vsel %vm755, %v820, %v819
        %v1029 = vsel %vm757, %v821, %v1028
        %v1030 = vsel %vm759, %v822, %v1029
        %v1031 = vsel %vm761, %v823, %v1030
        %v1032 = vsel %vm763, %v824, %v1031
        %v1033 = vsel %vm765, %v825, %v1032
        %v1034 = vsel %vm767, %v1021, %v1033
        %v1035 = vsel %vm755, %v828, %v827
        %v1036 = vsel %vm757, %v829, %v1035
        %v1037 = vsel %vm759, %v830, %v1036
        %v1038 = vsel %vm761, %v831, %v1037
        %v1039 = vsel %vm763, %v832, %v1038
        %v1040 = vsel %vm765, %v833, %v1039
        %v1041 = vsel %vm767, %v1022, %v1040
        %v1042 = vsel %vm755, %v836, %v835
        %v1043 = vsel %vm757, %v837, %v1042
        %v1044 = vsel %vm759, %v838, %v1043
        %v1045 = vsel %vm761, %v839, %v1044
        %v1046 = vsel %vm763, %v840, %v1045
        %v1047 = vsel %vm765, %v841, %v1046
        %v1048 = vsel %vm767, %v1023, %v1047
        %v1049 = vsel %vm755, %v844, %v843
        %v1050 = vsel %vm757, %v845, %v1049
        %v1051 = vsel %vm759, %v846, %v1050
        %v1052 = vsel %vm761, %v847, %v1051
        %v1053 = vsel %vm763, %v848, %v1052
        %v1054 = vsel %vm765, %v849, %v1053
        %v1055 = vsel %vm767, %v1024, %v1054
        %v1056 = vsel %vm755, %v852, %v851
        %v1057 = vsel %vm757, %v853, %v1056
        %v1058 = vsel %vm759, %v854, %v1057
        %v1059 = vsel %vm761, %v855, %v1058
        %v1060 = vsel %vm763, %v856, %v1059
        %v1061 = vsel %vm765, %v857, %v1060
        %v1062 = vsel %vm767, %v1025, %v1061
        %v1063 = vsel %vm755, %v860, %v859
        %v1064 = vsel %vm757, %v861, %v1063
        %v1065 = vsel %vm759, %v862, %v1064
        %v1066 = vsel %vm761, %v863, %v1065
        %v1067 = vsel %vm763, %v864, %v1066
        %v1068 = vsel %vm765, %v865, %v1067
        %v1069 = vsel %vm767, %v1026, %v1068
        %v1070 = vsel %vm755, %v868, %v867
        %v1071 = vsel %vm757, %v869, %v1070
        %v1072 = vsel %vm759, %v870, %v1071
        %v1073 = vsel %vm761, %v871, %v1072
        %v1074 = vsel %vm763, %v872, %v1073
        %v1075 = vsel %vm765, %v873, %v1074
        %v1076 = vsel %vm767, %v1027, %v1075
        %1077 = vrot.lane.b32.xlu0 %v1034, 12
        %v1078 = vpop.permute.xlu0 %1077
        %1079 = vrot.lane.b32.xlu0 %v1041, 12
        %v1080 = vpop.permute.xlu0 %1079
        %1081 = vrot.lane.b32.xlu0 %v1048, 12
        %v1082 = vpop.permute.xlu0 %1081
        %1083 = vrot.lane.b32.xlu0 %v1055, 12
        %v1084 = vpop.permute.xlu0 %1083
        %1085 = vrot.lane.b32.xlu0 %v1062, 12
        %v1086 = vpop.permute.xlu0 %1085
        %1087 = vrot.lane.b32.xlu0 %v1069, 12
        %v1088 = vpop.permute.xlu0 %1087
        %1089 = vrot.lane.b32.xlu0 %v1076, 12
        %v1090 = vpop.permute.xlu0 %1089
        %v1098 = vperm.slane %v540, 0
        %v1099 = vperm.slane %v651, 0
        %v1100 = vperm.slane %v652, 0
        %v1101 = vperm.slane %v653, 0
        %v1102 = vperm.slane %v432, 0
        %v1103 = vperm.slane %v654, 0
        %v1104 = vperm.slane %v655, 0
        %v1105 = vperm.slane %v656, 0
        %v1106 = vperm.slane %v541, 0
        %v1107 = vperm.slane %v657, 0
        %v1108 = vperm.slane %v658, 0
        %v1109 = vperm.slane %v659, 0
        %v1110 = vperm.slane %v435, 0
        %v1111 = vperm.slane %v660, 0
        %v1112 = vperm.slane %v661, 0
        %v1113 = vperm.slane %v662, 0
        %v1114 = vperm.slane %v543, 0
        %v1115 = vperm.slane %v663, 0
        %v1116 = vperm.slane %v664, 0
        %v1117 = vperm.slane %v665, 0
        %v1118 = vperm.slane %v441, 0
        %v1119 = vperm.slane %v666, 0
        %v1120 = vperm.slane %v667, 0
        %v1121 = vperm.slane %v668, 0
        %v1122 = vperm.slane %v545, 0
        %v1123 = vperm.slane %v669, 0
        %v1124 = vperm.slane %v670, 0
        %v1125 = vperm.slane %v671, 0
        %v1126 = vperm.slane %v447, 0
        %v1127 = vperm.slane %v672, 0
        %v1128 = vperm.slane %v673, 0
        %v1129 = vperm.slane %v674, 0
        %v1130 = vperm.slane %v547, 0
        %v1131 = vperm.slane %v675, 0
        %v1132 = vperm.slane %v676, 0
        %v1133 = vperm.slane %v677, 0
        %v1134 = vperm.slane %v453, 0
        %v1135 = vperm.slane %v678, 0
        %v1136 = vperm.slane %v679, 0
        %v1137 = vperm.slane %v680, 0
        %v1138 = vperm.slane %v549, 0
        %v1139 = vperm.slane %v681, 0
        %v1140 = vperm.slane %v682, 0
        %v1141 = vperm.slane %v683, 0
        %v1142 = vperm.slane %v459, 0
        %v1143 = vperm.slane %v684, 0
        %v1144 = vperm.slane %v685, 0
        %v1145 = vperm.slane %v686, 0
        %v1146 = vperm.slane %v551, 0
        %v1147 = vperm.slane %v687, 0
        %v1148 = vperm.slane %v688, 0
        %v1149 = vperm.slane %v689, 0
        %v1150 = vperm.slane %v465, 0
        %v1151 = vperm.slane %v690, 0
        %v1152 = vperm.slane %v691, 0
        %v1153 = vperm.slane %v692, 0
        %v1154 = vperm.slane %v553, 0
        %v1155 = vperm.slane %v693, 0
        %v1156 = vperm.slane %v694, 0
        %v1157 = vperm.slane %v695, 0
        %v1158 = vperm.slane %v471, 0
        %v1159 = vperm.slane %v696, 0
        %v1160 = vperm.slane %v697, 0
        %v1161 = vperm.slane %v698, 0
        %v1162 = vsel %vm755, %v1099, %v1098
        %v1163 = vsel %vm757, %v1100, %v1162
        %v1164 = vsel %vm759, %v1101, %v1163
        %v1165 = vsel %vm761, %v1102, %v1164
        %v1166 = vsel %vm763, %v1103, %v1165
        %v1167 = vsel %vm765, %v1104, %v1166
        %v1168 = vsel %vm767, %v1105, %v1167
        %v1169 = vsel %vm755, %v1107, %v1106
        %v1170 = vsel %vm757, %v1108, %v1169
        %v1171 = vsel %vm759, %v1109, %v1170
        %v1172 = vsel %vm761, %v1110, %v1171
        %v1173 = vsel %vm763, %v1111, %v1172
        %v1174 = vsel %vm765, %v1112, %v1173
        %v1175 = vsel %vm767, %v1113, %v1174
        %v1176 = vsel %vm755, %v1115, %v1114
        %v1177 = vsel %vm757, %v1116, %v1176
        %v1178 = vsel %vm759, %v1117, %v1177
        %v1179 = vsel %vm761, %v1118, %v1178
        %v1180 = vsel %vm763, %v1119, %v1179
        %v1181 = vsel %vm765, %v1120, %v1180
        %v1182 = vsel %vm767, %v1121, %v1181
        %v1183 = vsel %vm755, %v1123, %v1122
        %v1184 = vsel %vm757, %v1124, %v1183
        %v1185 = vsel %vm759, %v1125, %v1184
        %v1186 = vsel %vm761, %v1126, %v1185
        %v1187 = vsel %vm763, %v1127, %v1186
        %v1188 = vsel %vm765, %v1128, %v1187
        %v1189 = vsel %vm767, %v1129, %v1188
        %v1190 = vsel %vm755, %v1131, %v1130
        %v1191 = vsel %vm757, %v1132, %v1190
        %v1192 = vsel %vm759, %v1133, %v1191
        %v1193 = vsel %vm761, %v1134, %v1192
        %v1194 = vsel %vm763, %v1135, %v1193
        %v1195 = vsel %vm765, %v1136, %v1194
        %v1196 = vsel %vm767, %v1137, %v1195
        %v1197 = vsel %vm755, %v1139, %v1138
        %v1198 = vsel %vm757, %v1140, %v1197
        %v1199 = vsel %vm759, %v1141, %v1198
        %v1200 = vsel %vm761, %v1142, %v1199
        %v1201 = vsel %vm763, %v1143, %v1200
        %v1202 = vsel %vm765, %v1144, %v1201
        %v1203 = vsel %vm767, %v1145, %v1202
        %v1204 = vsel %vm755, %v1147, %v1146
        %v1205 = vsel %vm757, %v1148, %v1204
        %v1206 = vsel %vm759, %v1149, %v1205
        %v1207 = vsel %vm761, %v1150, %v1206
        %v1208 = vsel %vm763, %v1151, %v1207
        %v1209 = vsel %vm765, %v1152, %v1208
        %v1210 = vsel %vm767, %v1153, %v1209
        %v1211 = vsel %vm755, %v1155, %v1154
        %v1212 = vsel %vm757, %v1156, %v1211
        %v1213 = vsel %vm759, %v1157, %v1212
        %v1214 = vsel %vm761, %v1158, %v1213
        %v1215 = vsel %vm763, %v1159, %v1214
        %v1216 = vsel %vm765, %v1160, %v1215
        %v1217 = vsel %vm767, %v1161, %v1216
        %1218 = vrot.lane.b32.xlu0 %v1168, 16
        %v1219 = vpop.permute.xlu0 %1218
        %1220 = vrot.lane.b32.xlu0 %v1175, 16
        %v1221 = vpop.permute.xlu0 %1220
        %1222 = vrot.lane.b32.xlu0 %v1182, 16
        %v1223 = vpop.permute.xlu0 %1222
        %1224 = vrot.lane.b32.xlu0 %v1189, 16
        %v1225 = vpop.permute.xlu0 %1224
        %1226 = vrot.lane.b32.xlu0 %v1196, 16
        %v1227 = vpop.permute.xlu0 %1226
        %1228 = vrot.lane.b32.xlu0 %v1203, 16
        %v1229 = vpop.permute.xlu0 %1228
        %1230 = vrot.lane.b32.xlu0 %v1210, 16
        %v1231 = vpop.permute.xlu0 %1230
        %1232 = vrot.lane.b32.xlu0 %v1217, 16
        %v1233 = vpop.permute.xlu0 %1232
        %v1242 = vperm.slane %v540, 1
        %v1243 = vperm.slane %v651, 1
        %v1244 = vperm.slane %v652, 1
        %v1245 = vperm.slane %v653, 1
        %v1246 = vperm.slane %v432, 1
        %v1247 = vperm.slane %v654, 1
        %v1248 = vperm.slane %v655, 1
        %v1249 = vperm.slane %v656, 1
        %v1250 = vperm.slane %v541, 1
        %v1251 = vperm.slane %v657, 1
        %v1252 = vperm.slane %v658, 1
        %v1253 = vperm.slane %v659, 1
        %v1254 = vperm.slane %v435, 1
        %v1255 = vperm.slane %v660, 1
        %v1256 = vperm.slane %v661, 1
        %v1257 = vperm.slane %v662, 1
        %v1258 = vperm.slane %v543, 1
        %v1259 = vperm.slane %v663, 1
        %v1260 = vperm.slane %v664, 1
        %v1261 = vperm.slane %v665, 1
        %v1262 = vperm.slane %v441, 1
        %v1263 = vperm.slane %v666, 1
        %v1264 = vperm.slane %v667, 1
        %v1265 = vperm.slane %v668, 1
        %v1266 = vperm.slane %v545, 1
        %v1267 = vperm.slane %v669, 1
        %v1268 = vperm.slane %v670, 1
        %v1269 = vperm.slane %v671, 1
        %v1270 = vperm.slane %v447, 1
        %v1271 = vperm.slane %v672, 1
        %v1272 = vperm.slane %v673, 1
        %v1273 = vperm.slane %v674, 1
        %v1274 = vperm.slane %v547, 1
        %v1275 = vperm.slane %v675, 1
        %v1276 = vperm.slane %v676, 1
        %v1277 = vperm.slane %v677, 1
        %v1278 = vperm.slane %v453, 1
        %v1279 = vperm.slane %v678, 1
        %v1280 = vperm.slane %v679, 1
        %v1281 = vperm.slane %v680, 1
        %v1282 = vperm.slane %v549, 1
        %v1283 = vperm.slane %v681, 1
        %v1284 = vperm.slane %v682, 1
        %v1285 = vperm.slane %v683, 1
        %v1286 = vperm.slane %v459, 1
        %v1287 = vperm.slane %v684, 1
        %v1288 = vperm.slane %v685, 1
        %v1289 = vperm.slane %v686, 1
        %v1290 = vperm.slane %v551, 1
        %v1291 = vperm.slane %v687, 1
        %v1292 = vperm.slane %v688, 1
        %v1293 = vperm.slane %v689, 1
        %v1294 = vperm.slane %v465, 1
        %v1295 = vperm.slane %v690, 1
        %v1296 = vperm.slane %v691, 1
        %v1297 = vperm.slane %v692, 1
        %v1298 = vperm.slane %v553, 1
        %v1299 = vperm.slane %v693, 1
        %v1300 = vperm.slane %v694, 1
        %v1301 = vperm.slane %v695, 1
        %v1302 = vperm.slane %v471, 1
        %v1303 = vperm.slane %v696, 1
        %v1304 = vperm.slane %v697, 1
        %v1305 = vperm.slane %v698, 1
        %v1306 = vsel %vm755, %v1243, %v1242
        %v1307 = vsel %vm757, %v1244, %v1306
        %v1308 = vsel %vm759, %v1245, %v1307
        %v1309 = vsel %vm761, %v1246, %v1308
        %v1310 = vsel %vm763, %v1247, %v1309
        %v1311 = vsel %vm765, %v1248, %v1310
        %v1312 = vsel %vm767, %v1249, %v1311
        %v1313 = vsel %vm755, %v1251, %v1250
        %v1314 = vsel %vm757, %v1252, %v1313
        %v1315 = vsel %vm759, %v1253, %v1314
        %v1316 = vsel %vm761, %v1254, %v1315
        %v1317 = vsel %vm763, %v1255, %v1316
        %v1318 = vsel %vm765, %v1256, %v1317
        %v1319 = vsel %vm767, %v1257, %v1318
        %v1320 = vsel %vm755, %v1259, %v1258
        %v1321 = vsel %vm757, %v1260, %v1320
        %v1322 = vsel %vm759, %v1261, %v1321
        %v1323 = vsel %vm761, %v1262, %v1322
        %v1324 = vsel %vm763, %v1263, %v1323
        %v1325 = vsel %vm765, %v1264, %v1324
        %v1326 = vsel %vm767, %v1265, %v1325
        %v1327 = vsel %vm755, %v1267, %v1266
        %v1328 = vsel %vm757, %v1268, %v1327
        %v1329 = vsel %vm759, %v1269, %v1328
        %v1330 = vsel %vm761, %v1270, %v1329
        %v1331 = vsel %vm763, %v1271, %v1330
        %v1332 = vsel %vm765, %v1272, %v1331
        %v1333 = vsel %vm767, %v1273, %v1332
        %v1334 = vsel %vm755, %v1275, %v1274
        %v1335 = vsel %vm757, %v1276, %v1334
        %v1336 = vsel %vm759, %v1277, %v1335
        %v1337 = vsel %vm761, %v1278, %v1336
        %v1338 = vsel %vm763, %v1279, %v1337
        %v1339 = vsel %vm765, %v1280, %v1338
        %v1340 = vsel %vm767, %v1281, %v1339
        %v1341 = vsel %vm755, %v1283, %v1282
        %v1342 = vsel %vm757, %v1284, %v1341
        %v1343 = vsel %vm759, %v1285, %v1342
        %v1344 = vsel %vm761, %v1286, %v1343
        %v1345 = vsel %vm763, %v1287, %v1344
        %v1346 = vsel %vm765, %v1288, %v1345
        %v1347 = vsel %vm767, %v1289, %v1346
        %v1348 = vsel %vm755, %v1291, %v1290
        %v1349 = vsel %vm757, %v1292, %v1348
        %v1350 = vsel %vm759, %v1293, %v1349
        %v1351 = vsel %vm761, %v1294, %v1350
        %v1352 = vsel %vm763, %v1295, %v1351
        %v1353 = vsel %vm765, %v1296, %v1352
        %v1354 = vsel %vm767, %v1297, %v1353
        %v1355 = vsel %vm755, %v1299, %v1298
        %v1356 = vsel %vm757, %v1300, %v1355
        %v1357 = vsel %vm759, %v1301, %v1356
        %v1358 = vsel %vm761, %v1302, %v1357
        %v1359 = vsel %vm763, %v1303, %v1358
        %v1360 = vsel %vm765, %v1304, %v1359
        %v1361 = vsel %vm767, %v1305, %v1360
        %1362 = vrot.lane.b32.xlu0 %v1312, 20
        %v1363 = vpop.permute.xlu0 %1362
        %1364 = vrot.lane.b32.xlu0 %v1319, 20
        %v1365 = vpop.permute.xlu0 %1364
        %1366 = vrot.lane.b32.xlu0 %v1326, 20
        %v1367 = vpop.permute.xlu0 %1366
        %1368 = vrot.lane.b32.xlu0 %v1333, 20
        %v1369 = vpop.permute.xlu0 %1368
        %1370 = vrot.lane.b32.xlu0 %v1340, 20
        %v1371 = vpop.permute.xlu0 %1370
        %1372 = vrot.lane.b32.xlu0 %v1347, 20
        %v1373 = vpop.permute.xlu0 %1372
        %1374 = vrot.lane.b32.xlu0 %v1354, 20
        %v1375 = vpop.permute.xlu0 %1374
        %1376 = vrot.lane.b32.xlu0 %v1361, 20
        %v1377 = vpop.permute.xlu0 %1376
        %v1386 = vperm.slane %v556, 0
        %v1387 = vperm.slane %v557, 0
        %v1388 = vperm.slane %v559, 0
        %v1389 = vperm.slane %v561, 0
        %v1390 = vperm.slane %v563, 0
        %v1391 = vperm.slane %v565, 0
        %v1392 = vperm.slane %v567, 0
        %v1393 = vperm.slane %v569, 0
        %v1394 = vsel %vm755, %v1100, %v1099
        %v1395 = vsel %vm757, %v1101, %v1394
        %v1396 = vsel %vm759, %v1102, %v1395
        %v1397 = vsel %vm761, %v1103, %v1396
        %v1398 = vsel %vm763, %v1104, %v1397
        %v1399 = vsel %vm765, %v1105, %v1398
        %v1400 = vsel %vm767, %v1386, %v1399
        %v1401 = vsel %vm755, %v1108, %v1107
        %v1402 = vsel %vm757, %v1109, %v1401
        %v1403 = vsel %vm759, %v1110, %v1402
        %v1404 = vsel %vm761, %v1111, %v1403
        %v1405 = vsel %vm763, %v1112, %v1404
        %v1406 = vsel %vm765, %v1113, %v1405
        %v1407 = vsel %vm767, %v1387, %v1406
        %v1408 = vsel %vm755, %v1116, %v1115
        %v1409 = vsel %vm757, %v1117, %v1408
        %v1410 = vsel %vm759, %v1118, %v1409
        %v1411 = vsel %vm761, %v1119, %v1410
        %v1412 = vsel %vm763, %v1120, %v1411
        %v1413 = vsel %vm765, %v1121, %v1412
        %v1414 = vsel %vm767, %v1388, %v1413
        %v1415 = vsel %vm755, %v1124, %v1123
        %v1416 = vsel %vm757, %v1125, %v1415
        %v1417 = vsel %vm759, %v1126, %v1416
        %v1418 = vsel %vm761, %v1127, %v1417
        %v1419 = vsel %vm763, %v1128, %v1418
        %v1420 = vsel %vm765, %v1129, %v1419
        %v1421 = vsel %vm767, %v1389, %v1420
        %v1422 = vsel %vm755, %v1132, %v1131
        %v1423 = vsel %vm757, %v1133, %v1422
        %v1424 = vsel %vm759, %v1134, %v1423
        %v1425 = vsel %vm761, %v1135, %v1424
        %v1426 = vsel %vm763, %v1136, %v1425
        %v1427 = vsel %vm765, %v1137, %v1426
        %v1428 = vsel %vm767, %v1390, %v1427
        %v1429 = vsel %vm755, %v1140, %v1139
        %v1430 = vsel %vm757, %v1141, %v1429
        %v1431 = vsel %vm759, %v1142, %v1430
        %v1432 = vsel %vm761, %v1143, %v1431
        %v1433 = vsel %vm763, %v1144, %v1432
        %v1434 = vsel %vm765, %v1145, %v1433
        %v1435 = vsel %vm767, %v1391, %v1434
        %v1436 = vsel %vm755, %v1148, %v1147
        %v1437 = vsel %vm757, %v1149, %v1436
        %v1438 = vsel %vm759, %v1150, %v1437
        %v1439 = vsel %vm761, %v1151, %v1438
        %v1440 = vsel %vm763, %v1152, %v1439
        %v1441 = vsel %vm765, %v1153, %v1440
        %v1442 = vsel %vm767, %v1392, %v1441
        %v1443 = vsel %vm755, %v1156, %v1155
        %v1444 = vsel %vm757, %v1157, %v1443
        %v1445 = vsel %vm759, %v1158, %v1444
        %v1446 = vsel %vm761, %v1159, %v1445
        %v1447 = vsel %vm763, %v1160, %v1446
        %v1448 = vsel %vm765, %v1161, %v1447
        %v1449 = vsel %vm767, %v1393, %v1448
        %1450 = vrot.lane.b32.xlu0 %v1400, 24
        %v1451 = vpop.permute.xlu0 %1450
        %1452 = vrot.lane.b32.xlu0 %v1407, 24
        %v1453 = vpop.permute.xlu0 %1452
        %1454 = vrot.lane.b32.xlu0 %v1414, 24
        %v1455 = vpop.permute.xlu0 %1454
        %1456 = vrot.lane.b32.xlu0 %v1421, 24
        %v1457 = vpop.permute.xlu0 %1456
        %1458 = vrot.lane.b32.xlu0 %v1428, 24
        %v1459 = vpop.permute.xlu0 %1458
        %1460 = vrot.lane.b32.xlu0 %v1435, 24
        %v1461 = vpop.permute.xlu0 %1460
        %1462 = vrot.lane.b32.xlu0 %v1442, 24
        %v1463 = vpop.permute.xlu0 %1462
        %1464 = vrot.lane.b32.xlu0 %v1449, 24
        %v1465 = vpop.permute.xlu0 %1464
        %v1474 = vperm.slane %v556, 1
        %v1475 = vperm.slane %v557, 1
        %v1476 = vperm.slane %v559, 1
        %v1477 = vperm.slane %v561, 1
        %v1478 = vperm.slane %v563, 1
        %v1479 = vperm.slane %v565, 1
        %v1480 = vperm.slane %v567, 1
        %v1481 = vperm.slane %v569, 1
        %v1482 = vsel %vm755, %v1244, %v1243
        %v1483 = vsel %vm757, %v1245, %v1482
        %v1484 = vsel %vm759, %v1246, %v1483
        %v1485 = vsel %vm761, %v1247, %v1484
        %v1486 = vsel %vm763, %v1248, %v1485
        %v1487 = vsel %vm765, %v1249, %v1486
        %v1488 = vsel %vm767, %v1474, %v1487
        %v1489 = vsel %vm755, %v1252, %v1251
        %v1490 = vsel %vm757, %v1253, %v1489
        %v1491 = vsel %vm759, %v1254, %v1490
        %v1492 = vsel %vm761, %v1255, %v1491
        %v1493 = vsel %vm763, %v1256, %v1492
        %v1494 = vsel %vm765, %v1257, %v1493
        %v1495 = vsel %vm767, %v1475, %v1494
        %v1496 = vsel %vm755, %v1260, %v1259
        %v1497 = vsel %vm757, %v1261, %v1496
        %v1498 = vsel %vm759, %v1262, %v1497
        %v1499 = vsel %vm761, %v1263, %v1498
        %v1500 = vsel %vm763, %v1264, %v1499
        %v1501 = vsel %vm765, %v1265, %v1500
        %v1502 = vsel %vm767, %v1476, %v1501
        %v1503 = vsel %vm755, %v1268, %v1267
        %v1504 = vsel %vm757, %v1269, %v1503
        %v1505 = vsel %vm759, %v1270, %v1504
        %v1506 = vsel %vm761, %v1271, %v1505
        %v1507 = vsel %vm763, %v1272, %v1506
        %v1508 = vsel %vm765, %v1273, %v1507
        %v1509 = vsel %vm767, %v1477, %v1508
        %v1510 = vsel %vm755, %v1276, %v1275
        %v1511 = vsel %vm757, %v1277, %v1510
        %v1512 = vsel %vm759, %v1278, %v1511
        %v1513 = vsel %vm761, %v1279, %v1512
        %v1514 = vsel %vm763, %v1280, %v1513
        %v1515 = vsel %vm765, %v1281, %v1514
        %v1516 = vsel %vm767, %v1478, %v1515
        %v1517 = vsel %vm755, %v1284, %v1283
        %v1518 = vsel %vm757, %v1285, %v1517
        %v1519 = vsel %vm759, %v1286, %v1518
        %v1520 = vsel %vm761, %v1287, %v1519
        %v1521 = vsel %vm763, %v1288, %v1520
        %v1522 = vsel %vm765, %v1289, %v1521
        %v1523 = vsel %vm767, %v1479, %v1522
        %v1524 = vsel %vm755, %v1292, %v1291
        %v1525 = vsel %vm757, %v1293, %v1524
        %v1526 = vsel %vm759, %v1294, %v1525
        %v1527 = vsel %vm761, %v1295, %v1526
        %v1528 = vsel %vm763, %v1296, %v1527
        %v1529 = vsel %vm765, %v1297, %v1528
        %v1530 = vsel %vm767, %v1480, %v1529
        %v1531 = vsel %vm755, %v1300, %v1299
        %v1532 = vsel %vm757, %v1301, %v1531
        %v1533 = vsel %vm759, %v1302, %v1532
        %v1534 = vsel %vm761, %v1303, %v1533
        %v1535 = vsel %vm763, %v1304, %v1534
        %v1536 = vsel %vm765, %v1305, %v1535
        %v1537 = vsel %vm767, %v1481, %v1536
        %1538 = vrot.lane.b32.xlu0 %v1488, 28
        %v1539 = vpop.permute.xlu0 %1538
        %1540 = vrot.lane.b32.xlu0 %v1495, 28
        %v1541 = vpop.permute.xlu0 %1540
        %1542 = vrot.lane.b32.xlu0 %v1502, 28
        %v1543 = vpop.permute.xlu0 %1542
        %1544 = vrot.lane.b32.xlu0 %v1509, 28
        %v1545 = vpop.permute.xlu0 %1544
        %1546 = vrot.lane.b32.xlu0 %v1516, 28
        %v1547 = vpop.permute.xlu0 %1546
        %1548 = vrot.lane.b32.xlu0 %v1523, 28
        %v1549 = vpop.permute.xlu0 %1548
        %1550 = vrot.lane.b32.xlu0 %v1530, 28
        %v1551 = vpop.permute.xlu0 %1550
        %1552 = vrot.lane.b32.xlu0 %v1537, 28
        %v1553 = vpop.permute.xlu0 %1552
        %v1562 = vperm.slane %v554, 0
        %v1563 = vperm.slane %v629, 0
        %v1564 = vperm.slane %v630, 0
        %v1565 = vperm.slane %v631, 0
        %v1566 = vperm.slane %v474, 0
        %v1567 = vperm.slane %v632, 0
        %v1568 = vperm.slane %v633, 0
        %v1569 = vperm.slane %v634, 0
        %v1570 = vsel %vm755, %v1563, %v1562
        %v1571 = vsel %vm757, %v1564, %v1570
        %v1572 = vsel %vm759, %v1565, %v1571
        %v1573 = vsel %vm761, %v1566, %v1572
        %v1574 = vsel %vm763, %v1567, %v1573
        %v1575 = vsel %vm765, %v1568, %v1574
        %v1576 = vsel %vm767, %v1569, %v1575
        %1577 = vrot.lane.b32.xlu0 %v768, 32
        %v1578 = vpop.permute.xlu0 %1577
        %1579 = vrot.lane.b32.xlu0 %v775, 32
        %v1580 = vpop.permute.xlu0 %1579
        %1581 = vrot.lane.b32.xlu0 %v782, 32
        %v1582 = vpop.permute.xlu0 %1581
        %1583 = vrot.lane.b32.xlu0 %v789, 32
        %v1584 = vpop.permute.xlu0 %1583
        %1585 = vrot.lane.b32.xlu0 %v796, 32
        %v1586 = vpop.permute.xlu0 %1585
        %1587 = vrot.lane.b32.xlu0 %v803, 32
        %v1588 = vpop.permute.xlu0 %1587
        %1589 = vrot.lane.b32.xlu0 %v810, 32
        %v1590 = vpop.permute.xlu0 %1589
        %1591 = vrot.lane.b32.xlu0 %v1576, 32
        %v1592 = vpop.permute.xlu0 %1591
        %v1601 = vperm.slane %v554, 1
        %v1602 = vperm.slane %v629, 1
        %v1603 = vperm.slane %v630, 1
        %v1604 = vperm.slane %v631, 1
        %v1605 = vperm.slane %v474, 1
        %v1606 = vperm.slane %v632, 1
        %v1607 = vperm.slane %v633, 1
        %v1608 = vperm.slane %v634, 1
        %v1609 = vsel %vm755, %v1602, %v1601
        %v1610 = vsel %vm757, %v1603, %v1609
        %v1611 = vsel %vm759, %v1604, %v1610
        %v1612 = vsel %vm761, %v1605, %v1611
        %v1613 = vsel %vm763, %v1606, %v1612
        %v1614 = vsel %vm765, %v1607, %v1613
        %v1615 = vsel %vm767, %v1608, %v1614
        %1616 = vrot.lane.b32.xlu0 %v880, 36
        %v1617 = vpop.permute.xlu0 %1616
        %1618 = vrot.lane.b32.xlu0 %v887, 36
        %v1619 = vpop.permute.xlu0 %1618
        %1620 = vrot.lane.b32.xlu0 %v894, 36
        %v1621 = vpop.permute.xlu0 %1620
        %1622 = vrot.lane.b32.xlu0 %v901, 36
        %v1623 = vpop.permute.xlu0 %1622
        %1624 = vrot.lane.b32.xlu0 %v908, 36
        %v1625 = vpop.permute.xlu0 %1624
        %1626 = vrot.lane.b32.xlu0 %v915, 36
        %v1627 = vpop.permute.xlu0 %1626
        %1628 = vrot.lane.b32.xlu0 %v922, 36
        %v1629 = vpop.permute.xlu0 %1628
        %1630 = vrot.lane.b32.xlu0 %v1615, 36
        %v1631 = vpop.permute.xlu0 %1630
        %v1640 = vperm.slane %v570, 0
        %v1641 = vsel %vm755, %v1564, %v1563
        %v1642 = vsel %vm757, %v1565, %v1641
        %v1643 = vsel %vm759, %v1566, %v1642
        %v1644 = vsel %vm761, %v1567, %v1643
        %v1645 = vsel %vm763, %v1568, %v1644
        %v1646 = vsel %vm765, %v1569, %v1645
        %v1647 = vsel %vm767, %v1640, %v1646
        %1648 = vrot.lane.b32.xlu0 %v957, 40
        %v1649 = vpop.permute.xlu0 %1648
        %1650 = vrot.lane.b32.xlu0 %v964, 40
        %v1651 = vpop.permute.xlu0 %1650
        %1652 = vrot.lane.b32.xlu0 %v971, 40
        %v1653 = vpop.permute.xlu0 %1652
        %1654 = vrot.lane.b32.xlu0 %v978, 40
        %v1655 = vpop.permute.xlu0 %1654
        %1656 = vrot.lane.b32.xlu0 %v985, 40
        %v1657 = vpop.permute.xlu0 %1656
        %1658 = vrot.lane.b32.xlu0 %v992, 40
        %v1659 = vpop.permute.xlu0 %1658
        %1660 = vrot.lane.b32.xlu0 %v999, 40
        %v1661 = vpop.permute.xlu0 %1660
        %1662 = vrot.lane.b32.xlu0 %v1647, 40
        %v1663 = vpop.permute.xlu0 %1662
        %v1672 = vperm.slane %v570, 1
        %v1673 = vsel %vm755, %v1603, %v1602
        %v1674 = vsel %vm757, %v1604, %v1673
        %v1675 = vsel %vm759, %v1605, %v1674
        %v1676 = vsel %vm761, %v1606, %v1675
        %v1677 = vsel %vm763, %v1607, %v1676
        %v1678 = vsel %vm765, %v1608, %v1677
        %v1679 = vsel %vm767, %v1672, %v1678
        %1680 = vrot.lane.b32.xlu0 %v1034, 44
        %v1681 = vpop.permute.xlu0 %1680
        %1682 = vrot.lane.b32.xlu0 %v1041, 44
        %v1683 = vpop.permute.xlu0 %1682
        %1684 = vrot.lane.b32.xlu0 %v1048, 44
        %v1685 = vpop.permute.xlu0 %1684
        %1686 = vrot.lane.b32.xlu0 %v1055, 44
        %v1687 = vpop.permute.xlu0 %1686
        %1688 = vrot.lane.b32.xlu0 %v1062, 44
        %v1689 = vpop.permute.xlu0 %1688
        %1690 = vrot.lane.b32.xlu0 %v1069, 44
        %v1691 = vpop.permute.xlu0 %1690
        %1692 = vrot.lane.b32.xlu0 %v1076, 44
        %v1693 = vpop.permute.xlu0 %1692
        %1694 = vrot.lane.b32.xlu0 %v1679, 44
        %v1695 = vpop.permute.xlu0 %1694
        %1704 = vrot.lane.b32.xlu0 %v1175, 48
        %v1705 = vpop.permute.xlu0 %1704
        %1706 = vrot.lane.b32.xlu0 %v1182, 48
        %v1707 = vpop.permute.xlu0 %1706
        %1708 = vrot.lane.b32.xlu0 %v1189, 48
        %v1709 = vpop.permute.xlu0 %1708
        %1710 = vrot.lane.b32.xlu0 %v1196, 48
        %v1711 = vpop.permute.xlu0 %1710
        %1712 = vrot.lane.b32.xlu0 %v1203, 48
        %v1713 = vpop.permute.xlu0 %1712
        %1714 = vrot.lane.b32.xlu0 %v1210, 48
        %v1715 = vpop.permute.xlu0 %1714
        %1716 = vrot.lane.b32.xlu0 %v1217, 48
        %v1717 = vpop.permute.xlu0 %1716
        %1725 = vrot.lane.b32.xlu0 %v1319, 52
        %v1726 = vpop.permute.xlu0 %1725
        %1727 = vrot.lane.b32.xlu0 %v1326, 52
        %v1728 = vpop.permute.xlu0 %1727
        %1729 = vrot.lane.b32.xlu0 %v1333, 52
        %v1730 = vpop.permute.xlu0 %1729
        %1731 = vrot.lane.b32.xlu0 %v1340, 52
        %v1732 = vpop.permute.xlu0 %1731
        %1733 = vrot.lane.b32.xlu0 %v1347, 52
        %v1734 = vpop.permute.xlu0 %1733
        %1735 = vrot.lane.b32.xlu0 %v1354, 52
        %v1736 = vpop.permute.xlu0 %1735
        %1737 = vrot.lane.b32.xlu0 %v1361, 52
        %v1738 = vpop.permute.xlu0 %1737
        %1746 = vrot.lane.b32.xlu0 %v1407, 56
        %v1747 = vpop.permute.xlu0 %1746
        %1748 = vrot.lane.b32.xlu0 %v1414, 56
        %v1749 = vpop.permute.xlu0 %1748
        %1750 = vrot.lane.b32.xlu0 %v1421, 56
        %v1751 = vpop.permute.xlu0 %1750
        %1752 = vrot.lane.b32.xlu0 %v1428, 56
        %v1753 = vpop.permute.xlu0 %1752
        %1754 = vrot.lane.b32.xlu0 %v1435, 56
        %v1755 = vpop.permute.xlu0 %1754
        %1756 = vrot.lane.b32.xlu0 %v1442, 56
        %v1757 = vpop.permute.xlu0 %1756
        %1758 = vrot.lane.b32.xlu0 %v1449, 56
        %v1759 = vpop.permute.xlu0 %1758
        %1767 = vrot.lane.b32.xlu0 %v1495, 60
        %v1768 = vpop.permute.xlu0 %1767
        %1769 = vrot.lane.b32.xlu0 %v1502, 60
        %v1770 = vpop.permute.xlu0 %1769
        %1771 = vrot.lane.b32.xlu0 %v1509, 60
        %v1772 = vpop.permute.xlu0 %1771
        %1773 = vrot.lane.b32.xlu0 %v1516, 60
        %v1774 = vpop.permute.xlu0 %1773
        %1775 = vrot.lane.b32.xlu0 %v1523, 60
        %v1776 = vpop.permute.xlu0 %1775
        %1777 = vrot.lane.b32.xlu0 %v1530, 60
        %v1778 = vpop.permute.xlu0 %1777
        %1779 = vrot.lane.b32.xlu0 %v1537, 60
        %v1780 = vpop.permute.xlu0 %1779
        %vm1788 = vcmask 31744
        %v1789 = vsel %vm1788, %v768, %v924
        %v1790 = vsel %vm1788, %v775, %v926
        %v1791 = vsel %vm1788, %v782, %v928
        %v1792 = vsel %vm1788, %v789, %v930
        %v1793 = vsel %vm1788, %v796, %v932
        %v1794 = vsel %vm1788, %v803, %v934
        %v1795 = vsel %vm1788, %v810, %v936
        %vm1796 = vcmask 64512
        %v1797 = vsel %vm1796, %v1789, %v1001
        %v1798 = vsel %vm1796, %v1790, %v1003
        %v1799 = vsel %vm1796, %v1791, %v1005
        %v1800 = vsel %vm1796, %v1792, %v1007
        %v1801 = vsel %vm1796, %v1793, %v1009
        %v1802 = vsel %vm1796, %v1794, %v1011
        %v1803 = vsel %vm1796, %v1795, %v1013
        %vm1804 = vcmask 97280
        %v1805 = vsel %vm1804, %v1797, %v1078
        %v1806 = vsel %vm1804, %v1798, %v1080
        %v1807 = vsel %vm1804, %v1799, %v1082
        %v1808 = vsel %vm1804, %v1800, %v1084
        %v1809 = vsel %vm1804, %v1801, %v1086
        %v1810 = vsel %vm1804, %v1802, %v1088
        %v1811 = vsel %vm1804, %v1803, %v1090
        %vm1812 = vcmask 130048
        %v1813 = vsel %vm1812, %v1805, %v1219
        %v1814 = vsel %vm1812, %v1805, %v1221
        %v1815 = vsel %vm1812, %v1806, %v1223
        %v1816 = vsel %vm1812, %v1807, %v1225
        %v1817 = vsel %vm1812, %v1808, %v1227
        %v1818 = vsel %vm1812, %v1809, %v1229
        %v1819 = vsel %vm1812, %v1810, %v1231
        %v1820 = vsel %vm1812, %v1811, %v1233
        %vm1821 = vcmask 162816
        %v1822 = vsel %vm1821, %v1813, %v1363
        %v1823 = vsel %vm1821, %v1814, %v1365
        %v1824 = vsel %vm1821, %v1815, %v1367
        %v1825 = vsel %vm1821, %v1816, %v1369
        %v1826 = vsel %vm1821, %v1817, %v1371
        %v1827 = vsel %vm1821, %v1818, %v1373
        %v1828 = vsel %vm1821, %v1819, %v1375
        %v1829 = vsel %vm1821, %v1820, %v1377
        %vm1830 = vcmask 195584
        %v1831 = vsel %vm1830, %v1822, %v1451
        %v1832 = vsel %vm1830, %v1823, %v1453
        %v1833 = vsel %vm1830, %v1824, %v1455
        %v1834 = vsel %vm1830, %v1825, %v1457
        %v1835 = vsel %vm1830, %v1826, %v1459
        %v1836 = vsel %vm1830, %v1827, %v1461
        %v1837 = vsel %vm1830, %v1828, %v1463
        %v1838 = vsel %vm1830, %v1829, %v1465
        %vm1839 = vcmask 228352
        %v1840 = vsel %vm1839, %v1831, %v1539
        %v1841 = vsel %vm1839, %v1832, %v1541
        %v1842 = vsel %vm1839, %v1833, %v1543
        %v1843 = vsel %vm1839, %v1834, %v1545
        %v1844 = vsel %vm1839, %v1835, %v1547
        %v1845 = vsel %vm1839, %v1836, %v1549
        %v1846 = vsel %vm1839, %v1837, %v1551
        %v1847 = vsel %vm1839, %v1838, %v1553
        %vm1848 = vcmask 261120
        %v1849 = vsel %vm1848, %v1840, %v1578
        %v1850 = vsel %vm1848, %v1841, %v1580
        %v1851 = vsel %vm1848, %v1842, %v1582
        %v1852 = vsel %vm1848, %v1843, %v1584
        %v1853 = vsel %vm1848, %v1844, %v1586
        %v1854 = vsel %vm1848, %v1845, %v1588
        %v1855 = vsel %vm1848, %v1846, %v1590
        %v1856 = vsel %vm1848, %v1847, %v1592
        %vm1857 = vcmask 293888
        %v1858 = vsel %vm1857, %v1849, %v1617
        %v1859 = vsel %vm1857, %v1850, %v1619
        %v1860 = vsel %vm1857, %v1851, %v1621
        %v1861 = vsel %vm1857, %v1852, %v1623
        %v1862 = vsel %vm1857, %v1853, %v1625
        %v1863 = vsel %vm1857, %v1854, %v1627
        %v1864 = vsel %vm1857, %v1855, %v1629
        %v1865 = vsel %vm1857, %v1856, %v1631
        %vm1866 = vcmask 326656
        %v1867 = vsel %vm1866, %v1858, %v1649
        %v1868 = vsel %vm1866, %v1859, %v1651
        %v1869 = vsel %vm1866, %v1860, %v1653
        %v1870 = vsel %vm1866, %v1861, %v1655
        %v1871 = vsel %vm1866, %v1862, %v1657
        %v1872 = vsel %vm1866, %v1863, %v1659
        %v1873 = vsel %vm1866, %v1864, %v1661
        %v1874 = vsel %vm1866, %v1865, %v1663
        %vm1875 = vcmask 359424
        %v1876 = vsel %vm1875, %v1867, %v1681
        %v1877 = vsel %vm1875, %v1868, %v1683
        %v1878 = vsel %vm1875, %v1869, %v1685
        %v1879 = vsel %vm1875, %v1870, %v1687
        %v1880 = vsel %vm1875, %v1871, %v1689
        %v1881 = vsel %vm1875, %v1872, %v1691
        %v1882 = vsel %vm1875, %v1873, %v1693
        %v1883 = vsel %vm1875, %v1874, %v1695
        %vm1884 = vcmask 392192
        %v1885 = vsel %vm1884, %v1876, %v1705
        %v1886 = vsel %vm1884, %v1877, %v1707
        %v1887 = vsel %vm1884, %v1878, %v1709
        %v1888 = vsel %vm1884, %v1879, %v1711
        %v1889 = vsel %vm1884, %v1880, %v1713
        %v1890 = vsel %vm1884, %v1881, %v1715
        %v1891 = vsel %vm1884, %v1882, %v1717
        %v1892 = vsel %vm1884, %v1883, %v1717
        %vm1893 = vcmask 424960
        %v1894 = vsel %vm1893, %v1885, %v1726
        %v1895 = vsel %vm1893, %v1886, %v1728
        %v1896 = vsel %vm1893, %v1887, %v1730
        %v1897 = vsel %vm1893, %v1888, %v1732
        %v1898 = vsel %vm1893, %v1889, %v1734
        %v1899 = vsel %vm1893, %v1890, %v1736
        %v1900 = vsel %vm1893, %v1891, %v1738
        %v1901 = vsel %vm1893, %v1892, %v1738
        %vm1902 = vcmask 457728
        %v1903 = vsel %vm1902, %v1894, %v1747
        %v1904 = vsel %vm1902, %v1895, %v1749
        %v1905 = vsel %vm1902, %v1896, %v1751
        %v1906 = vsel %vm1902, %v1897, %v1753
        %v1907 = vsel %vm1902, %v1898, %v1755
        %v1908 = vsel %vm1902, %v1899, %v1757
        %v1909 = vsel %vm1902, %v1900, %v1759
        %v1910 = vsel %vm1902, %v1901, %v1759
        %vm1911 = vcmask 490496
        %v1912 = vsel %vm1911, %v1903, %v1768
        %v1913 = vsel %vm1911, %v1904, %v1770
        %v1914 = vsel %vm1911, %v1905, %v1772
        %v1915 = vsel %vm1911, %v1906, %v1774
        %v1916 = vsel %vm1911, %v1907, %v1776
        %v1917 = vsel %vm1911, %v1908, %v1778
        %v1918 = vsel %vm1911, %v1909, %v1780
        %v1919 = vsel %vm1911, %v1910, %v1780
        %vm1920 = vcmask 523264
        %v1922 = vsel %vm1920, %v1912, 0
        %v1925 = vsel %vm1920, %v1913, 0
        %v1928 = vsel %vm1920, %v1914, 0
        %v1931 = vsel %vm1920, %v1915, 0
        %v1934 = vsel %vm1920, %v1916, 0
        %v1937 = vsel %vm1920, %v1917, 0
        %v1940 = vsel %vm1920, %v1918, 0
        %v1943 = vsel %vm1920, %v1919, 0
        %1945 = vmatpush.msra.mxu0 0.0
        %1946 = vmatpush.msra.mxu0 0.0
        %1947 = vmatpush.msra.mxu0 0.0
        %1948 = vmatpush.msra.mxu0 0.0
        %1949 = vmatpush.msra.mxu0 0.0
        %1950 = vmatpush.msra.mxu0 0.0
        %1951 = vmatpush.msra.mxu0 0.0
        %1952 = vmatpush.msra.mxu0 0.0
        %1953 = vmatpush.msra.mxu0 %v265
        %1954 = vmatpush.msra.mxu0 %v264
        %1955 = vmatpush.msra.mxu0 %v263
        %1956 = vmatpush.msra.mxu0 %v262
        %1957 = vmatpush.msra.mxu0 %v261
        %1958 = vmatpush.msra.mxu0 %v260
        %1959 = vmatpush.msra.mxu0 %v259
        %1960 = vmatpush.msra.mxu0 %v258
        %1961 = vmatmul.f32.gmra.mxu0 %v1922
        %v1962 = vpop.f32.mrf.mxu0
        %v1963 = vadd.f32 0.0, %v1962
        %1964 = vmatmul.f32.gmra.mxu0 %v1925
        %v1965 = vpop.f32.mrf.mxu0
        %v1966 = vadd.f32 0.0, %v1965
        %1967 = vmatmul.f32.gmra.mxu0 %v1928
        %v1968 = vpop.f32.mrf.mxu0
        %v1969 = vadd.f32 0.0, %v1968
        %1970 = vmatmul.f32.gmra.mxu0 %v1931
        %v1971 = vpop.f32.mrf.mxu0
        %v1972 = vadd.f32 0.0, %v1971
        %1973 = vmatmul.f32.gmra.mxu0 %v1934
        %v1974 = vpop.f32.mrf.mxu0
        %v1975 = vadd.f32 0.0, %v1974
        %1976 = vmatmul.f32.gmra.mxu0 %v1937
        %v1977 = vpop.f32.mrf.mxu0
        %v1978 = vadd.f32 0.0, %v1977
        %1979 = vmatmul.f32.gmra.mxu0 %v1940
        %v1980 = vpop.f32.mrf.mxu0
        %v1981 = vadd.f32 0.0, %v1980
        %1982 = vmatmul.f32.gmra.mxu0 %v1943
        %v1983 = vpop.f32.mrf.mxu0
        %v1984 = vadd.f32 0.0, %v1983
        %1985 = vdwg.mxu0
        %v1986 = vld [vmem:[%s209] sm:$0x1]
        %v1988 = vperm.slane %v1986, 0
        %v1990 = vadd.f32 %v1963, %v1988
        %v1991 = vadd.f32 %v1966, %v1988
        %v1992 = vadd.f32 %v1969, %v1988
        %v1993 = vadd.f32 %v1972, %v1988
        %v1994 = vadd.f32 %v1975, %v1988
        %v1995 = vadd.f32 %v1978, %v1988
        %v1996 = vadd.f32 %v1981, %v1988
        %v1997 = vadd.f32 %v1984, %v1988
        %v1998 = vmax.f32 %v1990, 0.0
        %v1999 = vmax.f32 %v1991, 0.0
        %v2000 = vmax.f32 %v1992, 0.0
        %v2001 = vmax.f32 %v1993, 0.0
        %v2002 = vmax.f32 %v1994, 0.0
        %v2003 = vmax.f32 %v1995, 0.0
        %v2004 = vmax.f32 %v1996, 0.0
        %v2005 = vmax.f32 %v1997, 0.0
        %v2015 = vrot.slane 0.0, 7
        %v2016 = vrot.slane %v1998, 7
        %v2017 = vrot.slane %v1999, 7
        %v2018 = vrot.slane %v2000, 7
        %v2019 = vrot.slane %v2001, 7
        %v2020 = vrot.slane %v2002, 7
        %v2021 = vrot.slane %v2003, 7
        %v2022 = vrot.slane %v2004, 7
        %v2023 = vrot.slane %v2005, 7
        %v2033 = vsel %vm426, 0.0, %v2015
        %v2034 = vsel %vm426, 0.0, %v2016
        %v2035 = vsel %vm426, 0.0, %v2017
        %v2036 = vsel %vm426, 0.0, %v2018
        %v2037 = vsel %vm426, 0.0, %v2019
        %v2038 = vsel %vm426, 0.0, %v2020
        %v2039 = vsel %vm426, 0.0, %v2021
        %v2040 = vsel %vm426, 0.0, %v2022
        %v2041 = vsel %vm426, 0.0, %v2023
        %v2042 = vsel %vm426, %v2015, 0.0
        %v2043 = vsel %vm426, %v2016, 0.0
        %v2044 = vsel %vm426, %v2017, 0.0
        %v2045 = vsel %vm426, %v2018, 0.0
        %v2046 = vsel %vm426, %v2019, 0.0
        %v2047 = vsel %vm426, %v2020, 0.0
        %v2048 = vsel %vm426, %v2021, 0.0
        %v2049 = vsel %vm426, %v2022, 0.0
        %v2050 = vsel %vm426, %v2023, 0.0
        %vm2067 = vcmask 1046528
        %v2068 = vrot.slane %v2033, 1
        %v2069 = vrot.slane %v2042, 1
        %v2070 = vsel %vm2067, %v2068, %v2069
        %v2071 = vrot.slane %v2034, 1
        %v2072 = vrot.slane %v2043, 1
        %v2073 = vsel %vm2067, %v2071, %v2072
        %v2074 = vrot.slane %v2035, 1
        %v2075 = vrot.slane %v2044, 1
        %v2076 = vsel %vm2067, %v2074, %v2075
        %v2077 = vrot.slane %v2036, 1
        %v2078 = vrot.slane %v2045, 1
        %v2079 = vsel %vm2067, %v2077, %v2078
        %v2080 = vrot.slane %v2037, 1
        %v2081 = vrot.slane %v2046, 1
        %v2082 = vsel %vm2067, %v2080, %v2081
        %v2083 = vrot.slane %v2038, 1
        %v2084 = vrot.slane %v2047, 1
        %v2085 = vsel %vm2067, %v2083, %v2084
        %v2086 = vrot.slane %v2039, 1
        %v2087 = vrot.slane %v2048, 1
        %v2088 = vsel %vm2067, %v2086, %v2087
        %v2089 = vrot.slane %v2040, 1
        %v2090 = vrot.slane %v2049, 1
        %v2091 = vsel %vm2067, %v2089, %v2090
        %2092 = vrot.lane.b32.xlu0 %v2070, 8
        %v2093 = vpop.permute.xlu0 %2092
        %2094 = vrot.lane.b32.xlu0 %v2073, 8
        %v2095 = vpop.permute.xlu0 %2094
        %2096 = vrot.lane.b32.xlu0 %v2076, 8
        %v2097 = vpop.permute.xlu0 %2096
        %2098 = vrot.lane.b32.xlu0 %v2079, 8
        %v2099 = vpop.permute.xlu0 %2098
        %2100 = vrot.lane.b32.xlu0 %v2082, 8
        %v2101 = vpop.permute.xlu0 %2100
        %2102 = vrot.lane.b32.xlu0 %v2085, 8
        %v2103 = vpop.permute.xlu0 %2102
        %2104 = vrot.lane.b32.xlu0 %v2088, 8
        %v2105 = vpop.permute.xlu0 %2104
        %2106 = vrot.lane.b32.xlu0 %v2091, 8
        %v2107 = vpop.permute.xlu0 %2106
        %2117 = vrot.lane.b32.xlu0 %v2034, 16
        %v2118 = vpop.permute.xlu0 %2117
        %2119 = vrot.lane.b32.xlu0 %v2035, 16
        %v2120 = vpop.permute.xlu0 %2119
        %2121 = vrot.lane.b32.xlu0 %v2036, 16
        %v2122 = vpop.permute.xlu0 %2121
        %2123 = vrot.lane.b32.xlu0 %v2037, 16
        %v2124 = vpop.permute.xlu0 %2123
        %2125 = vrot.lane.b32.xlu0 %v2038, 16
        %v2126 = vpop.permute.xlu0 %2125
        %2127 = vrot.lane.b32.xlu0 %v2039, 16
        %v2128 = vpop.permute.xlu0 %2127
        %2129 = vrot.lane.b32.xlu0 %v2040, 16
        %v2130 = vpop.permute.xlu0 %2129
        %2131 = vrot.lane.b32.xlu0 %v2041, 16
        %v2132 = vpop.permute.xlu0 %2131
        %v2142 = vrot.slane %v2041, 1
        %v2143 = vrot.slane %v2050, 1
        %v2144 = vsel %vm2067, %v2142, %v2143
        %2145 = vrot.lane.b32.xlu0 %v2073, 24
        %v2146 = vpop.permute.xlu0 %2145
        %2147 = vrot.lane.b32.xlu0 %v2076, 24
        %v2148 = vpop.permute.xlu0 %2147
        %2149 = vrot.lane.b32.xlu0 %v2079, 24
        %v2150 = vpop.permute.xlu0 %2149
        %2151 = vrot.lane.b32.xlu0 %v2082, 24
        %v2152 = vpop.permute.xlu0 %2151
        %2153 = vrot.lane.b32.xlu0 %v2085, 24
        %v2154 = vpop.permute.xlu0 %2153
        %2155 = vrot.lane.b32.xlu0 %v2088, 24
        %v2156 = vpop.permute.xlu0 %2155
        %2157 = vrot.lane.b32.xlu0 %v2091, 24
        %v2158 = vpop.permute.xlu0 %2157
        %2159 = vrot.lane.b32.xlu0 %v2144, 24
        %v2160 = vpop.permute.xlu0 %2159
        %v2169 = vsel %vm1796, %v2033, %v2093
        %v2170 = vsel %vm1796, %v2034, %v2095
        %v2171 = vsel %vm1796, %v2035, %v2097
        %v2172 = vsel %vm1796, %v2036, %v2099
        %v2173 = vsel %vm1796, %v2037, %v2101
        %v2174 = vsel %vm1796, %v2038, %v2103
        %v2175 = vsel %vm1796, %v2039, %v2105
        %v2176 = vsel %vm1796, %v2040, %v2107
        %v2177 = vsel %vm1812, %v2169, %v2118
        %v2178 = vsel %vm1812, %v2170, %v2120
        %v2179 = vsel %vm1812, %v2171, %v2122
        %v2180 = vsel %vm1812, %v2172, %v2124
        %v2181 = vsel %vm1812, %v2173, %v2126
        %v2182 = vsel %vm1812, %v2174, %v2128
        %v2183 = vsel %vm1812, %v2175, %v2130
        %v2184 = vsel %vm1812, %v2176, %v2132
        %v2185 = vsel %vm1830, %v2177, %v2146
        %v2186 = vsel %vm1830, %v2178, %v2148
        %v2187 = vsel %vm1830, %v2179, %v2150
        %v2188 = vsel %vm1830, %v2180, %v2152
        %v2189 = vsel %vm1830, %v2181, %v2154
        %v2190 = vsel %vm1830, %v2182, %v2156
        %v2191 = vsel %vm1830, %v2183, %v2158
        %v2192 = vsel %vm1830, %v2184, %v2160
        %v2194 = vsel %vm1848, %v2185, 0
        %v2197 = vsel %vm1848, %v2186, 0
        %v2200 = vsel %vm1848, %v2187, 0
        %v2203 = vsel %vm1848, %v2188, 0
        %v2206 = vsel %vm1848, %v2189, 0
        %v2209 = vsel %vm1848, %v2190, 0
        %v2212 = vsel %vm1848, %v2191, 0
        %v2215 = vsel %vm1848, %v2192, 0
        %2217 = vmatpush.msra.mxu0 0.0
        %2218 = vmatpush.msra.mxu0 0.0
        %2219 = vmatpush.msra.mxu0 0.0
        %2220 = vmatpush.msra.mxu0 0.0
        %2221 = vmatpush.msra.mxu0 0.0
        %2222 = vmatpush.msra.mxu0 0.0
        %2223 = vmatpush.msra.mxu0 0.0
        %2224 = vmatpush.msra.mxu0 0.0
        %2225 = vmatpush.msra.mxu0 0.0
        %2226 = vmatpush.msra.mxu0 0.0
        %2227 = vmatpush.msra.mxu0 0.0
        %2228 = vmatpush.msra.mxu0 0.0
        %2229 = vmatpush.msra.mxu0 %v245
        %2230 = vmatpush.msra.mxu0 %v244
        %2231 = vmatpush.msra.mxu0 %v243
        %2232 = vmatpush.msra.mxu0 %v242
        %2233 = vmatmul.f32.gmra.mxu0 %v2194
        %v2234 = vpop.f32.mrf.mxu0
        %v2235 = vadd.f32 0.0, %v2234
        %2236 = vmatmul.f32.gmra.mxu0 %v2197
        %v2237 = vpop.f32.mrf.mxu0
        %v2238 = vadd.f32 0.0, %v2237
        %2239 = vmatmul.f32.gmra.mxu0 %v2200
        %v2240 = vpop.f32.mrf.mxu0
        %v2241 = vadd.f32 0.0, %v2240
        %2242 = vmatmul.f32.gmra.mxu0 %v2203
        %v2243 = vpop.f32.mrf.mxu0
        %v2244 = vadd.f32 0.0, %v2243
        %2245 = vmatmul.f32.gmra.mxu0 %v2206
        %v2246 = vpop.f32.mrf.mxu0
        %v2247 = vadd.f32 0.0, %v2246
        %2248 = vmatmul.f32.gmra.mxu0 %v2209
        %v2249 = vpop.f32.mrf.mxu0
        %v2250 = vadd.f32 0.0, %v2249
        %2251 = vmatmul.f32.gmra.mxu0 %v2212
        %v2252 = vpop.f32.mrf.mxu0
        %v2253 = vadd.f32 0.0, %v2252
        %2254 = vmatmul.f32.gmra.mxu0 %v2215
        %v2255 = vpop.f32.mrf.mxu0
        %v2256 = vadd.f32 0.0, %v2255
        %2257 = vdwg.mxu0
        %v2258 = vsel %vm1788, %v2235, 0.0
        %v2259 = vsel %vm1788, %v2238, 0.0
        %v2260 = vadd.f32 %v2258, %v2259
        %v2261 = vsel %vm1788, %v2241, 0.0
        %v2262 = vadd.f32 %v2260, %v2261
        %v2263 = vsel %vm1788, %v2244, 0.0
        %v2264 = vadd.f32 %v2262, %v2263
        %v2265 = vsel %vm1788, %v2247, 0.0
        %v2266 = vadd.f32 %v2264, %v2265
        %v2267 = vsel %vm1788, %v2250, 0.0
        %v2268 = vadd.f32 %v2266, %v2267
        %v2269 = vsel %vm1788, %v2253, 0.0
        %v2270 = vadd.f32 %v2268, %v2269
        %v2271 = vsel %vm1788, %v2256, 0.0
        %v2272 = vadd.f32 %v2270, %v2271
        %v2273 = vrot.slane %v2272, 4
        %v2274 = vadd.f32 %v2272, %v2273
        %v2275 = vrot.slane %v2274, 2
        %v2276 = vadd.f32 %v2274, %v2275
        %v2277 = vrot.slane %v2276, 1
        %v2278 = vadd.f32 %v2276, %v2277
        %v2279 = vadd.f32 %v2278, 0.0
        %v2280 = vmul.f32 %v2235, %v2235
        %v2281 = vmul.f32 %v2238, %v2238
        %v2282 = vmul.f32 %v2241, %v2241
        %v2283 = vmul.f32 %v2244, %v2244
        %v2284 = vmul.f32 %v2247, %v2247
        %v2285 = vmul.f32 %v2250, %v2250
        %v2286 = vmul.f32 %v2253, %v2253
        %v2287 = vmul.f32 %v2256, %v2256
        %v2288 = vsel %vm1788, %v2280, 0.0
        %v2289 = vsel %vm1788, %v2281, 0.0
        %v2290 = vadd.f32 %v2288, %v2289
        %v2291 = vsel %vm1788, %v2282, 0.0
        %v2292 = vadd.f32 %v2290, %v2291
        %v2293 = vsel %vm1788, %v2283, 0.0
        %v2294 = vadd.f32 %v2292, %v2293
        %v2295 = vsel %vm1788, %v2284, 0.0
        %v2296 = vadd.f32 %v2294, %v2295
        %v2297 = vsel %vm1788, %v2285, 0.0
        %v2298 = vadd.f32 %v2296, %v2297
        %v2299 = vsel %vm1788, %v2286, 0.0
        %v2300 = vadd.f32 %v2298, %v2299
        %v2301 = vsel %vm1788, %v2287, 0.0
        %v2302 = vadd.f32 %v2300, %v2301
        %v2303 = vrot.slane %v2302, 4
        %v2304 = vadd.f32 %v2302, %v2303
        %v2305 = vrot.slane %v2304, 2
        %v2306 = vadd.f32 %v2304, %v2305
        %v2307 = vrot.slane %v2306, 1
        %v2308 = vadd.f32 %v2306, %v2307
        %v2309 = vadd.f32 %v2308, 0.0
        %2310 = vrot.lane.b32.xlu0 %v2069, 8
        %v2311 = vpop.permute.xlu0 %2310
        %2312 = vrot.lane.b32.xlu0 %v2072, 8
        %v2313 = vpop.permute.xlu0 %2312
        %2314 = vrot.lane.b32.xlu0 %v2075, 8
        %v2315 = vpop.permute.xlu0 %2314
        %2316 = vrot.lane.b32.xlu0 %v2078, 8
        %v2317 = vpop.permute.xlu0 %2316
        %2318 = vrot.lane.b32.xlu0 %v2081, 8
        %v2319 = vpop.permute.xlu0 %2318
        %2320 = vrot.lane.b32.xlu0 %v2084, 8
        %v2321 = vpop.permute.xlu0 %2320
        %2322 = vrot.lane.b32.xlu0 %v2087, 8
        %v2323 = vpop.permute.xlu0 %2322
        %2324 = vrot.lane.b32.xlu0 %v2090, 8
        %v2325 = vpop.permute.xlu0 %2324
        %2334 = vrot.lane.b32.xlu0 %v2043, 16
        %v2335 = vpop.permute.xlu0 %2334
        %2336 = vrot.lane.b32.xlu0 %v2044, 16
        %v2337 = vpop.permute.xlu0 %2336
        %2338 = vrot.lane.b32.xlu0 %v2045, 16
        %v2339 = vpop.permute.xlu0 %2338
        %2340 = vrot.lane.b32.xlu0 %v2046, 16
        %v2341 = vpop.permute.xlu0 %2340
        %2342 = vrot.lane.b32.xlu0 %v2047, 16
        %v2343 = vpop.permute.xlu0 %2342
        %2344 = vrot.lane.b32.xlu0 %v2048, 16
        %v2345 = vpop.permute.xlu0 %2344
        %2346 = vrot.lane.b32.xlu0 %v2049, 16
        %v2347 = vpop.permute.xlu0 %2346
        %2348 = vrot.lane.b32.xlu0 %v2050, 16
        %v2349 = vpop.permute.xlu0 %2348
        %2358 = vrot.lane.b32.xlu0 %v2072, 24
        %v2359 = vpop.permute.xlu0 %2358
        %2360 = vrot.lane.b32.xlu0 %v2075, 24
        %v2361 = vpop.permute.xlu0 %2360
        %2362 = vrot.lane.b32.xlu0 %v2078, 24
        %v2363 = vpop.permute.xlu0 %2362
        %2364 = vrot.lane.b32.xlu0 %v2081, 24
        %v2365 = vpop.permute.xlu0 %2364
        %2366 = vrot.lane.b32.xlu0 %v2084, 24
        %v2367 = vpop.permute.xlu0 %2366
        %2368 = vrot.lane.b32.xlu0 %v2087, 24
        %v2369 = vpop.permute.xlu0 %2368
        %2370 = vrot.lane.b32.xlu0 %v2090, 24
        %v2371 = vpop.permute.xlu0 %2370
        %2372 = vrot.lane.b32.xlu0 %v2143, 24
        %v2373 = vpop.permute.xlu0 %2372
        %v2382 = vsel %vm1796, %v2042, %v2311
        %v2383 = vsel %vm1796, %v2043, %v2313
        %v2384 = vsel %vm1796, %v2044, %v2315
        %v2385 = vsel %vm1796, %v2045, %v2317
        %v2386 = vsel %vm1796, %v2046, %v2319
        %v2387 = vsel %vm1796, %v2047, %v2321
        %v2388 = vsel %vm1796, %v2048, %v2323
        %v2389 = vsel %vm1796, %v2049, %v2325
        %v2390 = vsel %vm1812, %v2382, %v2335
        %v2391 = vsel %vm1812, %v2383, %v2337
        %v2392 = vsel %vm1812, %v2384, %v2339
        %v2393 = vsel %vm1812, %v2385, %v2341
        %v2394 = vsel %vm1812, %v2386, %v2343
        %v2395 = vsel %vm1812, %v2387, %v2345
        %v2396 = vsel %vm1812, %v2388, %v2347
        %v2397 = vsel %vm1812, %v2389, %v2349
        %v2398 = vsel %vm1830, %v2390, %v2359
        %v2399 = vsel %vm1830, %v2391, %v2361
        %v2400 = vsel %vm1830, %v2392, %v2363
        %v2401 = vsel %vm1830, %v2393, %v2365
        %v2402 = vsel %vm1830, %v2394, %v2367
        %v2403 = vsel %vm1830, %v2395, %v2369
        %v2404 = vsel %vm1830, %v2396, %v2371
        %v2405 = vsel %vm1830, %v2397, %v2373
        %v2414 = vrot.slane %v2185, 1
        %v2415 = vrot.slane %v2398, 1
        %v2416 = vsel %vm2067, %v2414, %v2415
        %v2417 = vrot.slane %v2186, 1
        %v2418 = vrot.slane %v2399, 1
        %v2419 = vsel %vm2067, %v2417, %v2418
        %v2420 = vrot.slane %v2187, 1
        %v2421 = vrot.slane %v2400, 1
        %v2422 = vsel %vm2067, %v2420, %v2421
        %v2423 = vrot.slane %v2188, 1
        %v2424 = vrot.slane %v2401, 1
        %v2425 = vsel %vm2067, %v2423, %v2424
        %v2426 = vrot.slane %v2189, 1
        %v2427 = vrot.slane %v2402, 1
        %v2428 = vsel %vm2067, %v2426, %v2427
        %v2429 = vrot.slane %v2190, 1
        %v2430 = vrot.slane %v2403, 1
        %v2431 = vsel %vm2067, %v2429, %v2430
        %v2432 = vrot.slane %v2191, 1
        %v2433 = vrot.slane %v2404, 1
        %v2434 = vsel %vm2067, %v2432, %v2433
        %v2435 = vrot.slane %v2192, 1
        %v2436 = vrot.slane %v2405, 1
        %v2437 = vsel %vm2067, %v2435, %v2436
        %v2438 = vsel %vm1848, %v2416, 0
        %v2440 = vsel %vm1848, %v2419, 0
        %v2442 = vsel %vm1848, %v2422, 0
        %v2444 = vsel %vm1848, %v2425, 0
        %v2446 = vsel %vm1848, %v2428, 0
        %v2448 = vsel %vm1848, %v2431, 0
        %v2450 = vsel %vm1848, %v2434, 0
        %v2452 = vsel %vm1848, %v2437, 0
        %2454 = vmatpush.msra.mxu0 0.0
        %2455 = vmatpush.msra.mxu0 0.0
        %2456 = vmatpush.msra.mxu0 0.0
        %2457 = vmatpush.msra.mxu0 0.0
        %2458 = vmatpush.msra.mxu0 0.0
        %2459 = vmatpush.msra.mxu0 0.0
        %2460 = vmatpush.msra.mxu0 0.0
        %2461 = vmatpush.msra.mxu0 0.0
        %2462 = vmatpush.msra.mxu0 0.0
        %2463 = vmatpush.msra.mxu0 0.0
        %2464 = vmatpush.msra.mxu0 0.0
        %2465 = vmatpush.msra.mxu0 0.0
        %2466 = vmatpush.msra.mxu0 %v249
        %2467 = vmatpush.msra.mxu0 %v248
        %2468 = vmatpush.msra.mxu0 %v247
        %2469 = vmatpush.msra.mxu0 %v246
        %2470 = vmatmul.f32.gmra.mxu0 %v2438
        %v2471 = vpop.f32.mrf.mxu0
        %v2472 = vadd.f32 0.0, %v2471
        %2473 = vmatmul.f32.gmra.mxu0 %v2440
        %v2474 = vpop.f32.mrf.mxu0
        %v2475 = vadd.f32 0.0, %v2474
        %2476 = vmatmul.f32.gmra.mxu0 %v2442
        %v2477 = vpop.f32.mrf.mxu0
        %v2478 = vadd.f32 0.0, %v2477
        %2479 = vmatmul.f32.gmra.mxu0 %v2444
        %v2480 = vpop.f32.mrf.mxu0
        %v2481 = vadd.f32 0.0, %v2480
        %2482 = vmatmul.f32.gmra.mxu0 %v2446
        %v2483 = vpop.f32.mrf.mxu0
        %v2484 = vadd.f32 0.0, %v2483
        %2485 = vmatmul.f32.gmra.mxu0 %v2448
        %v2486 = vpop.f32.mrf.mxu0
        %v2487 = vadd.f32 0.0, %v2486
        %2488 = vmatmul.f32.gmra.mxu0 %v2450
        %v2489 = vpop.f32.mrf.mxu0
        %v2490 = vadd.f32 0.0, %v2489
        %2491 = vmatmul.f32.gmra.mxu0 %v2452
        %v2492 = vpop.f32.mrf.mxu0
        %v2493 = vadd.f32 0.0, %v2492
        %2494 = vdwg.mxu0
        %v2495 = vsel %vm1788, %v2472, 0.0
        %v2496 = vsel %vm1788, %v2475, 0.0
        %v2497 = vadd.f32 %v2495, %v2496
        %v2498 = vsel %vm1788, %v2478, 0.0
        %v2499 = vadd.f32 %v2497, %v2498
        %v2500 = vsel %vm1788, %v2481, 0.0
        %v2501 = vadd.f32 %v2499, %v2500
        %v2502 = vsel %vm1788, %v2484, 0.0
        %v2503 = vadd.f32 %v2501, %v2502
        %v2504 = vsel %vm1788, %v2487, 0.0
        %v2505 = vadd.f32 %v2503, %v2504
        %v2506 = vsel %vm1788, %v2490, 0.0
        %v2507 = vadd.f32 %v2505, %v2506
        %v2508 = vsel %vm1788, %v2493, 0.0
        %v2509 = vadd.f32 %v2507, %v2508
        %v2510 = vrot.slane %v2509, 4
        %v2511 = vadd.f32 %v2509, %v2510
        %v2512 = vrot.slane %v2511, 2
        %v2513 = vadd.f32 %v2511, %v2512
        %v2514 = vrot.slane %v2513, 1
        %v2515 = vadd.f32 %v2513, %v2514
        %v2516 = vadd.f32 %v2279, %v2515
        %v2517 = vmul.f32 %v2472, %v2472
        %v2518 = vmul.f32 %v2475, %v2475
        %v2519 = vmul.f32 %v2478, %v2478
        %v2520 = vmul.f32 %v2481, %v2481
        %v2521 = vmul.f32 %v2484, %v2484
        %v2522 = vmul.f32 %v2487, %v2487
        %v2523 = vmul.f32 %v2490, %v2490
        %v2524 = vmul.f32 %v2493, %v2493
        %v2525 = vsel %vm1788, %v2517, 0.0
        %v2526 = vsel %vm1788, %v2518, 0.0
        %v2527 = vadd.f32 %v2525, %v2526
        %v2528 = vsel %vm1788, %v2519, 0.0
        %v2529 = vadd.f32 %v2527, %v2528
        %v2530 = vsel %vm1788, %v2520, 0.0
        %v2531 = vadd.f32 %v2529, %v2530
        %v2532 = vsel %vm1788, %v2521, 0.0
        %v2533 = vadd.f32 %v2531, %v2532
        %v2534 = vsel %vm1788, %v2522, 0.0
        %v2535 = vadd.f32 %v2533, %v2534
        %v2536 = vsel %vm1788, %v2523, 0.0
        %v2537 = vadd.f32 %v2535, %v2536
        %v2538 = vsel %vm1788, %v2524, 0.0
        %v2539 = vadd.f32 %v2537, %v2538
        %v2540 = vrot.slane %v2539, 4
        %v2541 = vadd.f32 %v2539, %v2540
        %v2542 = vrot.slane %v2541, 2
        %v2543 = vadd.f32 %v2541, %v2542
        %v2544 = vrot.slane %v2543, 1
        %v2545 = vadd.f32 %v2543, %v2544
        %v2546 = vadd.f32 %v2309, %v2545
        %2547 = vrot.lane.b32.xlu0 %v2144, 8
        %v2548 = vpop.permute.xlu0 %2547
        %2550 = vrot.lane.b32.xlu0 %v2033, 16
        %v2551 = vpop.permute.xlu0 %2550
        %2553 = vrot.lane.b32.xlu0 %v2070, 24
        %v2554 = vpop.permute.xlu0 %2553
        %v2556 = vsel %vm1796, %v2041, %v2548
        %v2557 = vsel %vm1812, %v2556, %v2551
        %v2558 = vsel %vm1830, %v2557, %v2554
        %v2560 = vsel %vm1848, %v2558, 0
        %2562 = vmatpush.msra.mxu0 0.0
        %2563 = vmatpush.msra.mxu0 0.0
        %2564 = vmatpush.msra.mxu0 0.0
        %2565 = vmatpush.msra.mxu0 0.0
        %2566 = vmatpush.msra.mxu0 0.0
        %2567 = vmatpush.msra.mxu0 0.0
        %2568 = vmatpush.msra.mxu0 0.0
        %2569 = vmatpush.msra.mxu0 0.0
        %2570 = vmatpush.msra.mxu0 0.0
        %2571 = vmatpush.msra.mxu0 0.0
        %2572 = vmatpush.msra.mxu0 0.0
        %2573 = vmatpush.msra.mxu0 0.0
        %2574 = vmatpush.msra.mxu0 %v253
        %2575 = vmatpush.msra.mxu0 %v252
        %2576 = vmatpush.msra.mxu0 %v251
        %2577 = vmatpush.msra.mxu0 %v250
        %2578 = vmatmul.f32.gmra.mxu0 %v2197
        %v2579 = vpop.f32.mrf.mxu0
        %v2580 = vadd.f32 0.0, %v2579
        %2581 = vmatmul.f32.gmra.mxu0 %v2200
        %v2582 = vpop.f32.mrf.mxu0
        %v2583 = vadd.f32 0.0, %v2582
        %2584 = vmatmul.f32.gmra.mxu0 %v2203
        %v2585 = vpop.f32.mrf.mxu0
        %v2586 = vadd.f32 0.0, %v2585
        %2587 = vmatmul.f32.gmra.mxu0 %v2206
        %v2588 = vpop.f32.mrf.mxu0
        %v2589 = vadd.f32 0.0, %v2588
        %2590 = vmatmul.f32.gmra.mxu0 %v2209
        %v2591 = vpop.f32.mrf.mxu0
        %v2592 = vadd.f32 0.0, %v2591
        %2593 = vmatmul.f32.gmra.mxu0 %v2212
        %v2594 = vpop.f32.mrf.mxu0
        %v2595 = vadd.f32 0.0, %v2594
        %2596 = vmatmul.f32.gmra.mxu0 %v2215
        %v2597 = vpop.f32.mrf.mxu0
        %v2598 = vadd.f32 0.0, %v2597
        %2599 = vmatmul.f32.gmra.mxu0 %v2560
        %v2600 = vpop.f32.mrf.mxu0
        %v2601 = vadd.f32 0.0, %v2600
        %2602 = vdwg.mxu0
        %v2603 = vsel %vm1788, %v2580, 0.0
        %v2604 = vsel %vm1788, %v2583, 0.0
        %v2605 = vadd.f32 %v2603, %v2604
        %v2606 = vsel %vm1788, %v2586, 0.0
        %v2607 = vadd.f32 %v2605, %v2606
        %v2608 = vsel %vm1788, %v2589, 0.0
        %v2609 = vadd.f32 %v2607, %v2608
        %v2610 = vsel %vm1788, %v2592, 0.0
        %v2611 = vadd.f32 %v2609, %v2610
        %v2612 = vsel %vm1788, %v2595, 0.0
        %v2613 = vadd.f32 %v2611, %v2612
        %v2614 = vsel %vm1788, %v2598, 0.0
        %v2615 = vadd.f32 %v2613, %v2614
        %v2616 = vsel %vm1788, %v2601, 0.0
        %v2617 = vadd.f32 %v2615, %v2616
        %v2618 = vrot.slane %v2617, 4
        %v2619 = vadd.f32 %v2617, %v2618
        %v2620 = vrot.slane %v2619, 2
        %v2621 = vadd.f32 %v2619, %v2620
        %v2622 = vrot.slane %v2621, 1
        %v2623 = vadd.f32 %v2621, %v2622
        %v2624 = vadd.f32 %v2516, %v2623
        %v2625 = vmul.f32 %v2580, %v2580
        %v2626 = vmul.f32 %v2583, %v2583
        %v2627 = vmul.f32 %v2586, %v2586
        %v2628 = vmul.f32 %v2589, %v2589
        %v2629 = vmul.f32 %v2592, %v2592
        %v2630 = vmul.f32 %v2595, %v2595
        %v2631 = vmul.f32 %v2598, %v2598
        %v2632 = vmul.f32 %v2601, %v2601
        %v2633 = vsel %vm1788, %v2625, 0.0
        %v2634 = vsel %vm1788, %v2626, 0.0
        %v2635 = vadd.f32 %v2633, %v2634
        %v2636 = vsel %vm1788, %v2627, 0.0
        %v2637 = vadd.f32 %v2635, %v2636
        %v2638 = vsel %vm1788, %v2628, 0.0
        %v2639 = vadd.f32 %v2637, %v2638
        %v2640 = vsel %vm1788, %v2629, 0.0
        %v2641 = vadd.f32 %v2639, %v2640
        %v2642 = vsel %vm1788, %v2630, 0.0
        %v2643 = vadd.f32 %v2641, %v2642
        %v2644 = vsel %vm1788, %v2631, 0.0
        %v2645 = vadd.f32 %v2643, %v2644
        %v2646 = vsel %vm1788, %v2632, 0.0
        %v2647 = vadd.f32 %v2645, %v2646
        %v2648 = vrot.slane %v2647, 4
        %v2649 = vadd.f32 %v2647, %v2648
        %v2650 = vrot.slane %v2649, 2
        %v2651 = vadd.f32 %v2649, %v2650
        %v2652 = vrot.slane %v2651, 1
        %v2653 = vadd.f32 %v2651, %v2652
        %v2654 = vadd.f32 %v2546, %v2653
        %2655 = vrot.lane.b32.xlu0 %v2143, 8
        %v2656 = vpop.permute.xlu0 %2655
        %2658 = vrot.lane.b32.xlu0 %v2042, 16
        %v2659 = vpop.permute.xlu0 %2658
        %2661 = vrot.lane.b32.xlu0 %v2069, 24
        %v2662 = vpop.permute.xlu0 %2661
        %v2664 = vsel %vm1796, %v2050, %v2656
        %v2665 = vsel %vm1812, %v2664, %v2659
        %v2666 = vsel %vm1830, %v2665, %v2662
        %v2668 = vrot.slane %v2558, 1
        %v2669 = vrot.slane %v2666, 1
        %v2670 = vsel %vm2067, %v2668, %v2669
        %v2671 = vsel %vm1848, %v2670, 0
        %2673 = vmatpush.msra.mxu0 0.0
        %2674 = vmatpush.msra.mxu0 0.0
        %2675 = vmatpush.msra.mxu0 0.0
        %2676 = vmatpush.msra.mxu0 0.0
        %2677 = vmatpush.msra.mxu0 0.0
        %2678 = vmatpush.msra.mxu0 0.0
        %2679 = vmatpush.msra.mxu0 0.0
        %2680 = vmatpush.msra.mxu0 0.0
        %2681 = vmatpush.msra.mxu0 0.0
        %2682 = vmatpush.msra.mxu0 0.0
        %2683 = vmatpush.msra.mxu0 0.0
        %2684 = vmatpush.msra.mxu0 0.0
        %2685 = vmatpush.msra.mxu0 %v257
        %2686 = vmatpush.msra.mxu0 %v256
        %2687 = vmatpush.msra.mxu0 %v255
        %2688 = vmatpush.msra.mxu0 %v254
        %2689 = vmatmul.f32.gmra.mxu0 %v2440
        %v2690 = vpop.f32.mrf.mxu0
        %v2691 = vadd.f32 0.0, %v2690
        %2692 = vmatmul.f32.gmra.mxu0 %v2442
        %v2693 = vpop.f32.mrf.mxu0
        %v2694 = vadd.f32 0.0, %v2693
        %2695 = vmatmul.f32.gmra.mxu0 %v2444
        %v2696 = vpop.f32.mrf.mxu0
        %v2697 = vadd.f32 0.0, %v2696
        %2698 = vmatmul.f32.gmra.mxu0 %v2446
        %v2699 = vpop.f32.mrf.mxu0
        %v2700 = vadd.f32 0.0, %v2699
        %2701 = vmatmul.f32.gmra.mxu0 %v2448
        %v2702 = vpop.f32.mrf.mxu0
        %v2703 = vadd.f32 0.0, %v2702
        %2704 = vmatmul.f32.gmra.mxu0 %v2450
        %v2705 = vpop.f32.mrf.mxu0
        %v2706 = vadd.f32 0.0, %v2705
        %2707 = vmatmul.f32.gmra.mxu0 %v2452
        %v2708 = vpop.f32.mrf.mxu0
        %v2709 = vadd.f32 0.0, %v2708
        %2710 = vmatmul.f32.gmra.mxu0 %v2671
        %v2711 = vpop.f32.mrf.mxu0
        %v2712 = vadd.f32 0.0, %v2711
        %2713 = vdwg.mxu0
        %v2714 = vsel %vm1788, %v2691, 0.0
        %v2715 = vsel %vm1788, %v2694, 0.0
        %v2716 = vadd.f32 %v2714, %v2715
        %v2717 = vsel %vm1788, %v2697, 0.0
        %v2718 = vadd.f32 %v2716, %v2717
        %v2719 = vsel %vm1788, %v2700, 0.0
        %v2720 = vadd.f32 %v2718, %v2719
        %v2721 = vsel %vm1788, %v2703, 0.0
        %v2722 = vadd.f32 %v2720, %v2721
        %v2723 = vsel %vm1788, %v2706, 0.0
        %v2724 = vadd.f32 %v2722, %v2723
        %v2725 = vsel %vm1788, %v2709, 0.0
        %v2726 = vadd.f32 %v2724, %v2725
        %v2727 = vsel %vm1788, %v2712, 0.0
        %v2728 = vadd.f32 %v2726, %v2727
        %v2729 = vrot.slane %v2728, 4
        %v2730 = vadd.f32 %v2728, %v2729
        %v2731 = vrot.slane %v2730, 2
        %v2732 = vadd.f32 %v2730, %v2731
        %v2733 = vrot.slane %v2732, 1
        %v2734 = vadd.f32 %v2732, %v2733
        %v2735 = vadd.f32 %v2624, %v2734
        %v2736 = vmul.f32 %v2691, %v2691
        %v2737 = vmul.f32 %v2694, %v2694
        %v2738 = vmul.f32 %v2697, %v2697
        %v2739 = vmul.f32 %v2700, %v2700
        %v2740 = vmul.f32 %v2703, %v2703
        %v2741 = vmul.f32 %v2706, %v2706
        %v2742 = vmul.f32 %v2709, %v2709
        %v2743 = vmul.f32 %v2712, %v2712
        %v2744 = vsel %vm1788, %v2736, 0.0
        %v2745 = vsel %vm1788, %v2737, 0.0
        %v2746 = vadd.f32 %v2744, %v2745
        %v2747 = vsel %vm1788, %v2738, 0.0
        %v2748 = vadd.f32 %v2746, %v2747
        %v2749 = vsel %vm1788, %v2739, 0.0
        %v2750 = vadd.f32 %v2748, %v2749
        %v2751 = vsel %vm1788, %v2740, 0.0
        %v2752 = vadd.f32 %v2750, %v2751
        %v2753 = vsel %vm1788, %v2741, 0.0
        %v2754 = vadd.f32 %v2752, %v2753
        %v2755 = vsel %vm1788, %v2742, 0.0
        %v2756 = vadd.f32 %v2754, %v2755
        %v2757 = vsel %vm1788, %v2743, 0.0
        %v2758 = vadd.f32 %v2756, %v2757
        %v2759 = vrot.slane %v2758, 4
        %v2760 = vadd.f32 %v2758, %v2759
        %v2761 = vrot.slane %v2760, 2
        %v2762 = vadd.f32 %v2760, %v2761
        %v2763 = vrot.slane %v2762, 1
        %v2764 = vadd.f32 %v2762, %v2763
        %v2765 = vadd.f32 %v2654, %v2764
        %v2766 = vmul.f32 %v2735, 0.00390625
        %v2767 = vmul.f32 %v2765, 0.00390625
        %v2768 = vmul.f32 %v2766, %v2766
        %v2769 = vsub.f32 %v2767, %v2768
        %v2770 = vadd.f32 %v2769, 1e-05
        %v2771 = vrsqrt.pop %v2770
        %v2772 = vmul.f32 %v2771, %v2770
        %v2773 = vmul.f32 %v2772, %v2771
        %v2774 = vmul.f32 0.5, %v2773
        %v2775 = vsub.f32 1.5, %v2774
        %v2776 = vmul.f32 %v2771, %v2775
        %vm2777 = vweird.f32 %v2770
        %vm2778 = vweird.f32 %v2771
        %vm2779 = vmor %vm2777, %vm2778
        %v2780 = vsel %vm2779, %v2771, %v2776
        %v2781 = vsub.f32 %v2235, %v2766
        %v2782 = vsub.f32 %v2238, %v2766
        %v2783 = vsub.f32 %v2241, %v2766
        %v2784 = vsub.f32 %v2244, %v2766
        %v2785 = vsub.f32 %v2247, %v2766
        %v2786 = vsub.f32 %v2250, %v2766
        %v2787 = vsub.f32 %v2253, %v2766
        %v2788 = vsub.f32 %v2256, %v2766
        %v2789 = vmul.f32 %v2781, %v2780
        %v2790 = vmul.f32 %v2782, %v2780
        %v2791 = vmul.f32 %v2783, %v2780
        %v2792 = vmul.f32 %v2784, %v2780
        %v2793 = vmul.f32 %v2785, %v2780
        %v2794 = vmul.f32 %v2786, %v2780
        %v2795 = vmul.f32 %v2787, %v2780
        %v2796 = vmul.f32 %v2788, %v2780
        %v2797 = vsub.f32 %v2472, %v2766
        %v2798 = vsub.f32 %v2475, %v2766
        %v2799 = vsub.f32 %v2478, %v2766
        %v2800 = vsub.f32 %v2481, %v2766
        %v2801 = vsub.f32 %v2484, %v2766
        %v2802 = vsub.f32 %v2487, %v2766
        %v2803 = vsub.f32 %v2490, %v2766
        %v2804 = vsub.f32 %v2493, %v2766
        %v2805 = vmul.f32 %v2797, %v2780
        %v2806 = vmul.f32 %v2798, %v2780
        %v2807 = vmul.f32 %v2799, %v2780
        %v2808 = vmul.f32 %v2800, %v2780
        %v2809 = vmul.f32 %v2801, %v2780
        %v2810 = vmul.f32 %v2802, %v2780
        %v2811 = vmul.f32 %v2803, %v2780
        %v2812 = vmul.f32 %v2804, %v2780
        %v2813 = vsub.f32 %v2580, %v2766
        %v2814 = vsub.f32 %v2583, %v2766
        %v2815 = vsub.f32 %v2586, %v2766
        %v2816 = vsub.f32 %v2589, %v2766
        %v2817 = vsub.f32 %v2592, %v2766
        %v2818 = vsub.f32 %v2595, %v2766
        %v2819 = vsub.f32 %v2598, %v2766
        %v2820 = vsub.f32 %v2601, %v2766
        %v2821 = vmul.f32 %v2813, %v2780
        %v2822 = vmul.f32 %v2814, %v2780
        %v2823 = vmul.f32 %v2815, %v2780
        %v2824 = vmul.f32 %v2816, %v2780
        %v2825 = vmul.f32 %v2817, %v2780
        %v2826 = vmul.f32 %v2818, %v2780
        %v2827 = vmul.f32 %v2819, %v2780
        %v2828 = vmul.f32 %v2820, %v2780
        %v2829 = vsub.f32 %v2691, %v2766
        %v2830 = vsub.f32 %v2694, %v2766
        %v2831 = vsub.f32 %v2697, %v2766
        %v2832 = vsub.f32 %v2700, %v2766
        %v2833 = vsub.f32 %v2703, %v2766
        %v2834 = vsub.f32 %v2706, %v2766
        %v2835 = vsub.f32 %v2709, %v2766
        %v2836 = vsub.f32 %v2712, %v2766
        %v2837 = vmul.f32 %v2829, %v2780
        %v2838 = vmul.f32 %v2830, %v2780
        %v2839 = vmul.f32 %v2831, %v2780
        %v2840 = vmul.f32 %v2832, %v2780
        %v2841 = vmul.f32 %v2833, %v2780
        %v2842 = vmul.f32 %v2834, %v2780
        %v2843 = vmul.f32 %v2835, %v2780
        %v2844 = vmul.f32 %v2836, %v2780
        %v2853 = vrot.slane %v2789, 1
        %v2854 = vrot.slane %v2789, 2
        %v2855 = vrot.slane %v2789, 3
        %v2856 = vrot.slane %v2789, 4
        %v2857 = vrot.slane %v2789, 5
        %v2858 = vrot.slane %v2789, 6
        %v2859 = vrot.slane %v2789, 7
        %v2860 = vrot.slane %v2790, 1
        %v2861 = vrot.slane %v2790, 2
        %v2862 = vrot.slane %v2790, 3
        %v2863 = vrot.slane %v2790, 4
        %v2864 = vrot.slane %v2790, 5
        %v2865 = vrot.slane %v2790, 6
        %v2866 = vrot.slane %v2790, 7
        %v2867 = vrot.slane %v2791, 1
        %v2868 = vrot.slane %v2791, 2
        %v2869 = vrot.slane %v2791, 3
        %v2870 = vrot.slane %v2791, 4
        %v2871 = vrot.slane %v2791, 5
        %v2872 = vrot.slane %v2791, 6
        %v2873 = vrot.slane %v2791, 7
        %v2874 = vrot.slane %v2792, 1
        %v2875 = vrot.slane %v2792, 2
        %v2876 = vrot.slane %v2792, 3
        %v2877 = vrot.slane %v2792, 4
        %v2878 = vrot.slane %v2792, 5
        %v2879 = vrot.slane %v2792, 6
        %v2880 = vrot.slane %v2792, 7
        %v2881 = vrot.slane %v2793, 1
        %v2882 = vrot.slane %v2793, 2
        %v2883 = vrot.slane %v2793, 3
        %v2884 = vrot.slane %v2793, 4
        %v2885 = vrot.slane %v2793, 5
        %v2886 = vrot.slane %v2793, 6
        %v2887 = vrot.slane %v2793, 7
        %v2888 = vrot.slane %v2794, 1
        %v2889 = vrot.slane %v2794, 2
        %v2890 = vrot.slane %v2794, 3
        %v2891 = vrot.slane %v2794, 4
        %v2892 = vrot.slane %v2794, 5
        %v2893 = vrot.slane %v2794, 6
        %v2894 = vrot.slane %v2794, 7
        %v2895 = vrot.slane %v2795, 1
        %v2896 = vrot.slane %v2795, 2
        %v2897 = vrot.slane %v2795, 3
        %v2898 = vrot.slane %v2795, 4
        %v2899 = vrot.slane %v2795, 5
        %v2900 = vrot.slane %v2795, 6
        %v2901 = vrot.slane %v2795, 7
        %v2902 = vrot.slane %v2796, 1
        %v2903 = vrot.slane %v2796, 2
        %v2904 = vrot.slane %v2796, 3
        %v2905 = vrot.slane %v2796, 4
        %v2906 = vrot.slane %v2796, 5
        %v2907 = vrot.slane %v2796, 6
        %v2908 = vrot.slane %v2796, 7
        %v2973 = vrot.slane %v2805, 1
        %v2974 = vrot.slane %v2805, 2
        %v2975 = vrot.slane %v2805, 3
        %v2976 = vrot.slane %v2805, 4
        %v2977 = vrot.slane %v2805, 5
        %v2978 = vrot.slane %v2805, 6
        %v2979 = vrot.slane %v2805, 7
        %v2980 = vrot.slane %v2806, 1
        %v2981 = vrot.slane %v2806, 2
        %v2982 = vrot.slane %v2806, 3
        %v2983 = vrot.slane %v2806, 4
        %v2984 = vrot.slane %v2806, 5
        %v2985 = vrot.slane %v2806, 6
        %v2986 = vrot.slane %v2806, 7
        %v2987 = vrot.slane %v2807, 1
        %v2988 = vrot.slane %v2807, 2
        %v2989 = vrot.slane %v2807, 3
        %v2990 = vrot.slane %v2807, 4
        %v2991 = vrot.slane %v2807, 5
        %v2992 = vrot.slane %v2807, 6
        %v2993 = vrot.slane %v2807, 7
        %v2994 = vrot.slane %v2808, 1
        %v2995 = vrot.slane %v2808, 2
        %v2996 = vrot.slane %v2808, 3
        %v2997 = vrot.slane %v2808, 4
        %v2998 = vrot.slane %v2808, 5
        %v2999 = vrot.slane %v2808, 6
        %v3000 = vrot.slane %v2808, 7
        %v3001 = vrot.slane %v2809, 1
        %v3002 = vrot.slane %v2809, 2
        %v3003 = vrot.slane %v2809, 3
        %v3004 = vrot.slane %v2809, 4
        %v3005 = vrot.slane %v2809, 5
        %v3006 = vrot.slane %v2809, 6
        %v3007 = vrot.slane %v2809, 7
        %v3008 = vrot.slane %v2810, 1
        %v3009 = vrot.slane %v2810, 2
        %v3010 = vrot.slane %v2810, 3
        %v3011 = vrot.slane %v2810, 4
        %v3012 = vrot.slane %v2810, 5
        %v3013 = vrot.slane %v2810, 6
        %v3014 = vrot.slane %v2810, 7
        %v3015 = vrot.slane %v2811, 1
        %v3016 = vrot.slane %v2811, 2
        %v3017 = vrot.slane %v2811, 3
        %v3018 = vrot.slane %v2811, 4
        %v3019 = vrot.slane %v2811, 5
        %v3020 = vrot.slane %v2811, 6
        %v3021 = vrot.slane %v2811, 7
        %v3022 = vrot.slane %v2812, 1
        %v3023 = vrot.slane %v2812, 2
        %v3024 = vrot.slane %v2812, 3
        %v3025 = vrot.slane %v2812, 4
        %v3026 = vrot.slane %v2812, 5
        %v3027 = vrot.slane %v2812, 6
        %v3028 = vrot.slane %v2812, 7
        %v3029 = vperm.slane %v2805, 0
        %v3030 = vperm.slane %v2973, 0
        %v3031 = vperm.slane %v2974, 0
        %v3032 = vperm.slane %v2975, 0
        %v3033 = vperm.slane %v2976, 0
        %v3034 = vperm.slane %v2977, 0
        %v3035 = vperm.slane %v2978, 0
        %v3036 = vperm.slane %v2979, 0
        %v3037 = vperm.slane %v2806, 0
        %v3038 = vperm.slane %v2980, 0
        %v3039 = vperm.slane %v2981, 0
        %v3040 = vperm.slane %v2982, 0
        %v3041 = vperm.slane %v2983, 0
        %v3042 = vperm.slane %v2984, 0
        %v3043 = vperm.slane %v2985, 0
        %v3044 = vperm.slane %v2986, 0
        %v3045 = vperm.slane %v2807, 0
        %v3046 = vperm.slane %v2987, 0
        %v3047 = vperm.slane %v2988, 0
        %v3048 = vperm.slane %v2989, 0
        %v3049 = vperm.slane %v2990, 0
        %v3050 = vperm.slane %v2991, 0
        %v3051 = vperm.slane %v2992, 0
        %v3052 = vperm.slane %v2993, 0
        %v3053 = vperm.slane %v2808, 0
        %v3054 = vperm.slane %v2994, 0
        %v3055 = vperm.slane %v2995, 0
        %v3056 = vperm.slane %v2996, 0
        %v3057 = vperm.slane %v2997, 0
        %v3058 = vperm.slane %v2998, 0
        %v3059 = vperm.slane %v2999, 0
        %v3060 = vperm.slane %v3000, 0
        %v3061 = vperm.slane %v2809, 0
        %v3062 = vperm.slane %v3001, 0
        %v3063 = vperm.slane %v3002, 0
        %v3064 = vperm.slane %v3003, 0
        %v3065 = vperm.slane %v3004, 0
        %v3066 = vperm.slane %v3005, 0
        %v3067 = vperm.slane %v3006, 0
        %v3068 = vperm.slane %v3007, 0
        %v3069 = vperm.slane %v2810, 0
        %v3070 = vperm.slane %v3008, 0
        %v3071 = vperm.slane %v3009, 0
        %v3072 = vperm.slane %v3010, 0
        %v3073 = vperm.slane %v3011, 0
        %v3074 = vperm.slane %v3012, 0
        %v3075 = vperm.slane %v3013, 0
        %v3076 = vperm.slane %v3014, 0
        %v3077 = vperm.slane %v2811, 0
        %v3078 = vperm.slane %v3015, 0
        %v3079 = vperm.slane %v3016, 0
        %v3080 = vperm.slane %v3017, 0
        %v3081 = vperm.slane %v3018, 0
        %v3082 = vperm.slane %v3019, 0
        %v3083 = vperm.slane %v3020, 0
        %v3084 = vperm.slane %v3021, 0
        %v3085 = vperm.slane %v2812, 0
        %v3086 = vperm.slane %v3022, 0
        %v3087 = vperm.slane %v3023, 0
        %v3088 = vperm.slane %v3024, 0
        %v3089 = vperm.slane %v3025, 0
        %v3090 = vperm.slane %v3026, 0
        %v3091 = vperm.slane %v3027, 0
        %v3092 = vperm.slane %v3028, 0
        %v3157 = vsel %vm426, %v2789, %v3029
        %v3158 = vsel %vm426, %v2853, %v3030
        %v3159 = vsel %vm426, %v2854, %v3031
        %v3160 = vsel %vm426, %v2855, %v3032
        %v3161 = vsel %vm426, %v2856, %v3033
        %v3162 = vsel %vm426, %v2857, %v3034
        %v3163 = vsel %vm426, %v2858, %v3035
        %v3164 = vsel %vm426, %v2859, %v3036
        %v3165 = vsel %vm426, %v2790, %v3037
        %v3166 = vsel %vm426, %v2860, %v3038
        %v3167 = vsel %vm426, %v2861, %v3039
        %v3168 = vsel %vm426, %v2862, %v3040
        %v3169 = vsel %vm426, %v2863, %v3041
        %v3170 = vsel %vm426, %v2864, %v3042
        %v3171 = vsel %vm426, %v2865, %v3043
        %v3172 = vsel %vm426, %v2866, %v3044
        %v3173 = vsel %vm426, %v2791, %v3045
        %v3174 = vsel %vm426, %v2867, %v3046
        %v3175 = vsel %vm426, %v2868, %v3047
        %v3176 = vsel %vm426, %v2869, %v3048
        %v3177 = vsel %vm426, %v2870, %v3049
        %v3178 = vsel %vm426, %v2871, %v3050
        %v3179 = vsel %vm426, %v2872, %v3051
        %v3180 = vsel %vm426, %v2873, %v3052
        %v3181 = vsel %vm426, %v2792, %v3053
        %v3182 = vsel %vm426, %v2874, %v3054
        %v3183 = vsel %vm426, %v2875, %v3055
        %v3184 = vsel %vm426, %v2876, %v3056
        %v3185 = vsel %vm426, %v2877, %v3057
        %v3186 = vsel %vm426, %v2878, %v3058
        %v3187 = vsel %vm426, %v2879, %v3059
        %v3188 = vsel %vm426, %v2880, %v3060
        %v3189 = vsel %vm426, %v2793, %v3061
        %v3190 = vsel %vm426, %v2881, %v3062
        %v3191 = vsel %vm426, %v2882, %v3063
        %v3192 = vsel %vm426, %v2883, %v3064
        %v3193 = vsel %vm426, %v2884, %v3065
        %v3194 = vsel %vm426, %v2885, %v3066
        %v3195 = vsel %vm426, %v2886, %v3067
        %v3196 = vsel %vm426, %v2887, %v3068
        %v3197 = vsel %vm426, %v2794, %v3069
        %v3198 = vsel %vm426, %v2888, %v3070
        %v3199 = vsel %vm426, %v2889, %v3071
        %v3200 = vsel %vm426, %v2890, %v3072
        %v3201 = vsel %vm426, %v2891, %v3073
        %v3202 = vsel %vm426, %v2892, %v3074
        %v3203 = vsel %vm426, %v2893, %v3075
        %v3204 = vsel %vm426, %v2894, %v3076
        %v3205 = vsel %vm426, %v2795, %v3077
        %v3206 = vsel %vm426, %v2895, %v3078
        %v3207 = vsel %vm426, %v2896, %v3079
        %v3208 = vsel %vm426, %v2897, %v3080
        %v3209 = vsel %vm426, %v2898, %v3081
        %v3210 = vsel %vm426, %v2899, %v3082
        %v3211 = vsel %vm426, %v2900, %v3083
        %v3212 = vsel %vm426, %v2901, %v3084
        %v3213 = vsel %vm426, %v2796, %v3085
        %v3214 = vsel %vm426, %v2902, %v3086
        %v3215 = vsel %vm426, %v2903, %v3087
        %v3216 = vsel %vm426, %v2904, %v3088
        %v3217 = vsel %vm426, %v2905, %v3089
        %v3218 = vsel %vm426, %v2906, %v3090
        %v3219 = vsel %vm426, %v2907, %v3091
        %v3220 = vsel %vm426, %v2908, %v3092
        %v3229 = vrot.slane %v2821, 1
        %v3230 = vrot.slane %v2821, 2
        %v3231 = vrot.slane %v2821, 3
        %v3232 = vrot.slane %v2821, 4
        %v3233 = vrot.slane %v2821, 5
        %v3234 = vrot.slane %v2821, 6
        %v3235 = vrot.slane %v2821, 7
        %v3236 = vrot.slane %v2822, 1
        %v3237 = vrot.slane %v2822, 2
        %v3238 = vrot.slane %v2822, 3
        %v3239 = vrot.slane %v2822, 4
        %v3240 = vrot.slane %v2822, 5
        %v3241 = vrot.slane %v2822, 6
        %v3242 = vrot.slane %v2822, 7
        %v3243 = vrot.slane %v2823, 1
        %v3244 = vrot.slane %v2823, 2
        %v3245 = vrot.slane %v2823, 3
        %v3246 = vrot.slane %v2823, 4
        %v3247 = vrot.slane %v2823, 5
        %v3248 = vrot.slane %v2823, 6
        %v3249 = vrot.slane %v2823, 7
        %v3250 = vrot.slane %v2824, 1
        %v3251 = vrot.slane %v2824, 2
        %v3252 = vrot.slane %v2824, 3
        %v3253 = vrot.slane %v2824, 4
        %v3254 = vrot.slane %v2824, 5
        %v3255 = vrot.slane %v2824, 6
        %v3256 = vrot.slane %v2824, 7
        %v3257 = vrot.slane %v2825, 1
        %v3258 = vrot.slane %v2825, 2
        %v3259 = vrot.slane %v2825, 3
        %v3260 = vrot.slane %v2825, 4
        %v3261 = vrot.slane %v2825, 5
        %v3262 = vrot.slane %v2825, 6
        %v3263 = vrot.slane %v2825, 7
        %v3264 = vrot.slane %v2826, 1
        %v3265 = vrot.slane %v2826, 2
        %v3266 = vrot.slane %v2826, 3
        %v3267 = vrot.slane %v2826, 4
        %v3268 = vrot.slane %v2826, 5
        %v3269 = vrot.slane %v2826, 6
        %v3270 = vrot.slane %v2826, 7
        %v3271 = vrot.slane %v2827, 1
        %v3272 = vrot.slane %v2827, 2
        %v3273 = vrot.slane %v2827, 3
        %v3274 = vrot.slane %v2827, 4
        %v3275 = vrot.slane %v2827, 5
        %v3276 = vrot.slane %v2827, 6
        %v3277 = vrot.slane %v2827, 7
        %v3278 = vrot.slane %v2828, 1
        %v3279 = vrot.slane %v2828, 2
        %v3280 = vrot.slane %v2828, 3
        %v3281 = vrot.slane %v2828, 4
        %v3282 = vrot.slane %v2828, 5
        %v3283 = vrot.slane %v2828, 6
        %v3284 = vrot.slane %v2828, 7
        %v3349 = vrot.slane %v2837, 1
        %v3350 = vrot.slane %v2837, 2
        %v3351 = vrot.slane %v2837, 3
        %v3352 = vrot.slane %v2837, 4
        %v3353 = vrot.slane %v2837, 5
        %v3354 = vrot.slane %v2837, 6
        %v3355 = vrot.slane %v2837, 7
        %v3356 = vrot.slane %v2838, 1
        %v3357 = vrot.slane %v2838, 2
        %v3358 = vrot.slane %v2838, 3
        %v3359 = vrot.slane %v2838, 4
        %v3360 = vrot.slane %v2838, 5
        %v3361 = vrot.slane %v2838, 6
        %v3362 = vrot.slane %v2838, 7
        %v3363 = vrot.slane %v2839, 1
        %v3364 = vrot.slane %v2839, 2
        %v3365 = vrot.slane %v2839, 3
        %v3366 = vrot.slane %v2839, 4
        %v3367 = vrot.slane %v2839, 5
        %v3368 = vrot.slane %v2839, 6
        %v3369 = vrot.slane %v2839, 7
        %v3370 = vrot.slane %v2840, 1
        %v3371 = vrot.slane %v2840, 2
        %v3372 = vrot.slane %v2840, 3
        %v3373 = vrot.slane %v2840, 4
        %v3374 = vrot.slane %v2840, 5
        %v3375 = vrot.slane %v2840, 6
        %v3376 = vrot.slane %v2840, 7
        %v3377 = vrot.slane %v2841, 1
        %v3378 = vrot.slane %v2841, 2
        %v3379 = vrot.slane %v2841, 3
        %v3380 = vrot.slane %v2841, 4
        %v3381 = vrot.slane %v2841, 5
        %v3382 = vrot.slane %v2841, 6
        %v3383 = vrot.slane %v2841, 7
        %v3384 = vrot.slane %v2842, 1
        %v3385 = vrot.slane %v2842, 2
        %v3386 = vrot.slane %v2842, 3
        %v3387 = vrot.slane %v2842, 4
        %v3388 = vrot.slane %v2842, 5
        %v3389 = vrot.slane %v2842, 6
        %v3390 = vrot.slane %v2842, 7
        %v3391 = vrot.slane %v2843, 1
        %v3392 = vrot.slane %v2843, 2
        %v3393 = vrot.slane %v2843, 3
        %v3394 = vrot.slane %v2843, 4
        %v3395 = vrot.slane %v2843, 5
        %v3396 = vrot.slane %v2843, 6
        %v3397 = vrot.slane %v2843, 7
        %v3398 = vrot.slane %v2844, 1
        %v3399 = vrot.slane %v2844, 2
        %v3400 = vrot.slane %v2844, 3
        %v3401 = vrot.slane %v2844, 4
        %v3402 = vrot.slane %v2844, 5
        %v3403 = vrot.slane %v2844, 6
        %v3404 = vrot.slane %v2844, 7
        %v3405 = vperm.slane %v2837, 0
        %v3406 = vperm.slane %v3349, 0
        %v3407 = vperm.slane %v3350, 0
        %v3408 = vperm.slane %v3351, 0
        %v3409 = vperm.slane %v3352, 0
        %v3410 = vperm.slane %v3353, 0
        %v3411 = vperm.slane %v3354, 0
        %v3412 = vperm.slane %v3355, 0
        %v3413 = vperm.slane %v2838, 0
        %v3414 = vperm.slane %v3356, 0
        %v3415 = vperm.slane %v3357, 0
        %v3416 = vperm.slane %v3358, 0
        %v3417 = vperm.slane %v3359, 0
        %v3418 = vperm.slane %v3360, 0
        %v3419 = vperm.slane %v3361, 0
        %v3420 = vperm.slane %v3362, 0
        %v3421 = vperm.slane %v2839, 0
        %v3422 = vperm.slane %v3363, 0
        %v3423 = vperm.slane %v3364, 0
        %v3424 = vperm.slane %v3365, 0
        %v3425 = vperm.slane %v3366, 0
        %v3426 = vperm.slane %v3367, 0
        %v3427 = vperm.slane %v3368, 0
        %v3428 = vperm.slane %v3369, 0
        %v3429 = vperm.slane %v2840, 0
        %v3430 = vperm.slane %v3370, 0
        %v3431 = vperm.slane %v3371, 0
        %v3432 = vperm.slane %v3372, 0
        %v3433 = vperm.slane %v3373, 0
        %v3434 = vperm.slane %v3374, 0
        %v3435 = vperm.slane %v3375, 0
        %v3436 = vperm.slane %v3376, 0
        %v3437 = vperm.slane %v2841, 0
        %v3438 = vperm.slane %v3377, 0
        %v3439 = vperm.slane %v3378, 0
        %v3440 = vperm.slane %v3379, 0
        %v3441 = vperm.slane %v3380, 0
        %v3442 = vperm.slane %v3381, 0
        %v3443 = vperm.slane %v3382, 0
        %v3444 = vperm.slane %v3383, 0
        %v3445 = vperm.slane %v2842, 0
        %v3446 = vperm.slane %v3384, 0
        %v3447 = vperm.slane %v3385, 0
        %v3448 = vperm.slane %v3386, 0
        %v3449 = vperm.slane %v3387, 0
        %v3450 = vperm.slane %v3388, 0
        %v3451 = vperm.slane %v3389, 0
        %v3452 = vperm.slane %v3390, 0
        %v3453 = vperm.slane %v2843, 0
        %v3454 = vperm.slane %v3391, 0
        %v3455 = vperm.slane %v3392, 0
        %v3456 = vperm.slane %v3393, 0
        %v3457 = vperm.slane %v3394, 0
        %v3458 = vperm.slane %v3395, 0
        %v3459 = vperm.slane %v3396, 0
        %v3460 = vperm.slane %v3397, 0
        %v3461 = vperm.slane %v2844, 0
        %v3462 = vperm.slane %v3398, 0
        %v3463 = vperm.slane %v3399, 0
        %v3464 = vperm.slane %v3400, 0
        %v3465 = vperm.slane %v3401, 0
        %v3466 = vperm.slane %v3402, 0
        %v3467 = vperm.slane %v3403, 0
        %v3468 = vperm.slane %v3404, 0
        %v3533 = vsel %vm426, %v2821, %v3405
        %v3534 = vsel %vm426, %v3229, %v3406
        %v3535 = vsel %vm426, %v3230, %v3407
        %v3536 = vsel %vm426, %v3231, %v3408
        %v3537 = vsel %vm426, %v3232, %v3409
        %v3538 = vsel %vm426, %v3233, %v3410
        %v3539 = vsel %vm426, %v3234, %v3411
        %v3540 = vsel %vm426, %v3235, %v3412
        %v3541 = vsel %vm426, %v2822, %v3413
        %v3542 = vsel %vm426, %v3236, %v3414
        %v3543 = vsel %vm426, %v3237, %v3415
        %v3544 = vsel %vm426, %v3238, %v3416
        %v3545 = vsel %vm426, %v3239, %v3417
        %v3546 = vsel %vm426, %v3240, %v3418
        %v3547 = vsel %vm426, %v3241, %v3419
        %v3548 = vsel %vm426, %v3242, %v3420
        %v3549 = vsel %vm426, %v2823, %v3421
        %v3550 = vsel %vm426, %v3243, %v3422
        %v3551 = vsel %vm426, %v3244, %v3423
        %v3552 = vsel %vm426, %v3245, %v3424
        %v3553 = vsel %vm426, %v3246, %v3425
        %v3554 = vsel %vm426, %v3247, %v3426
        %v3555 = vsel %vm426, %v3248, %v3427
        %v3556 = vsel %vm426, %v3249, %v3428
        %v3557 = vsel %vm426, %v2824, %v3429
        %v3558 = vsel %vm426, %v3250, %v3430
        %v3559 = vsel %vm426, %v3251, %v3431
        %v3560 = vsel %vm426, %v3252, %v3432
        %v3561 = vsel %vm426, %v3253, %v3433
        %v3562 = vsel %vm426, %v3254, %v3434
        %v3563 = vsel %vm426, %v3255, %v3435
        %v3564 = vsel %vm426, %v3256, %v3436
        %v3565 = vsel %vm426, %v2825, %v3437
        %v3566 = vsel %vm426, %v3257, %v3438
        %v3567 = vsel %vm426, %v3258, %v3439
        %v3568 = vsel %vm426, %v3259, %v3440
        %v3569 = vsel %vm426, %v3260, %v3441
        %v3570 = vsel %vm426, %v3261, %v3442
        %v3571 = vsel %vm426, %v3262, %v3443
        %v3572 = vsel %vm426, %v3263, %v3444
        %v3573 = vsel %vm426, %v2826, %v3445
        %v3574 = vsel %vm426, %v3264, %v3446
        %v3575 = vsel %vm426, %v3265, %v3447
        %v3576 = vsel %vm426, %v3266, %v3448
        %v3577 = vsel %vm426, %v3267, %v3449
        %v3578 = vsel %vm426, %v3268, %v3450
        %v3579 = vsel %vm426, %v3269, %v3451
        %v3580 = vsel %vm426, %v3270, %v3452
        %v3581 = vsel %vm426, %v2827, %v3453
        %v3582 = vsel %vm426, %v3271, %v3454
        %v3583 = vsel %vm426, %v3272, %v3455
        %v3584 = vsel %vm426, %v3273, %v3456
        %v3585 = vsel %vm426, %v3274, %v3457
        %v3586 = vsel %vm426, %v3275, %v3458
        %v3587 = vsel %vm426, %v3276, %v3459
        %v3588 = vsel %vm426, %v3277, %v3460
        %v3589 = vsel %vm426, %v2828, %v3461
        %v3590 = vsel %vm426, %v3278, %v3462
        %v3591 = vsel %vm426, %v3279, %v3463
        %v3592 = vsel %vm426, %v3280, %v3464
        %v3593 = vsel %vm426, %v3281, %v3465
        %v3594 = vsel %vm426, %v3282, %v3466
        %v3595 = vsel %vm426, %v3283, %v3467
        %v3596 = vsel %vm426, %v3284, %v3468
        %3725 = vst [vmem:[#allocation1] ss:$4 sm:$0xff] %v3157
        %s3726 = scalar_lea.vmem [#allocation1], 1
        %3727 = vst [vmem:[%s3726] ss:$4 sm:$0xff] %v3158
        %s3728 = scalar_lea.vmem [#allocation1], 2
        %3729 = vst [vmem:[%s3728] ss:$4 sm:$0xff] %v3159
        %s3730 = scalar_lea.vmem [#allocation1], 3
        %3731 = vst [vmem:[%s3730] ss:$4 sm:$0xff] %v3160
        %s3732 = scalar_lea.vmem [#allocation1], 32
        %3733 = vst [vmem:[%s3732] ss:$4 sm:$0xff] %v3161
        %s3734 = scalar_lea.vmem [#allocation1], 33
        %3735 = vst [vmem:[%s3734] ss:$4 sm:$0xff] %v3162
        %s3736 = scalar_lea.vmem [#allocation1], 34
        %3737 = vst [vmem:[%s3736] ss:$4 sm:$0xff] %v3163
        %s3738 = scalar_lea.vmem [#allocation1], 35
        %3739 = vst [vmem:[%s3738] ss:$4 sm:$0xff] %v3164
        %v3740 = vld.sshfl [vmem:[#allocation1] sm:$0xff pattern:$0x73625140]
        %v3741 = vld.sshfl [vmem:[#allocation1 + $0x20] sm:$0xff pattern:$0x73625140]
        %3742 = vst [vmem:[#allocation1] ss:$4 sm:$0xff] %v3533
        %3743 = vst [vmem:[%s3726] ss:$4 sm:$0xff] %v3534
        %3744 = vst [vmem:[%s3728] ss:$4 sm:$0xff] %v3535
        %3745 = vst [vmem:[%s3730] ss:$4 sm:$0xff] %v3536
        %3746 = vst [vmem:[%s3732] ss:$4 sm:$0xff] %v3537
        %3747 = vst [vmem:[%s3734] ss:$4 sm:$0xff] %v3538
        %3748 = vst [vmem:[%s3736] ss:$4 sm:$0xff] %v3539
        %3749 = vst [vmem:[%s3738] ss:$4 sm:$0xff] %v3540
        %v3750 = vld.sshfl [vmem:[#allocation1] sm:$0xff pattern:$0x73625140]
        %v3751 = vld.sshfl [vmem:[#allocation1 + $0x20] sm:$0xff pattern:$0x73625140]
        %3752 = vst [vmem:[#allocation1] ss:$4 sm:$0xff] %v3165
        %3753 = vst [vmem:[%s3726] ss:$4 sm:$0xff] %v3166
        %3754 = vst [vmem:[%s3728] ss:$4 sm:$0xff] %v3167
        %3755 = vst [vmem:[%s3730] ss:$4 sm:$0xff] %v3168
        %3756 = vst [vmem:[%s3732] ss:$4 sm:$0xff] %v3169
        %3757 = vst [vmem:[%s3734] ss:$4 sm:$0xff] %v3170
        %3758 = vst [vmem:[%s3736] ss:$4 sm:$0xff] %v3171
        %3759 = vst [vmem:[%s3738] ss:$4 sm:$0xff] %v3172
        %v3760 = vld.sshfl [vmem:[#allocation1] sm:$0xff pattern:$0x73625140]
        %v3761 = vld.sshfl [vmem:[#allocation1 + $0x20] sm:$0xff pattern:$0x73625140]
        %3762 = vst [vmem:[#allocation1] ss:$4 sm:$0xff] %v3541
        %3763 = vst [vmem:[%s3726] ss:$4 sm:$0xff] %v3542
        %3764 = vst [vmem:[%s3728] ss:$4 sm:$0xff] %v3543
        %3765 = vst [vmem:[%s3730] ss:$4 sm:$0xff] %v3544
        %3766 = vst [vmem:[%s3732] ss:$4 sm:$0xff] %v3545
        %3767 = vst [vmem:[%s3734] ss:$4 sm:$0xff] %v3546
        %3768 = vst [vmem:[%s3736] ss:$4 sm:$0xff] %v3547
        %3769 = vst [vmem:[%s3738] ss:$4 sm:$0xff] %v3548
        %v3770 = vld.sshfl [vmem:[#allocation1] sm:$0xff pattern:$0x73625140]
        %v3771 = vld.sshfl [vmem:[#allocation1 + $0x20] sm:$0xff pattern:$0x73625140]
        %3772 = vst [vmem:[#allocation1] ss:$4 sm:$0xff] %v3173
        %3773 = vst [vmem:[%s3726] ss:$4 sm:$0xff] %v3174
        %3774 = vst [vmem:[%s3728] ss:$4 sm:$0xff] %v3175
        %3775 = vst [vmem:[%s3730] ss:$4 sm:$0xff] %v3176
        %3776 = vst [vmem:[%s3732] ss:$4 sm:$0xff] %v3177
        %3777 = vst [vmem:[%s3734] ss:$4 sm:$0xff] %v3178
        %3778 = vst [vmem:[%s3736] ss:$4 sm:$0xff] %v3179
        %3779 = vst [vmem:[%s3738] ss:$4 sm:$0xff] %v3180
        %v3780 = vld.sshfl [vmem:[#allocation1] sm:$0xff pattern:$0x73625140]
        %v3781 = vld.sshfl [vmem:[#allocation1 + $0x20] sm:$0xff pattern:$0x73625140]
        %3782 = vst [vmem:[#allocation1] ss:$4 sm:$0xff] %v3549
        %3783 = vst [vmem:[%s3726] ss:$4 sm:$0xff] %v3550
        %3784 = vst [vmem:[%s3728] ss:$4 sm:$0xff] %v3551
        %3785 = vst [vmem:[%s3730] ss:$4 sm:$0xff] %v3552
        %3786 = vst [vmem:[%s3732] ss:$4 sm:$0xff] %v3553
        %3787 = vst [vmem:[%s3734] ss:$4 sm:$0xff] %v3554
        %3788 = vst [vmem:[%s3736] ss:$4 sm:$0xff] %v3555
        %3789 = vst [vmem:[%s3738] ss:$4 sm:$0xff] %v3556
        %v3790 = vld.sshfl [vmem:[#allocation1] sm:$0xff pattern:$0x73625140]
        %v3791 = vld.sshfl [vmem:[#allocation1 + $0x20] sm:$0xff pattern:$0x73625140]
        %3792 = vst [vmem:[#allocation1] ss:$4 sm:$0xff] %v3181
        %3793 = vst [vmem:[%s3726] ss:$4 sm:$0xff] %v3182
        %3794 = vst [vmem:[%s3728] ss:$4 sm:$0xff] %v3183
        %3795 = vst [vmem:[%s3730] ss:$4 sm:$0xff] %v3184
        %3796 = vst [vmem:[%s3732] ss:$4 sm:$0xff] %v3185
        %3797 = vst [vmem:[%s3734] ss:$4 sm:$0xff] %v3186
        %3798 = vst [vmem:[%s3736] ss:$4 sm:$0xff] %v3187
        %3799 = vst [vmem:[%s3738] ss:$4 sm:$0xff] %v3188
        %v3800 = vld.sshfl [vmem:[#allocation1] sm:$0xff pattern:$0x73625140]
        %v3801 = vld.sshfl [vmem:[#allocation1 + $0x20] sm:$0xff pattern:$0x73625140]
        %3802 = vst [vmem:[#allocation1] ss:$4 sm:$0xff] %v3557
        %3803 = vst [vmem:[%s3726] ss:$4 sm:$0xff] %v3558
        %3804 = vst [vmem:[%s3728] ss:$4 sm:$0xff] %v3559
        %3805 = vst [vmem:[%s3730] ss:$4 sm:$0xff] %v3560
        %3806 = vst [vmem:[%s3732] ss:$4 sm:$0xff] %v3561
        %3807 = vst [vmem:[%s3734] ss:$4 sm:$0xff] %v3562
        %3808 = vst [vmem:[%s3736] ss:$4 sm:$0xff] %v3563
        %3809 = vst [vmem:[%s3738] ss:$4 sm:$0xff] %v3564
        %v3810 = vld.sshfl [vmem:[#allocation1] sm:$0xff pattern:$0x73625140]
        %v3811 = vld.sshfl [vmem:[#allocation1 + $0x20] sm:$0xff pattern:$0x73625140]
        %3812 = vst [vmem:[#allocation1] ss:$4 sm:$0xff] %v3189
        %3813 = vst [vmem:[%s3726] ss:$4 sm:$0xff] %v3190
        %3814 = vst [vmem:[%s3728] ss:$4 sm:$0xff] %v3191
        %3815 = vst [vmem:[%s3730] ss:$4 sm:$0xff] %v3192
        %3816 = vst [vmem:[%s3732] ss:$4 sm:$0xff] %v3193
        %3817 = vst [vmem:[%s3734] ss:$4 sm:$0xff] %v3194
        %3818 = vst [vmem:[%s3736] ss:$4 sm:$0xff] %v3195
        %3819 = vst [vmem:[%s3738] ss:$4 sm:$0xff] %v3196
        %v3820 = vld.sshfl [vmem:[#allocation1] sm:$0xff pattern:$0x73625140]
        %v3821 = vld.sshfl [vmem:[#allocation1 + $0x20] sm:$0xff pattern:$0x73625140]
        %3822 = vst [vmem:[#allocation1] ss:$4 sm:$0xff] %v3565
        %3823 = vst [vmem:[%s3726] ss:$4 sm:$0xff] %v3566
        %3824 = vst [vmem:[%s3728] ss:$4 sm:$0xff] %v3567
        %3825 = vst [vmem:[%s3730] ss:$4 sm:$0xff] %v3568
        %3826 = vst [vmem:[%s3732] ss:$4 sm:$0xff] %v3569
        %3827 = vst [vmem:[%s3734] ss:$4 sm:$0xff] %v3570
        %3828 = vst [vmem:[%s3736] ss:$4 sm:$0xff] %v3571
        %3829 = vst [vmem:[%s3738] ss:$4 sm:$0xff] %v3572
        %v3830 = vld.sshfl [vmem:[#allocation1] sm:$0xff pattern:$0x73625140]
        %v3831 = vld.sshfl [vmem:[#allocation1 + $0x20] sm:$0xff pattern:$0x73625140]
        %3832 = vst [vmem:[#allocation1] ss:$4 sm:$0xff] %v3197
        %3833 = vst [vmem:[%s3726] ss:$4 sm:$0xff] %v3198
        %3834 = vst [vmem:[%s3728] ss:$4 sm:$0xff] %v3199
        %3835 = vst [vmem:[%s3730] ss:$4 sm:$0xff] %v3200
        %3836 = vst [vmem:[%s3732] ss:$4 sm:$0xff] %v3201
        %3837 = vst [vmem:[%s3734] ss:$4 sm:$0xff] %v3202
        %3838 = vst [vmem:[%s3736] ss:$4 sm:$0xff] %v3203
        %3839 = vst [vmem:[%s3738] ss:$4 sm:$0xff] %v3204
        %v3840 = vld.sshfl [vmem:[#allocation1] sm:$0xff pattern:$0x73625140]
        %v3841 = vld.sshfl [vmem:[#allocation1 + $0x20] sm:$0xff pattern:$0x73625140]
        %3842 = vst [vmem:[#allocation1] ss:$4 sm:$0xff] %v3573
        %3843 = vst [vmem:[%s3726] ss:$4 sm:$0xff] %v3574
        %3844 = vst [vmem:[%s3728] ss:$4 sm:$0xff] %v3575
        %3845 = vst [vmem:[%s3730] ss:$4 sm:$0xff] %v3576
        %3846 = vst [vmem:[%s3732] ss:$4 sm:$0xff] %v3577
        %3847 = vst [vmem:[%s3734] ss:$4 sm:$0xff] %v3578
        %3848 = vst [vmem:[%s3736] ss:$4 sm:$0xff] %v3579
        %3849 = vst [vmem:[%s3738] ss:$4 sm:$0xff] %v3580
        %v3850 = vld.sshfl [vmem:[#allocation1] sm:$0xff pattern:$0x73625140]
        %v3851 = vld.sshfl [vmem:[#allocation1 + $0x20] sm:$0xff pattern:$0x73625140]
        %3852 = vst [vmem:[#allocation1] ss:$4 sm:$0xff] %v3205
        %3853 = vst [vmem:[%s3726] ss:$4 sm:$0xff] %v3206
        %3854 = vst [vmem:[%s3728] ss:$4 sm:$0xff] %v3207
        %3855 = vst [vmem:[%s3730] ss:$4 sm:$0xff] %v3208
        %3856 = vst [vmem:[%s3732] ss:$4 sm:$0xff] %v3209
        %3857 = vst [vmem:[%s3734] ss:$4 sm:$0xff] %v3210
        %3858 = vst [vmem:[%s3736] ss:$4 sm:$0xff] %v3211
        %3859 = vst [vmem:[%s3738] ss:$4 sm:$0xff] %v3212
        %v3860 = vld.sshfl [vmem:[#allocation1] sm:$0xff pattern:$0x73625140]
        %v3861 = vld.sshfl [vmem:[#allocation1 + $0x20] sm:$0xff pattern:$0x73625140]
        %3862 = vst [vmem:[#allocation1] ss:$4 sm:$0xff] %v3581
        %3863 = vst [vmem:[%s3726] ss:$4 sm:$0xff] %v3582
        %3864 = vst [vmem:[%s3728] ss:$4 sm:$0xff] %v3583
        %3865 = vst [vmem:[%s3730] ss:$4 sm:$0xff] %v3584
        %3866 = vst [vmem:[%s3732] ss:$4 sm:$0xff] %v3585
        %3867 = vst [vmem:[%s3734] ss:$4 sm:$0xff] %v3586
        %3868 = vst [vmem:[%s3736] ss:$4 sm:$0xff] %v3587
        %3869 = vst [vmem:[%s3738] ss:$4 sm:$0xff] %v3588
        %v3870 = vld.sshfl [vmem:[#allocation1] sm:$0xff pattern:$0x73625140]
        %v3871 = vld.sshfl [vmem:[#allocation1 + $0x20] sm:$0xff pattern:$0x73625140]
        %3872 = vst [vmem:[#allocation1] ss:$4 sm:$0xff] %v3213
        %3873 = vst [vmem:[%s3726] ss:$4 sm:$0xff] %v3214
        %3874 = vst [vmem:[%s3728] ss:$4 sm:$0xff] %v3215
        %3875 = vst [vmem:[%s3730] ss:$4 sm:$0xff] %v3216
        %3876 = vst [vmem:[%s3732] ss:$4 sm:$0xff] %v3217
        %3877 = vst [vmem:[%s3734] ss:$4 sm:$0xff] %v3218
        %3878 = vst [vmem:[%s3736] ss:$4 sm:$0xff] %v3219
        %3879 = vst [vmem:[%s3738] ss:$4 sm:$0xff] %v3220
        %v3880 = vld.sshfl [vmem:[#allocation1] sm:$0xff pattern:$0x73625140]
        %v3881 = vld.sshfl [vmem:[#allocation1 + $0x20] sm:$0xff pattern:$0x73625140]
        %3882 = vst [vmem:[#allocation1] ss:$4 sm:$0xff] %v3589
        %3883 = vst [vmem:[%s3726] ss:$4 sm:$0xff] %v3590
        %3884 = vst [vmem:[%s3728] ss:$4 sm:$0xff] %v3591
        %3885 = vst [vmem:[%s3730] ss:$4 sm:$0xff] %v3592
        %3886 = vst [vmem:[%s3732] ss:$4 sm:$0xff] %v3593
        %3887 = vst [vmem:[%s3734] ss:$4 sm:$0xff] %v3594
        %3888 = vst [vmem:[%s3736] ss:$4 sm:$0xff] %v3595
        %3889 = vst [vmem:[%s3738] ss:$4 sm:$0xff] %v3596
        %v3890 = vld.sshfl [vmem:[#allocation1] sm:$0xff pattern:$0x73625140]
        %v3891 = vld.sshfl [vmem:[#allocation1 + $0x20] sm:$0xff pattern:$0x73625140]
        %3956 = vrot.lane.b32.xlu0 %v210, 4
        %v3957 = vpop.permute.xlu0 %3956
        %3958 = vrot.lane.b32.xlu0 %v211, 4
        %v3959 = vpop.permute.xlu0 %3958
        %3960 = vrot.lane.b32.xlu0 %v212, 4
        %v3961 = vpop.permute.xlu0 %3960
        %3962 = vrot.lane.b32.xlu0 %v213, 4
        %v3963 = vpop.permute.xlu0 %3962
        %3964 = vrot.lane.b32.xlu0 %v214, 4
        %v3965 = vpop.permute.xlu0 %3964
        %3966 = vrot.lane.b32.xlu0 %v215, 4
        %v3967 = vpop.permute.xlu0 %3966
        %3968 = vrot.lane.b32.xlu0 %v216, 4
        %v3969 = vpop.permute.xlu0 %3968
        %3970 = vrot.lane.b32.xlu0 %v217, 4
        %v3971 = vpop.permute.xlu0 %3970
        %3972 = vrot.lane.b32.xlu0 %v218, 4
        %v3973 = vpop.permute.xlu0 %3972
        %3974 = vrot.lane.b32.xlu0 %v219, 4
        %v3975 = vpop.permute.xlu0 %3974
        %3976 = vrot.lane.b32.xlu0 %v220, 4
        %v3977 = vpop.permute.xlu0 %3976
        %3978 = vrot.lane.b32.xlu0 %v221, 4
        %v3979 = vpop.permute.xlu0 %3978
        %3980 = vrot.lane.b32.xlu0 %v222, 4
        %v3981 = vpop.permute.xlu0 %3980
        %3982 = vrot.lane.b32.xlu0 %v223, 4
        %v3983 = vpop.permute.xlu0 %3982
        %3984 = vrot.lane.b32.xlu0 %v224, 4
        %v3985 = vpop.permute.xlu0 %3984
        %3986 = vrot.lane.b32.xlu0 %v225, 4
        %v3987 = vpop.permute.xlu0 %3986
        %3988 = vrot.lane.b32.xlu0 %v226, 4
        %v3989 = vpop.permute.xlu0 %3988
        %3990 = vrot.lane.b32.xlu0 %v227, 4
        %v3991 = vpop.permute.xlu0 %3990
        %3992 = vrot.lane.b32.xlu0 %v228, 4
        %v3993 = vpop.permute.xlu0 %3992
        %3994 = vrot.lane.b32.xlu0 %v229, 4
        %v3995 = vpop.permute.xlu0 %3994
        %3996 = vrot.lane.b32.xlu0 %v230, 4
        %v3997 = vpop.permute.xlu0 %3996
        %3998 = vrot.lane.b32.xlu0 %v231, 4
        %v3999 = vpop.permute.xlu0 %3998
        %4000 = vrot.lane.b32.xlu0 %v232, 4
        %v4001 = vpop.permute.xlu0 %4000
        %4002 = vrot.lane.b32.xlu0 %v233, 4
        %v4003 = vpop.permute.xlu0 %4002
        %4004 = vrot.lane.b32.xlu0 %v234, 4
        %v4005 = vpop.permute.xlu0 %4004
        %4006 = vrot.lane.b32.xlu0 %v235, 4
        %v4007 = vpop.permute.xlu0 %4006
        %4008 = vrot.lane.b32.xlu0 %v236, 4
        %v4009 = vpop.permute.xlu0 %4008
        %4010 = vrot.lane.b32.xlu0 %v237, 4
        %v4011 = vpop.permute.xlu0 %4010
        %4012 = vrot.lane.b32.xlu0 %v238, 4
        %v4013 = vpop.permute.xlu0 %4012
        %4014 = vrot.lane.b32.xlu0 %v239, 4
        %v4015 = vpop.permute.xlu0 %4014
        %4016 = vrot.lane.b32.xlu0 %v240, 4
        %v4017 = vpop.permute.xlu0 %4016
        %4018 = vrot.lane.b32.xlu0 %v241, 4
        %v4019 = vpop.permute.xlu0 %4018
        %v4052 = vsel %vm1788, %v3740, %v3957
        %v4053 = vsel %vm1788, %v3741, %v3959
        %v4054 = vsel %vm1788, %v3750, %v3961
        %v4055 = vsel %vm1788, %v3751, %v3963
        %v4056 = vsel %vm1788, %v3760, %v3965
        %v4057 = vsel %vm1788, %v3761, %v3967
        %v4058 = vsel %vm1788, %v3770, %v3969
        %v4059 = vsel %vm1788, %v3771, %v3971
        %v4060 = vsel %vm1788, %v3780, %v3973
        %v4061 = vsel %vm1788, %v3781, %v3975
        %v4062 = vsel %vm1788, %v3790, %v3977
        %v4063 = vsel %vm1788, %v3791, %v3979
        %v4064 = vsel %vm1788, %v3800, %v3981
        %v4065 = vsel %vm1788, %v3801, %v3983
        %v4066 = vsel %vm1788, %v3810, %v3985
        %v4067 = vsel %vm1788, %v3811, %v3987
        %v4068 = vsel %vm1788, %v3820, %v3989
        %v4069 = vsel %vm1788, %v3821, %v3991
        %v4070 = vsel %vm1788, %v3830, %v3993
        %v4071 = vsel %vm1788, %v3831, %v3995
        %v4072 = vsel %vm1788, %v3840, %v3997
        %v4073 = vsel %vm1788, %v3841, %v3999
        %v4074 = vsel %vm1788, %v3850, %v4001
        %v4075 = vsel %vm1788, %v3851, %v4003
        %v4076 = vsel %vm1788, %v3860, %v4005
        %v4077 = vsel %vm1788, %v3861, %v4007
        %v4078 = vsel %vm1788, %v3870, %v4009
        %v4079 = vsel %vm1788, %v3871, %v4011
        %v4080 = vsel %vm1788, %v3880, %v4013
        %v4081 = vsel %vm1788, %v3881, %v4015
        %v4082 = vsel %vm1788, %v3890, %v4017
        %v4083 = vsel %vm1788, %v3891, %v4019
        %v4084 = vrot.slane %v4056, 4
        %vm4085 = vcmask 1047556
        %v4086 = vsel %vm4085, %v4084, %v4052
        %v4087 = vrot.slane %v4052, 4
        %v4088 = vsel %vm4085, %v4056, %v4087
        %v4090 = vunpack.c.l.s4 1983009808
        %v4091 = vunpack.c.0.s8 %v4090
        %v4092 = vperm.slane %v4086, %v4091
        %v4094 = vunpack.c.l.s4 1983009808
        %v4095 = vunpack.c.0.s8 %v4094
        %v4096 = vperm.slane %v4088, %v4095
        %v4097 = vrot.slane %v4058, 4
        %v4098 = vsel %vm4085, %v4097, %v4054
        %v4099 = vrot.slane %v4054, 4
        %v4100 = vsel %vm4085, %v4058, %v4099
        %v4102 = vunpack.c.l.s4 1983009808
        %v4103 = vunpack.c.0.s8 %v4102
        %v4104 = vperm.slane %v4098, %v4103
        %v4106 = vunpack.c.l.s4 1983009808
        %v4107 = vunpack.c.0.s8 %v4106
        %v4108 = vperm.slane %v4100, %v4107
        %v4109 = vrot.slane %v4064, 4
        %v4110 = vsel %vm4085, %v4109, %v4060
        %v4111 = vrot.slane %v4060, 4
        %v4112 = vsel %vm4085, %v4064, %v4111
        %v4114 = vunpack.c.l.s4 1983009808
        %v4115 = vunpack.c.0.s8 %v4114
        %v4116 = vperm.slane %v4110, %v4115
        %v4118 = vunpack.c.l.s4 1983009808
        %v4119 = vunpack.c.0.s8 %v4118
        %v4120 = vperm.slane %v4112, %v4119
        %v4121 = vrot.slane %v4066, 4
        %v4122 = vsel %vm4085, %v4121, %v4062
        %v4123 = vrot.slane %v4062, 4
        %v4124 = vsel %vm4085, %v4066, %v4123
        %v4126 = vunpack.c.l.s4 1983009808
        %v4127 = vunpack.c.0.s8 %v4126
        %v4128 = vperm.slane %v4122, %v4127
        %v4130 = vunpack.c.l.s4 1983009808
        %v4131 = vunpack.c.0.s8 %v4130
        %v4132 = vperm.slane %v4124, %v4131
        %v4133 = vrot.slane %v4104, 4
        %v4134 = vsel %vm4085, %v4133, %v4092
        %v4135 = vrot.slane %v4092, 4
        %v4136 = vsel %vm4085, %v4104, %v4135
        %v4138 = vunpack.c.l.s4 1934713408
        %v4139 = vunpack.c.0.s8 %v4138
        %v4140 = vperm.slane %v4134, %v4139
        %v4142 = vunpack.c.l.s4 1934713408
        %v4143 = vunpack.c.0.s8 %v4142
        %v4144 = vperm.slane %v4136, %v4143
        %v4145 = vrot.slane %v4108, 4
        %v4146 = vsel %vm4085, %v4145, %v4096
        %v4147 = vrot.slane %v4096, 4
        %v4148 = vsel %vm4085, %v4108, %v4147
        %v4150 = vunpack.c.l.s4 1934713408
        %v4151 = vunpack.c.0.s8 %v4150
        %v4152 = vperm.slane %v4146, %v4151
        %v4154 = vunpack.c.l.s4 1934713408
        %v4155 = vunpack.c.0.s8 %v4154
        %v4156 = vperm.slane %v4148, %v4155
        %v4157 = vrot.slane %v4128, 4
        %v4158 = vsel %vm4085, %v4157, %v4116
        %v4159 = vrot.slane %v4116, 4
        %v4160 = vsel %vm4085, %v4128, %v4159
        %v4162 = vunpack.c.l.s4 1934713408
        %v4163 = vunpack.c.0.s8 %v4162
        %v4164 = vperm.slane %v4158, %v4163
        %v4166 = vunpack.c.l.s4 1934713408
        %v4167 = vunpack.c.0.s8 %v4166
        %v4168 = vperm.slane %v4160, %v4167
        %v4169 = vrot.slane %v4132, 4
        %v4170 = vsel %vm4085, %v4169, %v4120
        %v4171 = vrot.slane %v4120, 4
        %v4172 = vsel %vm4085, %v4132, %v4171
        %v4174 = vunpack.c.l.s4 1934713408
        %v4175 = vunpack.c.0.s8 %v4174
        %v4176 = vperm.slane %v4170, %v4175
        %v4178 = vunpack.c.l.s4 1934713408
        %v4179 = vunpack.c.0.s8 %v4178
        %v4180 = vperm.slane %v4172, %v4179
        %v4181 = vrot.slane %v4164, 4
        %v4182 = vsel %vm4085, %v4181, %v4140
        %v4183 = vrot.slane %v4140, 4
        %v4184 = vsel %vm4085, %v4164, %v4183
        %v4185 = vrot.slane %v4168, 4
        %v4186 = vsel %vm4085, %v4185, %v4144
        %v4187 = vrot.slane %v4144, 4
        %v4188 = vsel %vm4085, %v4168, %v4187
        %v4189 = vrot.slane %v4176, 4
        %v4190 = vsel %vm4085, %v4189, %v4152
        %v4191 = vrot.slane %v4152, 4
        %v4192 = vsel %vm4085, %v4176, %v4191
        %v4193 = vrot.slane %v4180, 4
        %v4194 = vsel %vm4085, %v4193, %v4156
        %v4195 = vrot.slane %v4156, 4
        %v4196 = vsel %vm4085, %v4180, %v4195
        %v4197 = vrot.slane %v4072, 4
        %v4198 = vsel %vm4085, %v4197, %v4068
        %v4199 = vrot.slane %v4068, 4
        %v4200 = vsel %vm4085, %v4072, %v4199
        %v4202 = vunpack.c.l.s4 1983009808
        %v4203 = vunpack.c.0.s8 %v4202
        %v4204 = vperm.slane %v4198, %v4203
        %v4206 = vunpack.c.l.s4 1983009808
        %v4207 = vunpack.c.0.s8 %v4206
        %v4208 = vperm.slane %v4200, %v4207
        %v4209 = vrot.slane %v4074, 4
        %v4210 = vsel %vm4085, %v4209, %v4070
        %v4211 = vrot.slane %v4070, 4
        %v4212 = vsel %vm4085, %v4074, %v4211
        %v4214 = vunpack.c.l.s4 1983009808
        %v4215 = vunpack.c.0.s8 %v4214
        %v4216 = vperm.slane %v4210, %v4215
        %v4218 = vunpack.c.l.s4 1983009808
        %v4219 = vunpack.c.0.s8 %v4218
        %v4220 = vperm.slane %v4212, %v4219
        %v4221 = vrot.slane %v4080, 4
        %v4222 = vsel %vm4085, %v4221, %v4076
        %v4223 = vrot.slane %v4076, 4
        %v4224 = vsel %vm4085, %v4080, %v4223
        %v4226 = vunpack.c.l.s4 1983009808
        %v4227 = vunpack.c.0.s8 %v4226
        %v4228 = vperm.slane %v4222, %v4227
        %v4230 = vunpack.c.l.s4 1983009808
        %v4231 = vunpack.c.0.s8 %v4230
        %v4232 = vperm.slane %v4224, %v4231
        %v4233 = vrot.slane %v4082, 4
        %v4234 = vsel %vm4085, %v4233, %v4078
        %v4235 = vrot.slane %v4078, 4
        %v4236 = vsel %vm4085, %v4082, %v4235
        %v4238 = vunpack.c.l.s4 1983009808
        %v4239 = vunpack.c.0.s8 %v4238
        %v4240 = vperm.slane %v4234, %v4239
        %v4242 = vunpack.c.l.s4 1983009808
        %v4243 = vunpack.c.0.s8 %v4242
        %v4244 = vperm.slane %v4236, %v4243
        %v4245 = vrot.slane %v4216, 4
        %v4246 = vsel %vm4085, %v4245, %v4204
        %v4247 = vrot.slane %v4204, 4
        %v4248 = vsel %vm4085, %v4216, %v4247
        %v4250 = vunpack.c.l.s4 1934713408
        %v4251 = vunpack.c.0.s8 %v4250
        %v4252 = vperm.slane %v4246, %v4251
        %v4254 = vunpack.c.l.s4 1934713408
        %v4255 = vunpack.c.0.s8 %v4254
        %v4256 = vperm.slane %v4248, %v4255
        %v4257 = vrot.slane %v4220, 4
        %v4258 = vsel %vm4085, %v4257, %v4208
        %v4259 = vrot.slane %v4208, 4
        %v4260 = vsel %vm4085, %v4220, %v4259
        %v4262 = vunpack.c.l.s4 1934713408
        %v4263 = vunpack.c.0.s8 %v4262
        %v4264 = vperm.slane %v4258, %v4263
        %v4266 = vunpack.c.l.s4 1934713408
        %v4267 = vunpack.c.0.s8 %v4266
        %v4268 = vperm.slane %v4260, %v4267
        %v4269 = vrot.slane %v4240, 4
        %v4270 = vsel %vm4085, %v4269, %v4228
        %v4271 = vrot.slane %v4228, 4
        %v4272 = vsel %vm4085, %v4240, %v4271
        %v4274 = vunpack.c.l.s4 1934713408
        %v4275 = vunpack.c.0.s8 %v4274
        %v4276 = vperm.slane %v4270, %v4275
        %v4278 = vunpack.c.l.s4 1934713408
        %v4279 = vunpack.c.0.s8 %v4278
        %v4280 = vperm.slane %v4272, %v4279
        %v4281 = vrot.slane %v4244, 4
        %v4282 = vsel %vm4085, %v4281, %v4232
        %v4283 = vrot.slane %v4232, 4
        %v4284 = vsel %vm4085, %v4244, %v4283
        %v4286 = vunpack.c.l.s4 1934713408
        %v4287 = vunpack.c.0.s8 %v4286
        %v4288 = vperm.slane %v4282, %v4287
        %v4290 = vunpack.c.l.s4 1934713408
        %v4291 = vunpack.c.0.s8 %v4290
        %v4292 = vperm.slane %v4284, %v4291
        %v4293 = vrot.slane %v4276, 4
        %v4294 = vsel %vm4085, %v4293, %v4252
        %v4295 = vrot.slane %v4252, 4
        %v4296 = vsel %vm4085, %v4276, %v4295
        %v4297 = vrot.slane %v4280, 4
        %v4298 = vsel %vm4085, %v4297, %v4256
        %v4299 = vrot.slane %v4256, 4
        %v4300 = vsel %vm4085, %v4280, %v4299
        %v4301 = vrot.slane %v4288, 4
        %v4302 = vsel %vm4085, %v4301, %v4264
        %v4303 = vrot.slane %v4264, 4
        %v4304 = vsel %vm4085, %v4288, %v4303
        %v4305 = vrot.slane %v4292, 4
        %v4306 = vsel %vm4085, %v4305, %v4268
        %v4307 = vrot.slane %v4268, 4
        %v4308 = vsel %vm4085, %v4292, %v4307
        %v4309 = vrot.slane %v4057, 4
        %v4310 = vsel %vm4085, %v4309, %v4053
        %v4311 = vrot.slane %v4053, 4
        %v4312 = vsel %vm4085, %v4057, %v4311
        %v4314 = vunpack.c.l.s4 1983009808
        %v4315 = vunpack.c.0.s8 %v4314
        %v4316 = vperm.slane %v4310, %v4315
        %v4318 = vunpack.c.l.s4 1983009808
        %v4319 = vunpack.c.0.s8 %v4318
        %v4320 = vperm.slane %v4312, %v4319
        %v4321 = vrot.slane %v4059, 4
        %v4322 = vsel %vm4085, %v4321, %v4055
        %v4323 = vrot.slane %v4055, 4
        %v4324 = vsel %vm4085, %v4059, %v4323
        %v4326 = vunpack.c.l.s4 1983009808
        %v4327 = vunpack.c.0.s8 %v4326
        %v4328 = vperm.slane %v4322, %v4327
        %v4330 = vunpack.c.l.s4 1983009808
        %v4331 = vunpack.c.0.s8 %v4330
        %v4332 = vperm.slane %v4324, %v4331
        %v4333 = vrot.slane %v4065, 4
        %v4334 = vsel %vm4085, %v4333, %v4061
        %v4335 = vrot.slane %v4061, 4
        %v4336 = vsel %vm4085, %v4065, %v4335
        %v4338 = vunpack.c.l.s4 1983009808
        %v4339 = vunpack.c.0.s8 %v4338
        %v4340 = vperm.slane %v4334, %v4339
        %v4342 = vunpack.c.l.s4 1983009808
        %v4343 = vunpack.c.0.s8 %v4342
        %v4344 = vperm.slane %v4336, %v4343
        %v4345 = vrot.slane %v4067, 4
        %v4346 = vsel %vm4085, %v4345, %v4063
        %v4347 = vrot.slane %v4063, 4
        %v4348 = vsel %vm4085, %v4067, %v4347
        %v4350 = vunpack.c.l.s4 1983009808
        %v4351 = vunpack.c.0.s8 %v4350
        %v4352 = vperm.slane %v4346, %v4351
        %v4354 = vunpack.c.l.s4 1983009808
        %v4355 = vunpack.c.0.s8 %v4354
        %v4356 = vperm.slane %v4348, %v4355
        %v4357 = vrot.slane %v4328, 4
        %v4358 = vsel %vm4085, %v4357, %v4316
        %v4359 = vrot.slane %v4316, 4
        %v4360 = vsel %vm4085, %v4328, %v4359
        %v4362 = vunpack.c.l.s4 1934713408
        %v4363 = vunpack.c.0.s8 %v4362
        %v4364 = vperm.slane %v4358, %v4363
        %v4366 = vunpack.c.l.s4 1934713408
        %v4367 = vunpack.c.0.s8 %v4366
        %v4368 = vperm.slane %v4360, %v4367
        %v4369 = vrot.slane %v4332, 4
        %v4370 = vsel %vm4085, %v4369, %v4320
        %v4371 = vrot.slane %v4320, 4
        %v4372 = vsel %vm4085, %v4332, %v4371
        %v4374 = vunpack.c.l.s4 1934713408
        %v4375 = vunpack.c.0.s8 %v4374
        %v4376 = vperm.slane %v4370, %v4375
        %v4378 = vunpack.c.l.s4 1934713408
        %v4379 = vunpack.c.0.s8 %v4378
        %v4380 = vperm.slane %v4372, %v4379
        %v4381 = vrot.slane %v4352, 4
        %v4382 = vsel %vm4085, %v4381, %v4340
        %v4383 = vrot.slane %v4340, 4
        %v4384 = vsel %vm4085, %v4352, %v4383
        %v4386 = vunpack.c.l.s4 1934713408
        %v4387 = vunpack.c.0.s8 %v4386
        %v4388 = vperm.slane %v4382, %v4387
        %v4390 = vunpack.c.l.s4 1934713408
        %v4391 = vunpack.c.0.s8 %v4390
        %v4392 = vperm.slane %v4384, %v4391
        %v4393 = vrot.slane %v4356, 4
        %v4394 = vsel %vm4085, %v4393, %v4344
        %v4395 = vrot.slane %v4344, 4
        %v4396 = vsel %vm4085, %v4356, %v4395
        %v4398 = vunpack.c.l.s4 1934713408
        %v4399 = vunpack.c.0.s8 %v4398
        %v4400 = vperm.slane %v4394, %v4399
        %v4402 = vunpack.c.l.s4 1934713408
        %v4403 = vunpack.c.0.s8 %v4402
        %v4404 = vperm.slane %v4396, %v4403
        %v4405 = vrot.slane %v4388, 4
        %v4406 = vsel %vm4085, %v4405, %v4364
        %v4407 = vrot.slane %v4364, 4
        %v4408 = vsel %vm4085, %v4388, %v4407
        %v4409 = vrot.slane %v4392, 4
        %v4410 = vsel %vm4085, %v4409, %v4368
        %v4411 = vrot.slane %v4368, 4
        %v4412 = vsel %vm4085, %v4392, %v4411
        %v4413 = vrot.slane %v4400, 4
        %v4414 = vsel %vm4085, %v4413, %v4376
        %v4415 = vrot.slane %v4376, 4
        %v4416 = vsel %vm4085, %v4400, %v4415
        %v4417 = vrot.slane %v4404, 4
        %v4418 = vsel %vm4085, %v4417, %v4380
        %v4419 = vrot.slane %v4380, 4
        %v4420 = vsel %vm4085, %v4404, %v4419
        %v4421 = vrot.slane %v4073, 4
        %v4422 = vsel %vm4085, %v4421, %v4069
        %v4423 = vrot.slane %v4069, 4
        %v4424 = vsel %vm4085, %v4073, %v4423
        %v4426 = vunpack.c.l.s4 1983009808
        %v4427 = vunpack.c.0.s8 %v4426
        %v4428 = vperm.slane %v4422, %v4427
        %v4430 = vunpack.c.l.s4 1983009808
        %v4431 = vunpack.c.0.s8 %v4430
        %v4432 = vperm.slane %v4424, %v4431
        %v4433 = vrot.slane %v4075, 4
        %v4434 = vsel %vm4085, %v4433, %v4071
        %v4435 = vrot.slane %v4071, 4
        %v4436 = vsel %vm4085, %v4075, %v4435
        %v4438 = vunpack.c.l.s4 1983009808
        %v4439 = vunpack.c.0.s8 %v4438
        %v4440 = vperm.slane %v4434, %v4439
        %v4442 = vunpack.c.l.s4 1983009808
        %v4443 = vunpack.c.0.s8 %v4442
        %v4444 = vperm.slane %v4436, %v4443
        %v4445 = vrot.slane %v4081, 4
        %v4446 = vsel %vm4085, %v4445, %v4077
        %v4447 = vrot.slane %v4077, 4
        %v4448 = vsel %vm4085, %v4081, %v4447
        %v4450 = vunpack.c.l.s4 1983009808
        %v4451 = vunpack.c.0.s8 %v4450
        %v4452 = vperm.slane %v4446, %v4451
        %v4454 = vunpack.c.l.s4 1983009808
        %v4455 = vunpack.c.0.s8 %v4454
        %v4456 = vperm.slane %v4448, %v4455
        %v4457 = vrot.slane %v4083, 4
        %v4458 = vsel %vm4085, %v4457, %v4079
        %v4459 = vrot.slane %v4079, 4
        %v4460 = vsel %vm4085, %v4083, %v4459
        %v4462 = vunpack.c.l.s4 1983009808
        %v4463 = vunpack.c.0.s8 %v4462
        %v4464 = vperm.slane %v4458, %v4463
        %v4466 = vunpack.c.l.s4 1983009808
        %v4467 = vunpack.c.0.s8 %v4466
        %v4468 = vperm.slane %v4460, %v4467
        %v4469 = vrot.slane %v4440, 4
        %v4470 = vsel %vm4085, %v4469, %v4428
        %v4471 = vrot.slane %v4428, 4
        %v4472 = vsel %vm4085, %v4440, %v4471
        %v4474 = vunpack.c.l.s4 1934713408
        %v4475 = vunpack.c.0.s8 %v4474
        %v4476 = vperm.slane %v4470, %v4475
        %v4478 = vunpack.c.l.s4 1934713408
        %v4479 = vunpack.c.0.s8 %v4478
        %v4480 = vperm.slane %v4472, %v4479
        %v4481 = vrot.slane %v4444, 4
        %v4482 = vsel %vm4085, %v4481, %v4432
        %v4483 = vrot.slane %v4432, 4
        %v4484 = vsel %vm4085, %v4444, %v4483
        %v4486 = vunpack.c.l.s4 1934713408
        %v4487 = vunpack.c.0.s8 %v4486
        %v4488 = vperm.slane %v4482, %v4487
        %v4490 = vunpack.c.l.s4 1934713408
        %v4491 = vunpack.c.0.s8 %v4490
        %v4492 = vperm.slane %v4484, %v4491
        %v4493 = vrot.slane %v4464, 4
        %v4494 = vsel %vm4085, %v4493, %v4452
        %v4495 = vrot.slane %v4452, 4
        %v4496 = vsel %vm4085, %v4464, %v4495
        %v4498 = vunpack.c.l.s4 1934713408
        %v4499 = vunpack.c.0.s8 %v4498
        %v4500 = vperm.slane %v4494, %v4499
        %v4502 = vunpack.c.l.s4 1934713408
        %v4503 = vunpack.c.0.s8 %v4502
        %v4504 = vperm.slane %v4496, %v4503
        %v4505 = vrot.slane %v4468, 4
        %v4506 = vsel %vm4085, %v4505, %v4456
        %v4507 = vrot.slane %v4456, 4
        %v4508 = vsel %vm4085, %v4468, %v4507
        %v4510 = vunpack.c.l.s4 1934713408
        %v4511 = vunpack.c.0.s8 %v4510
        %v4512 = vperm.slane %v4506, %v4511
        %v4514 = vunpack.c.l.s4 1934713408
        %v4515 = vunpack.c.0.s8 %v4514
        %v4516 = vperm.slane %v4508, %v4515
        %v4517 = vrot.slane %v4500, 4
        %v4518 = vsel %vm4085, %v4517, %v4476
        %v4519 = vrot.slane %v4476, 4
        %v4520 = vsel %vm4085, %v4500, %v4519
        %v4521 = vrot.slane %v4504, 4
        %v4522 = vsel %vm4085, %v4521, %v4480
        %v4523 = vrot.slane %v4480, 4
        %v4524 = vsel %vm4085, %v4504, %v4523
        %v4525 = vrot.slane %v4512, 4
        %v4526 = vsel %vm4085, %v4525, %v4488
        %v4527 = vrot.slane %v4488, 4
        %v4528 = vsel %vm4085, %v4512, %v4527
        %v4529 = vrot.slane %v4516, 4
        %v4530 = vsel %vm4085, %v4529, %v4492
        %v4531 = vrot.slane %v4492, 4
        %v4532 = vsel %vm4085, %v4516, %v4531
        %4535 = vrot.lane.b32.xlu0 %v4184, 8
        %v4536 = vpop.permute.xlu0 %4535
        %4537 = vrot.lane.b32.xlu0 %v4296, 8
        %v4538 = vpop.permute.xlu0 %4537
        %4543 = vrot.lane.b32.xlu0 %v4186, 16
        %v4544 = vpop.permute.xlu0 %4543
        %4545 = vrot.lane.b32.xlu0 %v4298, 16
        %v4546 = vpop.permute.xlu0 %4545
        %4551 = vrot.lane.b32.xlu0 %v4188, 24
        %v4552 = vpop.permute.xlu0 %4551
        %4553 = vrot.lane.b32.xlu0 %v4300, 24
        %v4554 = vpop.permute.xlu0 %4553
        %4559 = vrot.lane.b32.xlu0 %v4190, 32
        %v4560 = vpop.permute.xlu0 %4559
        %4561 = vrot.lane.b32.xlu0 %v4302, 32
        %v4562 = vpop.permute.xlu0 %4561
        %4567 = vrot.lane.b32.xlu0 %v4192, 40
        %v4568 = vpop.permute.xlu0 %4567
        %4569 = vrot.lane.b32.xlu0 %v4304, 40
        %v4570 = vpop.permute.xlu0 %4569
        %4575 = vrot.lane.b32.xlu0 %v4194, 48
        %v4576 = vpop.permute.xlu0 %4575
        %4577 = vrot.lane.b32.xlu0 %v4306, 48
        %v4578 = vpop.permute.xlu0 %4577
        %4583 = vrot.lane.b32.xlu0 %v4196, 56
        %v4584 = vpop.permute.xlu0 %4583
        %4585 = vrot.lane.b32.xlu0 %v4308, 56
        %v4586 = vpop.permute.xlu0 %4585
        %4591 = vrot.lane.b32.xlu0 %v4406, 64
        %v4592 = vpop.permute.xlu0 %4591
        %4593 = vrot.lane.b32.xlu0 %v4518, 64
        %v4594 = vpop.permute.xlu0 %4593
        %4599 = vrot.lane.b32.xlu0 %v4408, 72
        %v4600 = vpop.permute.xlu0 %4599
        %4601 = vrot.lane.b32.xlu0 %v4520, 72
        %v4602 = vpop.permute.xlu0 %4601
        %4607 = vrot.lane.b32.xlu0 %v4410, 80
        %v4608 = vpop.permute.xlu0 %4607
        %4609 = vrot.lane.b32.xlu0 %v4522, 80
        %v4610 = vpop.permute.xlu0 %4609
        %4615 = vrot.lane.b32.xlu0 %v4412, 88
        %v4616 = vpop.permute.xlu0 %4615
        %4617 = vrot.lane.b32.xlu0 %v4524, 88
        %v4618 = vpop.permute.xlu0 %4617
        %4623 = vrot.lane.b32.xlu0 %v4414, 96
        %v4624 = vpop.permute.xlu0 %4623
        %4625 = vrot.lane.b32.xlu0 %v4526, 96
        %v4626 = vpop.permute.xlu0 %4625
        %4631 = vrot.lane.b32.xlu0 %v4416, 104
        %v4632 = vpop.permute.xlu0 %4631
        %4633 = vrot.lane.b32.xlu0 %v4528, 104
        %v4634 = vpop.permute.xlu0 %4633
        %4639 = vrot.lane.b32.xlu0 %v4418, 112
        %v4640 = vpop.permute.xlu0 %4639
        %4641 = vrot.lane.b32.xlu0 %v4530, 112
        %v4642 = vpop.permute.xlu0 %4641
        %4647 = vrot.lane.b32.xlu0 %v4420, 120
        %v4648 = vpop.permute.xlu0 %4647
        %4649 = vrot.lane.b32.xlu0 %v4532, 120
        %v4650 = vpop.permute.xlu0 %4649
        %v4653 = vsel %vm1796, %v4182, %v4536
        %v4654 = vsel %vm1796, %v4294, %v4538
        %v4655 = vsel %vm1812, %v4653, %v4544
        %v4656 = vsel %vm1812, %v4654, %v4546
        %v4657 = vsel %vm1830, %v4655, %v4552
        %v4658 = vsel %vm1830, %v4656, %v4554
        %v4659 = vsel %vm1848, %v4657, %v4560
        %v4660 = vsel %vm1848, %v4658, %v4562
        %v4661 = vsel %vm1866, %v4659, %v4568
        %v4662 = vsel %vm1866, %v4660, %v4570
        %v4663 = vsel %vm1884, %v4661, %v4576
        %v4664 = vsel %vm1884, %v4662, %v4578
        %v4665 = vsel %vm1902, %v4663, %v4584
        %v4666 = vsel %vm1902, %v4664, %v4586
        %v4667 = vsel %vm1920, %v4665, %v4592
        %v4668 = vsel %vm1920, %v4666, %v4594
        %vm4669 = vcmask 588800
        %v4670 = vsel %vm4669, %v4667, %v4600
        %v4671 = vsel %vm4669, %v4668, %v4602
        %vm4672 = vcmask 654336
        %v4673 = vsel %vm4672, %v4670, %v4608
        %v4674 = vsel %vm4672, %v4671, %v4610
        %vm4675 = vcmask 719872
        %v4676 = vsel %vm4675, %v4673, %v4616
        %v4677 = vsel %vm4675, %v4674, %v4618
        %vm4678 = vcmask 785408
        %v4679 = vsel %vm4678, %v4676, %v4624
        %v4680 = vsel %vm4678, %v4677, %v4626
        %vm4681 = vcmask 850944
        %v4682 = vsel %vm4681, %v4679, %v4632
        %v4683 = vsel %vm4681, %v4680, %v4634
        %vm4684 = vcmask 916480
        %v4685 = vsel %vm4684, %v4682, %v4640
        %v4686 = vsel %vm4684, %v4683, %v4642
        %vm4687 = vcmask 982016
        %v4688 = vsel %vm4687, %v4685, %v4648
        %v4689 = vsel %vm4687, %v4686, %v4650
        %4690 = vst [vmem:[%s201] sm:$0xff] %v4688
        %4691 = vst [vmem:[%s201 + $0x8] sm:$0xff] %v4689
        %s4692 = sand.u32 %s120, 1
        %s4693 = scalar_lea.sflag [#allocation3], %s4692
        %s4694 = sand.u32 %s120, 1
        %s4695 = smul.addr %s4694, 16
        %s4696 = scalar_lea.vmem [#allocation2], %s4695
        // Predicated region
        $region37: #{tpu_custom_call.1} parent=35 // pred_check
          %p4697 = pneg %p130
        $region38: #{tpu_custom_call.1} parent=35 // pred_check_branch
          %4699 = sbr.rel (%p4697) target = $region40
        $region39: #{tpu_custom_call.1} parent=35 // pred_region
          %4701 = vsyncadd %s4693, 0
          %s4702 = smul.addr %s18, 2
          %s4703 = smul.addr %s4702, 8
          %s4704 = scalar_lea.hbm %s4, %s4703
          %s4705 = sshll.u32 %s4696, 4
          %s4706 = int_to_ptr.vmem [resolvable:$true] %s4705
          %s4707 = sshll.u32 %s4704, 4
          %s4708 = int_to_ptr.hbm [resolvable:$true] %s4707
          %4713 = dma.vmem_to_hbm [thread:$0]  %s4706, 256, %s4708, %s4693, 128, 128, 8
        $region40: #{tpu_custom_call.1} parent=35 // pred_fallthru
          _
      $region36: #{tpu_custom_call.1} parent=5 // pred_fallthru
        _
      %p4714 = scmp.le.s32.totalorder 2, %s13
      // Predicated region
      $region41: #{tpu_custom_call.1} parent=5 // pred_check
        %p4715 = pneg %p4714
      $region42: #{tpu_custom_call.1} parent=5 // pred_check_branch
        %4717 = sbr.rel (%p4715) target = $region44
      $region43: #{tpu_custom_call.1} parent=5 // pred_region
        %s4718 = ssub.s32 %s13, 2
        // Predicated region
        $region45: #{tpu_custom_call.1} parent=43 // pred_check
          %p4719 = pneg %p136
        $region46: #{tpu_custom_call.1} parent=43 // pred_check_branch
          %4721 = sbr.rel (%p4719) target = $region48
        $region47: #{tpu_custom_call.1} parent=43 // pred_region
          %s4722 = sand.u32 %s121, 1
          %s4723 = scalar_lea.sflag [#allocation3], %s4722
          %s4724 = sand.u32 %s121, 1
          %s4725 = smul.addr %s4724, 16
          %s4726 = scalar_lea.vmem [#allocation2], %s4725
          %4728 = dma.done %s4723, 256
        $region48: #{tpu_custom_call.1} parent=43 // pred_fallthru
          _
      $region44: #{tpu_custom_call.1} parent=5 // pred_fallthru
        _
    $region6: #{tpu_custom_call.1} parent=1 // loop_footer
      %s17 = sadd.s32 1, %s13
    $region7: #{tpu_custom_call.1} parent=1 // loop_footer_branch
      %12 = sbr.rel target = $region3
    $region8: #{tpu_custom_call.1} parent=1 // loop_exit
      _
    %4729 = vsyncpa [#allocation3], 1
    %s4730 = scalar_lea.sflag [#allocation3], 1
    %4731 = vsyncpa %s4730, 1

</llo_original>
